<compile_context>
chip_gen: v7x
topology: tpu7x:2x2x1
jax: 0.10.0
libtpu: 0.0.40
codegen_flags: <defaults>
</compile_context>

<pallas_src>
import math
from functools import partial

import jax
import jax.numpy as jnp
from jax import lax
from jax.experimental import pallas as pl
from jax.experimental.pallas import tpu as pltpu

# ----------------------------- config (small, synthetic) -----------------------------
H = 64          # config.hidden_size
V = 256         # config.vocab_size
NH = 4          # attention heads
DH = H // NH
FF = 128        # decoder feed-forward dim
MAX_POS = 64
V_TILE = 128    # vocab tile for the fused lm_head + CE kernel


# ----------------------------- Pallas kernels -----------------------------

def _attn_block_kernel(xq_ref, xkv_ref, pad_ref,
                       wq_ref, bq_ref, wkv_ref, bkv_ref, wo_ref, bo_ref,
                       g_ref, be_ref, o_ref, *, causal, nh, dh):
    """Fused attention block for one batch element.

    xq: (1, Lq, H) f32   xkv: (1, Lk, H) f32   pad: (1, 1, Lk) additive mask
    wq: (H, H) bf16      wkv: (H, 2H) bf16     wo: (H, H) bf16  (all pre-transposed (K,N))
    Output: layer_norm(xq + attn_out)  -> (1, Lq, H) f32
    """
    xq = xq_ref[0]                         # (Lq, H) f32
    xkv = xkv_ref[0]                       # (Lk, H) f32
    Lq, Hh = xq.shape
    Lk = xkv.shape[0]

    q = jnp.dot(xq.astype(jnp.bfloat16), wq_ref[...],
                preferred_element_type=jnp.float32) + bq_ref[...]          # (Lq, H)
    kv = jnp.dot(xkv.astype(jnp.bfloat16), wkv_ref[...],
                 preferred_element_type=jnp.float32) + bkv_ref[...]        # (Lk, 2H)
    k = kv[:, :Hh]
    v = kv[:, Hh:]

    # Additive mask built / broadcast in-kernel (no (B,1,T,S) HBM materialization).
    addm = jnp.broadcast_to(pad_ref[0], (Lq, Lk))                          # (Lq, Lk)
    if causal:
        row = lax.broadcasted_iota(jnp.int32, (Lq, Lk), 0)
        col = lax.broadcasted_iota(jnp.int32, (Lq, Lk), 1)
        addm = addm + jnp.where(col <= row, 0.0, -10000.0)

    scale = 1.0 / math.sqrt(dh)
    heads = []
    for h in range(nh):                                                    # static unroll
        qh = q[:, h * dh:(h + 1) * dh].astype(jnp.bfloat16)
        kh = k[:, h * dh:(h + 1) * dh].astype(jnp.bfloat16)
        vh = v[:, h * dh:(h + 1) * dh].astype(jnp.bfloat16)
        s = lax.dot_general(qh, kh, (((1,), (1,)), ((), ())),
                            preferred_element_type=jnp.float32) * scale + addm
        s = s - jnp.max(s, axis=-1, keepdims=True)
        pexp = jnp.exp(s)
        pexp = pexp * pl.reciprocal(jnp.sum(pexp, axis=-1, keepdims=True), approx=True)
        heads.append(jnp.dot(pexp.astype(jnp.bfloat16), vh,
                             preferred_element_type=jnp.float32))          # (Lq, dh)
    ctx = jnp.concatenate(heads, axis=-1)                                  # (Lq, H)

    attn = jnp.dot(ctx.astype(jnp.bfloat16), wo_ref[...],
                   preferred_element_type=jnp.float32) + bo_ref[...]

    # residual + post-layernorm (f32)
    y = xq + attn
    mu = jnp.mean(y, axis=-1, keepdims=True)
    var = jnp.mean((y - mu) ** 2, axis=-1, keepdims=True)
    o_ref[0] = (y - mu) * lax.rsqrt(var + 1e-5) * g_ref[...] + be_ref[...]


def attn_block(x_q, x_kv, add_pad, prefix, ln_name, p, *, causal):
    B, Lq, _ = x_q.shape
    Lk = x_kv.shape[1]
    return pl.pallas_call(
        partial(_attn_block_kernel, causal=causal, nh=NH, dh=DH),
        out_shape=jax.ShapeDtypeStruct((B, Lq, H), jnp.float32),
        grid=(B,),
        in_specs=[
            pl.BlockSpec((1, Lq, H), lambda b: (b, 0, 0)),
            pl.BlockSpec((1, Lk, H), lambda b: (b, 0, 0)),
            pl.BlockSpec((1, 1, Lk), lambda b: (b, 0, 0)),
            pl.BlockSpec((H, H), lambda b: (0, 0)),        # wq (bf16)
            pl.BlockSpec((1, H), lambda b: (0, 0)),        # bq
            pl.BlockSpec((H, 2 * H), lambda b: (0, 0)),    # wkv (bf16)
            pl.BlockSpec((1, 2 * H), lambda b: (0, 0)),    # bkv
            pl.BlockSpec((H, H), lambda b: (0, 0)),        # wo (bf16)
            pl.BlockSpec((1, H), lambda b: (0, 0)),        # bo
            pl.BlockSpec((1, H), lambda b: (0, 0)),        # ln gamma
            pl.BlockSpec((1, H), lambda b: (0, 0)),        # ln beta
        ],
        out_specs=pl.BlockSpec((1, Lq, H), lambda b: (b, 0, 0)),
        compiler_params=pltpu.CompilerParams(dimension_semantics=("parallel",)),
    )(x_q, x_kv, add_pad,
      p[prefix + '_wq'], p[prefix + '_bq'],
      p[prefix + '_wkv'], p[prefix + '_bkv'],
      p[prefix + '_wo'], p[prefix + '_bo'],
      p[ln_name + '_g'], p[ln_name + '_b'])


def _ffn_block_kernel(x_ref, w1_ref, b1_ref, w2_ref, b2_ref, g_ref, be_ref, o_ref):
    """layer_norm(x + relu(x@W1+b1)@W2+b2) for one batch element."""
    x = x_ref[0]                                                           # (T, H) f32
    h = jnp.dot(x.astype(jnp.bfloat16), w1_ref[...],
                preferred_element_type=jnp.float32) + b1_ref[...]
    h = jnp.maximum(h, 0.0)
    y = jnp.dot(h.astype(jnp.bfloat16), w2_ref[...],
                preferred_element_type=jnp.float32) + b2_ref[...]
    r = x + y
    mu = jnp.mean(r, axis=-1, keepdims=True)
    var = jnp.mean((r - mu) ** 2, axis=-1, keepdims=True)
    o_ref[0] = (r - mu) * lax.rsqrt(var + 1e-5) * g_ref[...] + be_ref[...]


def ffn_block(x, p):
    B, T, _ = x.shape
    return pl.pallas_call(
        _ffn_block_kernel,
        out_shape=jax.ShapeDtypeStruct((B, T, H), jnp.float32),
        grid=(B,),
        in_specs=[
            pl.BlockSpec((1, T, H), lambda b: (b, 0, 0)),
            pl.BlockSpec((H, FF), lambda b: (0, 0)),       # ff1 W (bf16)
            pl.BlockSpec((1, FF), lambda b: (0, 0)),
            pl.BlockSpec((FF, H), lambda b: (0, 0)),       # ff2 W (bf16)
            pl.BlockSpec((1, H), lambda b: (0, 0)),
            pl.BlockSpec((1, H), lambda b: (0, 0)),        # ln gamma
            pl.BlockSpec((1, H), lambda b: (0, 0)),        # ln beta
        ],
        out_specs=pl.BlockSpec((1, T, H), lambda b: (b, 0, 0)),
        compiler_params=pltpu.CompilerParams(dimension_semantics=("parallel",)),
    )(x, p['ff_w1'], p['ff_b1'], p['ff_w2'], p['ff_b2'], p['n3_g'], p['n3_b'])


def _head_ce_kernel(x_ref, wd_ref, bd_ref, we_ref, lab_ref, act_ref,
                    sum_ref, vcnt_ref, acnt_ref,
                    hid_ref, m_ref, l_ref, tgt_ref, *, v_tile):
    """Fused dense+tanh + tied lm_head + masked CE, tiled over the vocab axis.

    Grid axis 0 walks vocab tiles; logits are never written to HBM.  An online
    log-sum-exp (m, l) plus the gathered target logit are kept in VMEM scratch.
    """
    j = pl.program_id(0)

    @pl.when(j == 0)
    def _init():
        hh = jnp.dot(x_ref[...].astype(jnp.bfloat16), wd_ref[...],
                     preferred_element_type=jnp.float32) + bd_ref[...]
        hid_ref[...] = jnp.tanh(hh).astype(jnp.bfloat16)
        m_ref[...] = jnp.full(m_ref.shape, -jnp.inf, jnp.float32)
        l_ref[...] = jnp.zeros(l_ref.shape, jnp.float32)
        tgt_ref[...] = jnp.zeros(tgt_ref.shape, jnp.float32)

    # logits for this vocab tile (tied lm_head, no bias)
    z = jnp.dot(hid_ref[...], we_ref[...], preferred_element_type=jnp.float32)  # (N, v_tile)

    m_prev = m_ref[...]
    m_new = jnp.maximum(m_prev, jnp.max(z, axis=-1, keepdims=True))
    l_ref[...] = l_ref[...] * jnp.exp(m_prev - m_new) + \
        jnp.sum(jnp.exp(z - m_new), axis=-1, keepdims=True)
    m_ref[...] = m_new

    labels = lab_ref[...]                                                  # (N, 1) int32
    col = lax.broadcasted_iota(jnp.int32, z.shape, 1) + j * v_tile
    tgt_ref[...] = tgt_ref[...] + jnp.sum(jnp.where(col == labels, z, 0.0),
                                          axis=-1, keepdims=True)

    @pl.when(j == pl.num_programs(0) - 1)
    def _finalize():
        lse = m_ref[...] + jnp.log(l_ref[...])
        nll = lse - tgt_ref[...]                                           # (N, 1)
        active = act_ref[...]                                              # (N, 1) f32
        valid = active * jnp.where(labels == -1, 0.0, 1.0)                 # ignore_index=-1
        sum_ref[...] = jnp.sum(nll * valid).reshape(1, 1)
        vcnt_ref[...] = jnp.sum(valid).reshape(1, 1)
        acnt_ref[...] = jnp.sum(active).reshape(1, 1)


def fused_lm_head_ce(x, labels, active, p):
    N, Hh = x.shape
    nv = V // V_TILE
    return pl.pallas_call(
        partial(_head_ce_kernel, v_tile=V_TILE),
        out_shape=(jax.ShapeDtypeStruct((1, 1), jnp.float32),) * 3,
        grid=(nv,),
        in_specs=[
            pl.BlockSpec((N, Hh), lambda j: (0, 0)),       # decoder out (pre-shifted)
            pl.BlockSpec((Hh, Hh), lambda j: (0, 0)),      # dense W (bf16, (K,N))
            pl.BlockSpec((1, Hh), lambda j: (0, 0)),       # dense b
            pl.BlockSpec((Hh, V_TILE), lambda j: (0, j)),  # tied lm_head W^T tile (bf16)
            pl.BlockSpec((N, 1), lambda j: (0, 0)),        # labels
            pl.BlockSpec((N, 1), lambda j: (0, 0)),        # active mask
        ],
        out_specs=(pl.BlockSpec((1, 1), lambda j: (0, 0)),) * 3,
        scratch_shapes=[pltpu.VMEM((N, Hh), jnp.bfloat16),   # hidden = tanh(dense(x))
                        pltpu.VMEM((N, 1), jnp.float32),     # running max
                        pltpu.VMEM((N, 1), jnp.float32),     # running sum-exp
                        pltpu.VMEM((N, 1), jnp.float32)],    # target logit
        compiler_params=pltpu.CompilerParams(dimension_semantics=("arbitrary",)),
    )(x, p['dense_w'], p['dense_b'], p['emb_word_t'], labels, active)


# ----------------------------- glue (params, embeddings) -----------------------------

def layer_norm(x, g, b, eps=1e-5):
    mu = jnp.mean(x, axis=-1, keepdims=True)
    var = jnp.mean((x - mu) ** 2, axis=-1, keepdims=True)
    return (x - mu) * lax.rsqrt(var + eps) * g + b


def init_params(key):
    ks = jax.random.split(key, 20)

    def w(k, shape, scale=0.02):
        return (scale * jax.random.normal(k, shape)).astype(jnp.float32)

    p = {}
    emb_word = w(ks[0], (V, H))
    p['emb_word'] = emb_word                               # (V, H) f32, embedding lookup
    p['emb_word_t'] = emb_word.T.astype(jnp.bfloat16)      # tied lm_head, MXU-native (H, V)
    p['emb_pos'] = w(ks[1], (MAX_POS, H))
    p['emb_ln_g'] = jnp.ones((H,), jnp.float32)
    p['emb_ln_b'] = jnp.zeros((H,), jnp.float32)

    # attention blocks: weights pre-transposed to (K, N), K and V fused into one (H, 2H)
    for i, prefix in enumerate(['sa', 'ca']):
        base = 2 + 4 * i
        p[prefix + '_wq'] = w(ks[base + 0], (H, H)).astype(jnp.bfloat16)
        p[prefix + '_bq'] = jnp.zeros((1, H), jnp.float32)
        wk = w(ks[base + 1], (H, H))
        wv = w(ks[base + 2], (H, H))
        p[prefix + '_wkv'] = jnp.concatenate([wk, wv], axis=1).astype(jnp.bfloat16)  # (H, 2H)
        p[prefix + '_bkv'] = jnp.zeros((1, 2 * H), jnp.float32)
        p[prefix + '_wo'] = w(ks[base + 3], (H, H)).astype(jnp.bfloat16)
        p[prefix + '_bo'] = jnp.zeros((1, H), jnp.float32)

    for n in ['n1', 'n2', 'n3']:
        p[n + '_g'] = jnp.ones((1, H), jnp.float32)
        p[n + '_b'] = jnp.zeros((1, H), jnp.float32)

    p['ff_w1'] = w(ks[10], (H, FF)).astype(jnp.bfloat16)
    p['ff_b1'] = jnp.zeros((1, FF), jnp.float32)
    p['ff_w2'] = w(ks[11], (FF, H)).astype(jnp.bfloat16)
    p['ff_b2'] = jnp.zeros((1, H), jnp.float32)
    p['dense_w'] = w(ks[12], (H, H)).astype(jnp.bfloat16)
    p['dense_b'] = jnp.zeros((1, H), jnp.float32)
    return p


def embeddings(ids, p):
    we = jnp.take(p['emb_word'], ids, axis=0)              # (B, L, H) gather stays in JAX
    pe = p['emb_pos'][:ids.shape[1]][None]                 # (1, L, H)
    return layer_norm(we + pe, p['emb_ln_g'], p['emb_ln_b'])


def encoder(source_ids, source_mask, p):
    # TODO(synk): full pretrained RoBERTa encoder stack not replicated; deterministic
    # embedding-based stand-in (same output semantics: (B, S, H) hidden states).
    return embeddings(source_ids, p)


def seq2seq_forward(source_ids, source_mask, target_ids, target_mask, p):
    """Training branch of Seq2Seq.forward (target_ids is not None)."""
    encoder_output = encoder(source_ids, source_mask, p)          # (B, S, H)
    B, T = target_ids.shape
    S = source_ids.shape[1]

    tgt_emb = embeddings(target_ids, p)                           # (B, T, H)

    # self-attention: causal mask is built inside the kernel; no key-padding mask.
    zero_pad_self = jnp.zeros((B, 1, T), jnp.float32)
    # cross-attention: tiny per-key additive padding mask (broadcast in-kernel over queries).
    cross_add = jnp.where(source_mask, 0.0, -1e9).astype(jnp.float32).reshape(B, 1, S)

    x = attn_block(tgt_emb, tgt_emb, zero_pad_self, 'sa', 'n1', p, causal=True)
    x = attn_block(x, encoder_output, cross_add, 'ca', 'n2', p, causal=False)
    x = ffn_block(x, p)                                           # (B, T, H)

    # dense+tanh + tied lm_head + masked CE, fused & vocab-tiled (logits never hit HBM).
    x_shift = x[:, :-1, :].reshape(-1, H)                         # (B*(T-1), H)
    shift_labels = target_ids[:, 1:].reshape(-1, 1).astype(jnp.int32)
    active = (target_mask[:, 1:] != 0).reshape(-1, 1).astype(jnp.float32)
    sum_nll, valid_cnt, active_cnt = fused_lm_head_ce(x_shift, shift_labels, active, p)

    loss = sum_nll[0, 0] / valid_cnt[0, 0]
    # returns (loss, loss * active_loss.sum(), active_loss.sum())
    return loss, loss * active_cnt[0, 0], active_cnt[0, 0]


# TODO(synk): beam-search inference branch (target_ids is None) uses the Beam class with
# data-dependent loop termination and Python-side list manipulation; no clean Pallas equivalent.

if __name__ == "__main__":
    key = jax.random.PRNGKey(0)
    kp, k1, k2 = jax.random.split(key, 3)
    params = init_params(kp)

    B, S, T = 2, 16, 16
    source_ids = jax.random.randint(k1, (B, S), 0, V, dtype=jnp.int32)
    target_ids = jax.random.randint(k2, (B, T), 0, V, dtype=jnp.int32)
    src_len = jnp.array([S, S - 5])
    tgt_len = jnp.array([T, T - 3])
    source_mask = (jnp.arange(S)[None, :] < src_len[:, None])           # bool (B, S)
    target_mask = (jnp.arange(T)[None, :] < tgt_len[:, None]).astype(jnp.int32)

    fwd = jax.jit(seq2seq_forward)
    loss, loss_scaled, active_sum = fwd(source_ids, source_mask, target_ids, target_mask, params)
    jax.block_until_ready((loss, loss_scaled, active_sum))
    print("KERNEL_OK")
</pallas_src>

<mosaic_0001>
module attributes {stable_mosaic.version = 11 : i64} {
  func.func @_attn_block_kernel(%arg0: i32, %arg1: memref<1x16x64xf32, #tpu.memory_space<vmem>>, %arg2: memref<1x16x64xf32, #tpu.memory_space<vmem>>, %arg3: memref<1x1x16xf32, #tpu.memory_space<vmem>>, %arg4: memref<64x64xbf16, #tpu.memory_space<vmem>>, %arg5: memref<1x64xf32, #tpu.memory_space<vmem>>, %arg6: memref<64x128xbf16, #tpu.memory_space<vmem>>, %arg7: memref<1x128xf32, #tpu.memory_space<vmem>>, %arg8: memref<64x64xbf16, #tpu.memory_space<vmem>>, %arg9: memref<1x64xf32, #tpu.memory_space<vmem>>, %arg10: memref<1x64xf32, #tpu.memory_space<vmem>>, %arg11: memref<1x64xf32, #tpu.memory_space<vmem>>, %arg12: memref<1x16x64xf32, #tpu.memory_space<vmem>>) attributes {dimension_semantics = [#tpu.dimension_semantics<parallel>], iteration_bounds = array<i64: 2>, scalar_prefetch = 0 : i64, scratch_operands = 0 : i64, tpu.core_type = #tpu.core_type<tc>, window_params = [{transform_indices = @transform_0, window_bounds = array<i64: 1, 16, 64>}, {transform_indices = @transform_1, window_bounds = array<i64: 1, 16, 64>}, {transform_indices = @transform_2, window_bounds = array<i64: 1, 1, 16>}, {pipeline_mode = #tpu.pipeline_mode<synchronous>, transform_indices = @transform_3, window_bounds = array<i64: 64, 64>}, {pipeline_mode = #tpu.pipeline_mode<synchronous>, transform_indices = @transform_4, window_bounds = array<i64: 1, 64>}, {pipeline_mode = #tpu.pipeline_mode<synchronous>, transform_indices = @transform_5, window_bounds = array<i64: 64, 128>}, {pipeline_mode = #tpu.pipeline_mode<synchronous>, transform_indices = @transform_6, window_bounds = array<i64: 1, 128>}, {pipeline_mode = #tpu.pipeline_mode<synchronous>, transform_indices = @transform_7, window_bounds = array<i64: 64, 64>}, {pipeline_mode = #tpu.pipeline_mode<synchronous>, transform_indices = @transform_8, window_bounds = array<i64: 1, 64>}, {pipeline_mode = #tpu.pipeline_mode<synchronous>, transform_indices = @transform_9, window_bounds = array<i64: 1, 64>}, {pipeline_mode = #tpu.pipeline_mode<synchronous>, transform_indices = @transform_10, window_bounds = array<i64: 1, 64>}, {transform_indices = @transform_11, window_bounds = array<i64: 1, 16, 64>}]} {
    %c0 = arith.constant 0 : index
    %c0_0 = arith.constant 0 : index
    %c0_1 = arith.constant 0 : index
    %0 = vector.load %arg1[%c0, %c0_0, %c0_1] : memref<1x16x64xf32, #tpu.memory_space<vmem>>, vector<1x16x64xf32>
    %1 = vector.shape_cast %0 : vector<1x16x64xf32> to vector<16x64xf32>
    %c0_2 = arith.constant 0 : index
    %c0_3 = arith.constant 0 : index
    %c0_4 = arith.constant 0 : index
    %2 = vector.load %arg2[%c0_2, %c0_3, %c0_4] : memref<1x16x64xf32, #tpu.memory_space<vmem>>, vector<1x16x64xf32>
    %3 = vector.shape_cast %2 : vector<1x16x64xf32> to vector<16x64xf32>
    %4 = arith.truncf %1 : vector<16x64xf32> to vector<16x64xbf16>
    %c0_5 = arith.constant 0 : index
    %c0_6 = arith.constant 0 : index
    %5 = vector.load %arg4[%c0_5, %c0_6] : memref<64x64xbf16, #tpu.memory_space<vmem>>, vector<64x64xbf16>
    %cst = arith.constant dense<0.000000e+00> : vector<16x64xf32>
    %6 = tpu.matmul %4, %5, %cst {dimension_numbers = #tpu.dot_dimension_numbers<[1], [0], [0], [1], [0, 0, 1, 1], [], []>} : vector<16x64xbf16>, vector<64x64xbf16>, vector<16x64xf32> -> vector<16x64xf32>
    %c0_7 = arith.constant 0 : index
    %c0_8 = arith.constant 0 : index
    %7 = vector.load %arg5[%c0_7, %c0_8] : memref<1x64xf32, #tpu.memory_space<vmem>>, vector<1x64xf32>
    %8 = vector.broadcast %7 : vector<1x64xf32> to vector<16x64xf32>
    %9 = arith.addf %6, %8 : vector<16x64xf32>
    %10 = arith.truncf %3 : vector<16x64xf32> to vector<16x64xbf16>
    %c0_9 = arith.constant 0 : index
    %c0_10 = arith.constant 0 : index
    %11 = vector.load %arg6[%c0_9, %c0_10] : memref<64x128xbf16, #tpu.memory_space<vmem>>, vector<64x128xbf16>
    %cst_11 = arith.constant dense<0.000000e+00> : vector<16x128xf32>
    %12 = tpu.matmul %10, %11, %cst_11 {dimension_numbers = #tpu.dot_dimension_numbers<[1], [0], [0], [1], [0, 0, 1, 1], [], []>} : vector<16x64xbf16>, vector<64x128xbf16>, vector<16x128xf32> -> vector<16x128xf32>
    %c0_12 = arith.constant 0 : index
    %c0_13 = arith.constant 0 : index
    %13 = vector.load %arg7[%c0_12, %c0_13] : memref<1x128xf32, #tpu.memory_space<vmem>>, vector<1x128xf32>
    %14 = vector.broadcast %13 : vector<1x128xf32> to vector<16x128xf32>
    %15 = arith.addf %12, %14 : vector<16x128xf32>
    %16 = vector.extract_strided_slice %15 {offsets = [0, 0], sizes = [16, 64], strides = [1, 1]} : vector<16x128xf32> to vector<16x64xf32>
    %17 = vector.extract_strided_slice %15 {offsets = [0, 64], sizes = [16, 64], strides = [1, 1]} : vector<16x128xf32> to vector<16x64xf32>
    %c0_14 = arith.constant 0 : index
    %c0_15 = arith.constant 0 : index
    %c0_16 = arith.constant 0 : index
    %18 = vector.load %arg3[%c0_14, %c0_15, %c0_16] : memref<1x1x16xf32, #tpu.memory_space<vmem>>, vector<1x1x16xf32>
    %19 = vector.shape_cast %18 : vector<1x1x16xf32> to vector<1x16xf32>
    %20 = vector.shape_cast %19 : vector<1x16xf32> to vector<1x16xf32>
    %21 = vector.broadcast %20 : vector<1x16xf32> to vector<16x16xf32>
    %22 = tpu.iota {dimensions = array<i32: 0>} : vector<16x16xi32>
    %23 = tpu.iota {dimensions = array<i32: 1>} : vector<16x16xi32>
    %24 = arith.cmpi sle, %23, %22 : vector<16x16xi32>
    %cst_17 = arith.constant 0.000000e+00 : f32
    %cst_18 = arith.constant -1.000000e+04 : f32
    %25 = vector.broadcast %cst_17 : f32 to vector<16x16xf32>
    %26 = vector.broadcast %cst_18 : f32 to vector<16x16xf32>
    %27 = arith.select %24, %25, %26 : vector<16x16xi1>, vector<16x16xf32>
    %28 = arith.addf %21, %27 : vector<16x16xf32>
    %29 = vector.extract_strided_slice %9 {offsets = [0, 0], sizes = [16, 16], strides = [1, 1]} : vector<16x64xf32> to vector<16x16xf32>
    %30 = arith.truncf %29 : vector<16x16xf32> to vector<16x16xbf16>
    %31 = vector.extract_strided_slice %16 {offsets = [0, 0], sizes = [16, 16], strides = [1, 1]} : vector<16x64xf32> to vector<16x16xf32>
    %32 = arith.truncf %31 : vector<16x16xf32> to vector<16x16xbf16>
    %33 = vector.extract_strided_slice %17 {offsets = [0, 0], sizes = [16, 16], strides = [1, 1]} : vector<16x64xf32> to vector<16x16xf32>
    %34 = arith.truncf %33 : vector<16x16xf32> to vector<16x16xbf16>
    %cst_19 = arith.constant dense<0.000000e+00> : vector<16x16xf32>
    %35 = tpu.matmul %30, %32, %cst_19 {dimension_numbers = #tpu.dot_dimension_numbers<[1], [1], [0], [0], [0, 0, 1, 0], [], []>} : vector<16x16xbf16>, vector<16x16xbf16>, vector<16x16xf32> -> vector<16x16xf32>
    %cst_20 = arith.constant 2.500000e-01 : f32
    %36 = vector.broadcast %cst_20 : f32 to vector<16x16xf32>
    %37 = arith.mulf %35, %36 : vector<16x16xf32>
    %38 = arith.addf %37, %28 : vector<16x16xf32>
    %cst_21 = arith.constant dense<0xFF800000> : vector<16xf32>
    %39 = vector.multi_reduction <maximumf>, %38, %cst_21 [1] : vector<16x16xf32> to vector<16xf32>
    %40 = vector.shape_cast %39 : vector<16xf32> to vector<16x1xf32>
    %41 = vector.broadcast %40 : vector<16x1xf32> to vector<16x16xf32>
    %42 = arith.subf %38, %41 : vector<16x16xf32>
    %43 = math.exp %42 : vector<16x16xf32>
    %cst_22 = arith.constant dense<0.000000e+00> : vector<16xf32>
    %44 = vector.multi_reduction <add>, %43, %cst_22 [1] : vector<16x16xf32> to vector<16xf32>
    %45 = vector.shape_cast %44 : vector<16xf32> to vector<16x1xf32>
    %46 = tpu.reciprocal %45 {approx = true} : vector<16x1xf32> -> vector<16x1xf32>
    %47 = vector.broadcast %46 : vector<16x1xf32> to vector<16x16xf32>
    %48 = arith.mulf %43, %47 : vector<16x16xf32>
    %49 = arith.truncf %48 : vector<16x16xf32> to vector<16x16xbf16>
    %cst_23 = arith.constant dense<0.000000e+00> : vector<16x16xf32>
    %50 = tpu.matmul %49, %34, %cst_23 {dimension_numbers = #tpu.dot_dimension_numbers<[1], [0], [0], [1], [0, 0, 1, 1], [], []>} : vector<16x16xbf16>, vector<16x16xbf16>, vector<16x16xf32> -> vector<16x16xf32>
    %51 = vector.extract_strided_slice %9 {offsets = [0, 16], sizes = [16, 16], strides = [1, 1]} : vector<16x64xf32> to vector<16x16xf32>
    %52 = arith.truncf %51 : vector<16x16xf32> to vector<16x16xbf16>
    %53 = vector.extract_strided_slice %16 {offsets = [0, 16], sizes = [16, 16], strides = [1, 1]} : vector<16x64xf32> to vector<16x16xf32>
    %54 = arith.truncf %53 : vector<16x16xf32> to vector<16x16xbf16>
    %55 = vector.extract_strided_slice %17 {offsets = [0, 16], sizes = [16, 16], strides = [1, 1]} : vector<16x64xf32> to vector<16x16xf32>
    %56 = arith.truncf %55 : vector<16x16xf32> to vector<16x16xbf16>
    %cst_24 = arith.constant dense<0.000000e+00> : vector<16x16xf32>
    %57 = tpu.matmul %52, %54, %cst_24 {dimension_numbers = #tpu.dot_dimension_numbers<[1], [1], [0], [0], [0, 0, 1, 0], [], []>} : vector<16x16xbf16>, vector<16x16xbf16>, vector<16x16xf32> -> vector<16x16xf32>
    %cst_25 = arith.constant 2.500000e-01 : f32
    %58 = vector.broadcast %cst_25 : f32 to vector<16x16xf32>
    %59 = arith.mulf %57, %58 : vector<16x16xf32>
    %60 = arith.addf %59, %28 : vector<16x16xf32>
    %cst_26 = arith.constant dense<0xFF800000> : vector<16xf32>
    %61 = vector.multi_reduction <maximumf>, %60, %cst_26 [1] : vector<16x16xf32> to vector<16xf32>
    %62 = vector.shape_cast %61 : vector<16xf32> to vector<16x1xf32>
    %63 = vector.broadcast %62 : vector<16x1xf32> to vector<16x16xf32>
    %64 = arith.subf %60, %63 : vector<16x16xf32>
    %65 = math.exp %64 : vector<16x16xf32>
    %cst_27 = arith.constant dense<0.000000e+00> : vector<16xf32>
    %66 = vector.multi_reduction <add>, %65, %cst_27 [1] : vector<16x16xf32> to vector<16xf32>
    %67 = vector.shape_cast %66 : vector<16xf32> to vector<16x1xf32>
    %68 = tpu.reciprocal %67 {approx = true} : vector<16x1xf32> -> vector<16x1xf32>
    %69 = vector.broadcast %68 : vector<16x1xf32> to vector<16x16xf32>
    %70 = arith.mulf %65, %69 : vector<16x16xf32>
    %71 = arith.truncf %70 : vector<16x16xf32> to vector<16x16xbf16>
    %cst_28 = arith.constant dense<0.000000e+00> : vector<16x16xf32>
    %72 = tpu.matmul %71, %56, %cst_28 {dimension_numbers = #tpu.dot_dimension_numbers<[1], [0], [0], [1], [0, 0, 1, 1], [], []>} : vector<16x16xbf16>, vector<16x16xbf16>, vector<16x16xf32> -> vector<16x16xf32>
    %73 = vector.extract_strided_slice %9 {offsets = [0, 32], sizes = [16, 16], strides = [1, 1]} : vector<16x64xf32> to vector<16x16xf32>
    %74 = arith.truncf %73 : vector<16x16xf32> to vector<16x16xbf16>
    %75 = vector.extract_strided_slice %16 {offsets = [0, 32], sizes = [16, 16], strides = [1, 1]} : vector<16x64xf32> to vector<16x16xf32>
    %76 = arith.truncf %75 : vector<16x16xf32> to vector<16x16xbf16>
    %77 = vector.extract_strided_slice %17 {offsets = [0, 32], sizes = [16, 16], strides = [1, 1]} : vector<16x64xf32> to vector<16x16xf32>
    %78 = arith.truncf %77 : vector<16x16xf32> to vector<16x16xbf16>
    %cst_29 = arith.constant dense<0.000000e+00> : vector<16x16xf32>
    %79 = tpu.matmul %74, %76, %cst_29 {dimension_numbers = #tpu.dot_dimension_numbers<[1], [1], [0], [0], [0, 0, 1, 0], [], []>} : vector<16x16xbf16>, vector<16x16xbf16>, vector<16x16xf32> -> vector<16x16xf32>
    %cst_30 = arith.constant 2.500000e-01 : f32
    %80 = vector.broadcast %cst_30 : f32 to vector<16x16xf32>
    %81 = arith.mulf %79, %80 : vector<16x16xf32>
    %82 = arith.addf %81, %28 : vector<16x16xf32>
    %cst_31 = arith.constant dense<0xFF800000> : vector<16xf32>
    %83 = vector.multi_reduction <maximumf>, %82, %cst_31 [1] : vector<16x16xf32> to vector<16xf32>
    %84 = vector.shape_cast %83 : vector<16xf32> to vector<16x1xf32>
    %85 = vector.broadcast %84 : vector<16x1xf32> to vector<16x16xf32>
    %86 = arith.subf %82, %85 : vector<16x16xf32>
    %87 = math.exp %86 : vector<16x16xf32>
    %cst_32 = arith.constant dense<0.000000e+00> : vector<16xf32>
    %88 = vector.multi_reduction <add>, %87, %cst_32 [1] : vector<16x16xf32> to vector<16xf32>
    %89 = vector.shape_cast %88 : vector<16xf32> to vector<16x1xf32>
    %90 = tpu.reciprocal %89 {approx = true} : vector<16x1xf32> -> vector<16x1xf32>
    %91 = vector.broadcast %90 : vector<16x1xf32> to vector<16x16xf32>
    %92 = arith.mulf %87, %91 : vector<16x16xf32>
    %93 = arith.truncf %92 : vector<16x16xf32> to vector<16x16xbf16>
    %cst_33 = arith.constant dense<0.000000e+00> : vector<16x16xf32>
    %94 = tpu.matmul %93, %78, %cst_33 {dimension_numbers = #tpu.dot_dimension_numbers<[1], [0], [0], [1], [0, 0, 1, 1], [], []>} : vector<16x16xbf16>, vector<16x16xbf16>, vector<16x16xf32> -> vector<16x16xf32>
    %95 = vector.extract_strided_slice %9 {offsets = [0, 48], sizes = [16, 16], strides = [1, 1]} : vector<16x64xf32> to vector<16x16xf32>
    %96 = arith.truncf %95 : vector<16x16xf32> to vector<16x16xbf16>
    %97 = vector.extract_strided_slice %16 {offsets = [0, 48], sizes = [16, 16], strides = [1, 1]} : vector<16x64xf32> to vector<16x16xf32>
    %98 = arith.truncf %97 : vector<16x16xf32> to vector<16x16xbf16>
    %99 = vector.extract_strided_slice %17 {offsets = [0, 48], sizes = [16, 16], strides = [1, 1]} : vector<16x64xf32> to vector<16x16xf32>
    %100 = arith.truncf %99 : vector<16x16xf32> to vector<16x16xbf16>
    %cst_34 = arith.constant dense<0.000000e+00> : vector<16x16xf32>
    %101 = tpu.matmul %96, %98, %cst_34 {dimension_numbers = #tpu.dot_dimension_numbers<[1], [1], [0], [0], [0, 0, 1, 0], [], []>} : vector<16x16xbf16>, vector<16x16xbf16>, vector<16x16xf32> -> vector<16x16xf32>
    %cst_35 = arith.constant 2.500000e-01 : f32
    %102 = vector.broadcast %cst_35 : f32 to vector<16x16xf32>
    %103 = arith.mulf %101, %102 : vector<16x16xf32>
    %104 = arith.addf %103, %28 : vector<16x16xf32>
    %cst_36 = arith.constant dense<0xFF800000> : vector<16xf32>
    %105 = vector.multi_reduction <maximumf>, %104, %cst_36 [1] : vector<16x16xf32> to vector<16xf32>
    %106 = vector.shape_cast %105 : vector<16xf32> to vector<16x1xf32>
    %107 = vector.broadcast %106 : vector<16x1xf32> to vector<16x16xf32>
    %108 = arith.subf %104, %107 : vector<16x16xf32>
    %109 = math.exp %108 : vector<16x16xf32>
    %cst_37 = arith.constant dense<0.000000e+00> : vector<16xf32>
    %110 = vector.multi_reduction <add>, %109, %cst_37 [1] : vector<16x16xf32> to vector<16xf32>
    %111 = vector.shape_cast %110 : vector<16xf32> to vector<16x1xf32>
    %112 = tpu.reciprocal %111 {approx = true} : vector<16x1xf32> -> vector<16x1xf32>
    %113 = vector.broadcast %112 : vector<16x1xf32> to vector<16x16xf32>
    %114 = arith.mulf %109, %113 : vector<16x16xf32>
    %115 = arith.truncf %114 : vector<16x16xf32> to vector<16x16xbf16>
    %cst_38 = arith.constant dense<0.000000e+00> : vector<16x16xf32>
    %116 = tpu.matmul %115, %100, %cst_38 {dimension_numbers = #tpu.dot_dimension_numbers<[1], [0], [0], [1], [0, 0, 1, 1], [], []>} : vector<16x16xbf16>, vector<16x16xbf16>, vector<16x16xf32> -> vector<16x16xf32>
    %117 = tpu.concatenate %50, %72, %94, %116 in 1 : vector<16x16xf32>, vector<16x16xf32>, vector<16x16xf32>, vector<16x16xf32> -> vector<16x64xf32>
    %118 = arith.truncf %117 : vector<16x64xf32> to vector<16x64xbf16>
    %c0_39 = arith.constant 0 : index
    %c0_40 = arith.constant 0 : index
    %119 = vector.load %arg8[%c0_39, %c0_40] : memref<64x64xbf16, #tpu.memory_space<vmem>>, vector<64x64xbf16>
    %cst_41 = arith.constant dense<0.000000e+00> : vector<16x64xf32>
    %120 = tpu.matmul %118, %119, %cst_41 {dimension_numbers = #tpu.dot_dimension_numbers<[1], [0], [0], [1], [0, 0, 1, 1], [], []>} : vector<16x64xbf16>, vector<64x64xbf16>, vector<16x64xf32> -> vector<16x64xf32>
    %c0_42 = arith.constant 0 : index
    %c0_43 = arith.constant 0 : index
    %121 = vector.load %arg9[%c0_42, %c0_43] : memref<1x64xf32, #tpu.memory_space<vmem>>, vector<1x64xf32>
    %122 = vector.broadcast %121 : vector<1x64xf32> to vector<16x64xf32>
    %123 = arith.addf %120, %122 : vector<16x64xf32>
    %124 = arith.addf %1, %123 : vector<16x64xf32>
    %cst_44 = arith.constant dense<0.000000e+00> : vector<16xf32>
    %125 = vector.multi_reduction <add>, %124, %cst_44 [1] : vector<16x64xf32> to vector<16xf32>
    %126 = vector.shape_cast %125 : vector<16xf32> to vector<16x1xf32>
    %cst_45 = arith.constant 6.400000e+01 : f32
    %127 = vector.broadcast %cst_45 : f32 to vector<16x1xf32>
    %128 = arith.divf %126, %127 : vector<16x1xf32>
    %129 = vector.broadcast %128 : vector<16x1xf32> to vector<16x64xf32>
    %130 = arith.subf %124, %129 : vector<16x64xf32>
    %131 = arith.mulf %130, %130 : vector<16x64xf32>
    %cst_46 = arith.constant dense<0.000000e+00> : vector<16xf32>
    %132 = vector.multi_reduction <add>, %131, %cst_46 [1] : vector<16x64xf32> to vector<16xf32>
    %133 = vector.shape_cast %132 : vector<16xf32> to vector<16x1xf32>
    %cst_47 = arith.constant 6.400000e+01 : f32
    %134 = vector.broadcast %cst_47 : f32 to vector<16x1xf32>
    %135 = arith.divf %133, %134 : vector<16x1xf32>
    %136 = vector.broadcast %128 : vector<16x1xf32> to vector<16x64xf32>
    %137 = arith.subf %124, %136 : vector<16x64xf32>
    %cst_48 = arith.constant 9.99999974E-6 : f32
    %138 = vector.broadcast %cst_48 : f32 to vector<16x1xf32>
    %139 = arith.addf %135, %138 : vector<16x1xf32>
    %140 = math.rsqrt %139 : vector<16x1xf32>
    %141 = vector.broadcast %140 : vector<16x1xf32> to vector<16x64xf32>
    %142 = arith.mulf %137, %141 : vector<16x64xf32>
    %c0_49 = arith.constant 0 : index
    %c0_50 = arith.constant 0 : index
    %143 = vector.load %arg10[%c0_49, %c0_50] : memref<1x64xf32, #tpu.memory_space<vmem>>, vector<1x64xf32>
    %144 = vector.broadcast %143 : vector<1x64xf32> to vector<16x64xf32>
    %145 = arith.mulf %142, %144 : vector<16x64xf32>
    %c0_51 = arith.constant 0 : index
    %c0_52 = arith.constant 0 : index
    %146 = vector.load %arg11[%c0_51, %c0_52] : memref<1x64xf32, #tpu.memory_space<vmem>>, vector<1x64xf32>
    %147 = vector.broadcast %146 : vector<1x64xf32> to vector<16x64xf32>
    %148 = arith.addf %145, %147 : vector<16x64xf32>
    %c0_53 = arith.constant 0 : index
    %c0_54 = arith.constant 0 : index
    %c0_55 = arith.constant 0 : index
    %149 = vector.load %arg12[%c0_53, %c0_54, %c0_55] : memref<1x16x64xf32, #tpu.memory_space<vmem>>, vector<1x16x64xf32>
    %150 = vector.shape_cast %149 : vector<1x16x64xf32> to vector<16x64xf32>
    %151 = vector.shape_cast %148 : vector<16x64xf32> to vector<1x16x64xf32>
    tpu.vector_store %arg12[%c0_53, %c0_54, %c0_55], %151 {strides = array<i32>} : memref<1x16x64xf32, #tpu.memory_space<vmem>>, vector<1x16x64xf32>,
    return
  }
  func.func @transform_0(%arg0: i32) -> (i32, i32, i32) {
    %c0_i32 = arith.constant 0 : i32
    %c0_i32_0 = arith.constant 0 : i32
    %c0_i32_1 = arith.constant 0 : i32
    return %arg0, %c0_i32, %c0_i32_0 : i32, i32, i32
  }
  func.func @transform_1(%arg0: i32) -> (i32, i32, i32) {
    %c0_i32 = arith.constant 0 : i32
    %c0_i32_0 = arith.constant 0 : i32
    %c0_i32_1 = arith.constant 0 : i32
    return %arg0, %c0_i32, %c0_i32_0 : i32, i32, i32
  }
  func.func @transform_2(%arg0: i32) -> (i32, i32, i32) {
    %c0_i32 = arith.constant 0 : i32
    %c0_i32_0 = arith.constant 0 : i32
    %c0_i32_1 = arith.constant 0 : i32
    return %arg0, %c0_i32, %c0_i32_0 : i32, i32, i32
  }
  func.func @transform_3(%arg0: i32) -> (i32, i32) {
    %c0_i32 = arith.constant 0 : i32
    %c0_i32_0 = arith.constant 0 : i32
    %c0_i32_1 = arith.constant 0 : i32
    return %c0_i32, %c0_i32_0 : i32, i32
  }
  func.func @transform_4(%arg0: i32) -> (i32, i32) {
    %c0_i32 = arith.constant 0 : i32
    %c0_i32_0 = arith.constant 0 : i32
    %c0_i32_1 = arith.constant 0 : i32
    return %c0_i32, %c0_i32_0 : i32, i32
  }
  func.func @transform_5(%arg0: i32) -> (i32, i32) {
    %c0_i32 = arith.constant 0 : i32
    %c0_i32_0 = arith.constant 0 : i32
    %c0_i32_1 = arith.constant 0 : i32
    return %c0_i32, %c0_i32_0 : i32, i32
  }
  func.func @transform_6(%arg0: i32) -> (i32, i32) {
    %c0_i32 = arith.constant 0 : i32
    %c0_i32_0 = arith.constant 0 : i32
    %c0_i32_1 = arith.constant 0 : i32
    return %c0_i32, %c0_i32_0 : i32, i32
  }
  func.func @transform_7(%arg0: i32) -> (i32, i32) {
    %c0_i32 = arith.constant 0 : i32
    %c0_i32_0 = arith.constant 0 : i32
    %c0_i32_1 = arith.constant 0 : i32
    return %c0_i32, %c0_i32_0 : i32, i32
  }
  func.func @transform_8(%arg0: i32) -> (i32, i32) {
    %c0_i32 = arith.constant 0 : i32
    %c0_i32_0 = arith.constant 0 : i32
    %c0_i32_1 = arith.constant 0 : i32
    return %c0_i32, %c0_i32_0 : i32, i32
  }
  func.func @transform_9(%arg0: i32) -> (i32, i32) {
    %c0_i32 = arith.constant 0 : i32
    %c0_i32_0 = arith.constant 0 : i32
    %c0_i32_1 = arith.constant 0 : i32
    return %c0_i32, %c0_i32_0 : i32, i32
  }
  func.func @transform_10(%arg0: i32) -> (i32, i32) {
    %c0_i32 = arith.constant 0 : i32
    %c0_i32_0 = arith.constant 0 : i32
    %c0_i32_1 = arith.constant 0 : i32
    return %c0_i32, %c0_i32_0 : i32, i32
  }
  func.func @transform_11(%arg0: i32) -> (i32, i32, i32) {
    %c0_i32 = arith.constant 0 : i32
    %c0_i32_0 = arith.constant 0 : i32
    %c0_i32_1 = arith.constant 0 : i32
    return %arg0, %c0_i32, %c0_i32_0 : i32, i32, i32
  }
}

module attributes {stable_mosaic.version = 11 : i64} {
  func.func @_attn_block_kernel(%arg0: i32, %arg1: memref<1x16x64xf32, #tpu.memory_space<vmem>>, %arg2: memref<1x16x64xf32, #tpu.memory_space<vmem>>, %arg3: memref<1x1x16xf32, #tpu.memory_space<vmem>>, %arg4: memref<64x64xbf16, #tpu.memory_space<vmem>>, %arg5: memref<1x64xf32, #tpu.memory_space<vmem>>, %arg6: memref<64x128xbf16, #tpu.memory_space<vmem>>, %arg7: memref<1x128xf32, #tpu.memory_space<vmem>>, %arg8: memref<64x64xbf16, #tpu.memory_space<vmem>>, %arg9: memref<1x64xf32, #tpu.memory_space<vmem>>, %arg10: memref<1x64xf32, #tpu.memory_space<vmem>>, %arg11: memref<1x64xf32, #tpu.memory_space<vmem>>, %arg12: memref<1x16x64xf32, #tpu.memory_space<vmem>>) attributes {dimension_semantics = [#tpu.dimension_semantics<parallel>], iteration_bounds = array<i64: 2>, scalar_prefetch = 0 : i64, scratch_operands = 0 : i64, tpu.core_type = #tpu.core_type<tc>, window_params = [{transform_indices = @transform_0, window_bounds = array<i64: 1, 16, 64>}, {transform_indices = @transform_1, window_bounds = array<i64: 1, 16, 64>}, {transform_indices = @transform_2, window_bounds = array<i64: 1, 1, 16>}, {pipeline_mode = #tpu.pipeline_mode<synchronous>, transform_indices = @transform_3, window_bounds = array<i64: 64, 64>}, {pipeline_mode = #tpu.pipeline_mode<synchronous>, transform_indices = @transform_4, window_bounds = array<i64: 1, 64>}, {pipeline_mode = #tpu.pipeline_mode<synchronous>, transform_indices = @transform_5, window_bounds = array<i64: 64, 128>}, {pipeline_mode = #tpu.pipeline_mode<synchronous>, transform_indices = @transform_6, window_bounds = array<i64: 1, 128>}, {pipeline_mode = #tpu.pipeline_mode<synchronous>, transform_indices = @transform_7, window_bounds = array<i64: 64, 64>}, {pipeline_mode = #tpu.pipeline_mode<synchronous>, transform_indices = @transform_8, window_bounds = array<i64: 1, 64>}, {pipeline_mode = #tpu.pipeline_mode<synchronous>, transform_indices = @transform_9, window_bounds = array<i64: 1, 64>}, {pipeline_mode = #tpu.pipeline_mode<synchronous>, transform_indices = @transform_10, window_bounds = array<i64: 1, 64>}, {transform_indices = @transform_11, window_bounds = array<i64: 1, 16, 64>}]} {
    %c0 = arith.constant 0 : index
    %c0_0 = arith.constant 0 : index
    %c0_1 = arith.constant 0 : index
    %0 = vector.load %arg1[%c0, %c0_0, %c0_1] : memref<1x16x64xf32, #tpu.memory_space<vmem>>, vector<1x16x64xf32>
    %1 = vector.shape_cast %0 : vector<1x16x64xf32> to vector<16x64xf32>
    %c0_2 = arith.constant 0 : index
    %c0_3 = arith.constant 0 : index
    %c0_4 = arith.constant 0 : index
    %2 = vector.load %arg2[%c0_2, %c0_3, %c0_4] : memref<1x16x64xf32, #tpu.memory_space<vmem>>, vector<1x16x64xf32>
    %3 = vector.shape_cast %2 : vector<1x16x64xf32> to vector<16x64xf32>
    %4 = arith.truncf %1 : vector<16x64xf32> to vector<16x64xbf16>
    %c0_5 = arith.constant 0 : index
    %c0_6 = arith.constant 0 : index
    %5 = vector.load %arg4[%c0_5, %c0_6] : memref<64x64xbf16, #tpu.memory_space<vmem>>, vector<64x64xbf16>
    %cst = arith.constant dense<0.000000e+00> : vector<16x64xf32>
    %6 = tpu.matmul %4, %5, %cst {dimension_numbers = #tpu.dot_dimension_numbers<[1], [0], [0], [1], [0, 0, 1, 1], [], []>} : vector<16x64xbf16>, vector<64x64xbf16>, vector<16x64xf32> -> vector<16x64xf32>
    %c0_7 = arith.constant 0 : index
    %c0_8 = arith.constant 0 : index
    %7 = vector.load %arg5[%c0_7, %c0_8] : memref<1x64xf32, #tpu.memory_space<vmem>>, vector<1x64xf32>
    %8 = vector.broadcast %7 : vector<1x64xf32> to vector<16x64xf32>
    %9 = arith.addf %6, %8 : vector<16x64xf32>
    %10 = arith.truncf %3 : vector<16x64xf32> to vector<16x64xbf16>
    %c0_9 = arith.constant 0 : index
    %c0_10 = arith.constant 0 : index
    %11 = vector.load %arg6[%c0_9, %c0_10] : memref<64x128xbf16, #tpu.memory_space<vmem>>, vector<64x128xbf16>
    %cst_11 = arith.constant dense<0.000000e+00> : vector<16x128xf32>
    %12 = tpu.matmul %10, %11, %cst_11 {dimension_numbers = #tpu.dot_dimension_numbers<[1], [0], [0], [1], [0, 0, 1, 1], [], []>} : vector<16x64xbf16>, vector<64x128xbf16>, vector<16x128xf32> -> vector<16x128xf32>
    %c0_12 = arith.constant 0 : index
    %c0_13 = arith.constant 0 : index
    %13 = vector.load %arg7[%c0_12, %c0_13] : memref<1x128xf32, #tpu.memory_space<vmem>>, vector<1x128xf32>
    %14 = vector.broadcast %13 : vector<1x128xf32> to vector<16x128xf32>
    %15 = arith.addf %12, %14 : vector<16x128xf32>
    %16 = vector.extract_strided_slice %15 {offsets = [0, 0], sizes = [16, 64], strides = [1, 1]} : vector<16x128xf32> to vector<16x64xf32>
    %17 = vector.extract_strided_slice %15 {offsets = [0, 64], sizes = [16, 64], strides = [1, 1]} : vector<16x128xf32> to vector<16x64xf32>
    %c0_14 = arith.constant 0 : index
    %c0_15 = arith.constant 0 : index
    %c0_16 = arith.constant 0 : index
    %18 = vector.load %arg3[%c0_14, %c0_15, %c0_16] : memref<1x1x16xf32, #tpu.memory_space<vmem>>, vector<1x1x16xf32>
    %19 = vector.shape_cast %18 : vector<1x1x16xf32> to vector<1x16xf32>
    %20 = vector.shape_cast %19 : vector<1x16xf32> to vector<1x16xf32>
    %21 = vector.broadcast %20 : vector<1x16xf32> to vector<16x16xf32>
    %22 = vector.extract_strided_slice %9 {offsets = [0, 0], sizes = [16, 16], strides = [1, 1]} : vector<16x64xf32> to vector<16x16xf32>
    %23 = arith.truncf %22 : vector<16x16xf32> to vector<16x16xbf16>
    %24 = vector.extract_strided_slice %16 {offsets = [0, 0], sizes = [16, 16], strides = [1, 1]} : vector<16x64xf32> to vector<16x16xf32>
    %25 = arith.truncf %24 : vector<16x16xf32> to vector<16x16xbf16>
    %26 = vector.extract_strided_slice %17 {offsets = [0, 0], sizes = [16, 16], strides = [1, 1]} : vector<16x64xf32> to vector<16x16xf32>
    %27 = arith.truncf %26 : vector<16x16xf32> to vector<16x16xbf16>
    %cst_17 = arith.constant dense<0.000000e+00> : vector<16x16xf32>
    %28 = tpu.matmul %23, %25, %cst_17 {dimension_numbers = #tpu.dot_dimension_numbers<[1], [1], [0], [0], [0, 0, 1, 0], [], []>} : vector<16x16xbf16>, vector<16x16xbf16>, vector<16x16xf32> -> vector<16x16xf32>
    %cst_18 = arith.constant 2.500000e-01 : f32
    %29 = vector.broadcast %cst_18 : f32 to vector<16x16xf32>
    %30 = arith.mulf %28, %29 : vector<16x16xf32>
    %31 = arith.addf %30, %21 : vector<16x16xf32>
    %cst_19 = arith.constant dense<0xFF800000> : vector<16xf32>
    %32 = vector.multi_reduction <maximumf>, %31, %cst_19 [1] : vector<16x16xf32> to vector<16xf32>
    %33 = vector.shape_cast %32 : vector<16xf32> to vector<16x1xf32>
    %34 = vector.broadcast %33 : vector<16x1xf32> to vector<16x16xf32>
    %35 = arith.subf %31, %34 : vector<16x16xf32>
    %36 = math.exp %35 : vector<16x16xf32>
    %cst_20 = arith.constant dense<0.000000e+00> : vector<16xf32>
    %37 = vector.multi_reduction <add>, %36, %cst_20 [1] : vector<16x16xf32> to vector<16xf32>
    %38 = vector.shape_cast %37 : vector<16xf32> to vector<16x1xf32>
    %39 = tpu.reciprocal %38 {approx = true} : vector<16x1xf32> -> vector<16x1xf32>
    %40 = vector.broadcast %39 : vector<16x1xf32> to vector<16x16xf32>
    %41 = arith.mulf %36, %40 : vector<16x16xf32>
    %42 = arith.truncf %41 : vector<16x16xf32> to vector<16x16xbf16>
    %cst_21 = arith.constant dense<0.000000e+00> : vector<16x16xf32>
    %43 = tpu.matmul %42, %27, %cst_21 {dimension_numbers = #tpu.dot_dimension_numbers<[1], [0], [0], [1], [0, 0, 1, 1], [], []>} : vector<16x16xbf16>, vector<16x16xbf16>, vector<16x16xf32> -> vector<16x16xf32>
    %44 = vector.extract_strided_slice %9 {offsets = [0, 16], sizes = [16, 16], strides = [1, 1]} : vector<16x64xf32> to vector<16x16xf32>
    %45 = arith.truncf %44 : vector<16x16xf32> to vector<16x16xbf16>
    %46 = vector.extract_strided_slice %16 {offsets = [0, 16], sizes = [16, 16], strides = [1, 1]} : vector<16x64xf32> to vector<16x16xf32>
    %47 = arith.truncf %46 : vector<16x16xf32> to vector<16x16xbf16>
    %48 = vector.extract_strided_slice %17 {offsets = [0, 16], sizes = [16, 16], strides = [1, 1]} : vector<16x64xf32> to vector<16x16xf32>
    %49 = arith.truncf %48 : vector<16x16xf32> to vector<16x16xbf16>
    %cst_22 = arith.constant dense<0.000000e+00> : vector<16x16xf32>
    %50 = tpu.matmul %45, %47, %cst_22 {dimension_numbers = #tpu.dot_dimension_numbers<[1], [1], [0], [0], [0, 0, 1, 0], [], []>} : vector<16x16xbf16>, vector<16x16xbf16>, vector<16x16xf32> -> vector<16x16xf32>
    %cst_23 = arith.constant 2.500000e-01 : f32
    %51 = vector.broadcast %cst_23 : f32 to vector<16x16xf32>
    %52 = arith.mulf %50, %51 : vector<16x16xf32>
    %53 = arith.addf %52, %21 : vector<16x16xf32>
    %cst_24 = arith.constant dense<0xFF800000> : vector<16xf32>
    %54 = vector.multi_reduction <maximumf>, %53, %cst_24 [1] : vector<16x16xf32> to vector<16xf32>
    %55 = vector.shape_cast %54 : vector<16xf32> to vector<16x1xf32>
    %56 = vector.broadcast %55 : vector<16x1xf32> to vector<16x16xf32>
    %57 = arith.subf %53, %56 : vector<16x16xf32>
    %58 = math.exp %57 : vector<16x16xf32>
    %cst_25 = arith.constant dense<0.000000e+00> : vector<16xf32>
    %59 = vector.multi_reduction <add>, %58, %cst_25 [1] : vector<16x16xf32> to vector<16xf32>
    %60 = vector.shape_cast %59 : vector<16xf32> to vector<16x1xf32>
    %61 = tpu.reciprocal %60 {approx = true} : vector<16x1xf32> -> vector<16x1xf32>
    %62 = vector.broadcast %61 : vector<16x1xf32> to vector<16x16xf32>
    %63 = arith.mulf %58, %62 : vector<16x16xf32>
    %64 = arith.truncf %63 : vector<16x16xf32> to vector<16x16xbf16>
    %cst_26 = arith.constant dense<0.000000e+00> : vector<16x16xf32>
    %65 = tpu.matmul %64, %49, %cst_26 {dimension_numbers = #tpu.dot_dimension_numbers<[1], [0], [0], [1], [0, 0, 1, 1], [], []>} : vector<16x16xbf16>, vector<16x16xbf16>, vector<16x16xf32> -> vector<16x16xf32>
    %66 = vector.extract_strided_slice %9 {offsets = [0, 32], sizes = [16, 16], strides = [1, 1]} : vector<16x64xf32> to vector<16x16xf32>
    %67 = arith.truncf %66 : vector<16x16xf32> to vector<16x16xbf16>
    %68 = vector.extract_strided_slice %16 {offsets = [0, 32], sizes = [16, 16], strides = [1, 1]} : vector<16x64xf32> to vector<16x16xf32>
    %69 = arith.truncf %68 : vector<16x16xf32> to vector<16x16xbf16>
    %70 = vector.extract_strided_slice %17 {offsets = [0, 32], sizes = [16, 16], strides = [1, 1]} : vector<16x64xf32> to vector<16x16xf32>
    %71 = arith.truncf %70 : vector<16x16xf32> to vector<16x16xbf16>
    %cst_27 = arith.constant dense<0.000000e+00> : vector<16x16xf32>
    %72 = tpu.matmul %67, %69, %cst_27 {dimension_numbers = #tpu.dot_dimension_numbers<[1], [1], [0], [0], [0, 0, 1, 0], [], []>} : vector<16x16xbf16>, vector<16x16xbf16>, vector<16x16xf32> -> vector<16x16xf32>
    %cst_28 = arith.constant 2.500000e-01 : f32
    %73 = vector.broadcast %cst_28 : f32 to vector<16x16xf32>
    %74 = arith.mulf %72, %73 : vector<16x16xf32>
    %75 = arith.addf %74, %21 : vector<16x16xf32>
    %cst_29 = arith.constant dense<0xFF800000> : vector<16xf32>
    %76 = vector.multi_reduction <maximumf>, %75, %cst_29 [1] : vector<16x16xf32> to vector<16xf32>
    %77 = vector.shape_cast %76 : vector<16xf32> to vector<16x1xf32>
    %78 = vector.broadcast %77 : vector<16x1xf32> to vector<16x16xf32>
    %79 = arith.subf %75, %78 : vector<16x16xf32>
    %80 = math.exp %79 : vector<16x16xf32>
    %cst_30 = arith.constant dense<0.000000e+00> : vector<16xf32>
    %81 = vector.multi_reduction <add>, %80, %cst_30 [1] : vector<16x16xf32> to vector<16xf32>
    %82 = vector.shape_cast %81 : vector<16xf32> to vector<16x1xf32>
    %83 = tpu.reciprocal %82 {approx = true} : vector<16x1xf32> -> vector<16x1xf32>
    %84 = vector.broadcast %83 : vector<16x1xf32> to vector<16x16xf32>
    %85 = arith.mulf %80, %84 : vector<16x16xf32>
    %86 = arith.truncf %85 : vector<16x16xf32> to vector<16x16xbf16>
    %cst_31 = arith.constant dense<0.000000e+00> : vector<16x16xf32>
    %87 = tpu.matmul %86, %71, %cst_31 {dimension_numbers = #tpu.dot_dimension_numbers<[1], [0], [0], [1], [0, 0, 1, 1], [], []>} : vector<16x16xbf16>, vector<16x16xbf16>, vector<16x16xf32> -> vector<16x16xf32>
    %88 = vector.extract_strided_slice %9 {offsets = [0, 48], sizes = [16, 16], strides = [1, 1]} : vector<16x64xf32> to vector<16x16xf32>
    %89 = arith.truncf %88 : vector<16x16xf32> to vector<16x16xbf16>
    %90 = vector.extract_strided_slice %16 {offsets = [0, 48], sizes = [16, 16], strides = [1, 1]} : vector<16x64xf32> to vector<16x16xf32>
    %91 = arith.truncf %90 : vector<16x16xf32> to vector<16x16xbf16>
    %92 = vector.extract_strided_slice %17 {offsets = [0, 48], sizes = [16, 16], strides = [1, 1]} : vector<16x64xf32> to vector<16x16xf32>
    %93 = arith.truncf %92 : vector<16x16xf32> to vector<16x16xbf16>
    %cst_32 = arith.constant dense<0.000000e+00> : vector<16x16xf32>
    %94 = tpu.matmul %89, %91, %cst_32 {dimension_numbers = #tpu.dot_dimension_numbers<[1], [1], [0], [0], [0, 0, 1, 0], [], []>} : vector<16x16xbf16>, vector<16x16xbf16>, vector<16x16xf32> -> vector<16x16xf32>
    %cst_33 = arith.constant 2.500000e-01 : f32
    %95 = vector.broadcast %cst_33 : f32 to vector<16x16xf32>
    %96 = arith.mulf %94, %95 : vector<16x16xf32>
    %97 = arith.addf %96, %21 : vector<16x16xf32>
    %cst_34 = arith.constant dense<0xFF800000> : vector<16xf32>
    %98 = vector.multi_reduction <maximumf>, %97, %cst_34 [1] : vector<16x16xf32> to vector<16xf32>
    %99 = vector.shape_cast %98 : vector<16xf32> to vector<16x1xf32>
    %100 = vector.broadcast %99 : vector<16x1xf32> to vector<16x16xf32>
    %101 = arith.subf %97, %100 : vector<16x16xf32>
    %102 = math.exp %101 : vector<16x16xf32>
    %cst_35 = arith.constant dense<0.000000e+00> : vector<16xf32>
    %103 = vector.multi_reduction <add>, %102, %cst_35 [1] : vector<16x16xf32> to vector<16xf32>
    %104 = vector.shape_cast %103 : vector<16xf32> to vector<16x1xf32>
    %105 = tpu.reciprocal %104 {approx = true} : vector<16x1xf32> -> vector<16x1xf32>
    %106 = vector.broadcast %105 : vector<16x1xf32> to vector<16x16xf32>
    %107 = arith.mulf %102, %106 : vector<16x16xf32>
    %108 = arith.truncf %107 : vector<16x16xf32> to vector<16x16xbf16>
    %cst_36 = arith.constant dense<0.000000e+00> : vector<16x16xf32>
    %109 = tpu.matmul %108, %93, %cst_36 {dimension_numbers = #tpu.dot_dimension_numbers<[1], [0], [0], [1], [0, 0, 1, 1], [], []>} : vector<16x16xbf16>, vector<16x16xbf16>, vector<16x16xf32> -> vector<16x16xf32>
    %110 = tpu.concatenate %43, %65, %87, %109 in 1 : vector<16x16xf32>, vector<16x16xf32>, vector<16x16xf32>, vector<16x16xf32> -> vector<16x64xf32>
    %111 = arith.truncf %110 : vector<16x64xf32> to vector<16x64xbf16>
    %c0_37 = arith.constant 0 : index
    %c0_38 = arith.constant 0 : index
    %112 = vector.load %arg8[%c0_37, %c0_38] : memref<64x64xbf16, #tpu.memory_space<vmem>>, vector<64x64xbf16>
    %cst_39 = arith.constant dense<0.000000e+00> : vector<16x64xf32>
    %113 = tpu.matmul %111, %112, %cst_39 {dimension_numbers = #tpu.dot_dimension_numbers<[1], [0], [0], [1], [0, 0, 1, 1], [], []>} : vector<16x64xbf16>, vector<64x64xbf16>, vector<16x64xf32> -> vector<16x64xf32>
    %c0_40 = arith.constant 0 : index
    %c0_41 = arith.constant 0 : index
    %114 = vector.load %arg9[%c0_40, %c0_41] : memref<1x64xf32, #tpu.memory_space<vmem>>, vector<1x64xf32>
    %115 = vector.broadcast %114 : vector<1x64xf32> to vector<16x64xf32>
    %116 = arith.addf %113, %115 : vector<16x64xf32>
    %117 = arith.addf %1, %116 : vector<16x64xf32>
    %cst_42 = arith.constant dense<0.000000e+00> : vector<16xf32>
    %118 = vector.multi_reduction <add>, %117, %cst_42 [1] : vector<16x64xf32> to vector<16xf32>
    %119 = vector.shape_cast %118 : vector<16xf32> to vector<16x1xf32>
    %cst_43 = arith.constant 6.400000e+01 : f32
    %120 = vector.broadcast %cst_43 : f32 to vector<16x1xf32>
    %121 = arith.divf %119, %120 : vector<16x1xf32>
    %122 = vector.broadcast %121 : vector<16x1xf32> to vector<16x64xf32>
    %123 = arith.subf %117, %122 : vector<16x64xf32>
    %124 = arith.mulf %123, %123 : vector<16x64xf32>
    %cst_44 = arith.constant dense<0.000000e+00> : vector<16xf32>
    %125 = vector.multi_reduction <add>, %124, %cst_44 [1] : vector<16x64xf32> to vector<16xf32>
    %126 = vector.shape_cast %125 : vector<16xf32> to vector<16x1xf32>
    %cst_45 = arith.constant 6.400000e+01 : f32
    %127 = vector.broadcast %cst_45 : f32 to vector<16x1xf32>
    %128 = arith.divf %126, %127 : vector<16x1xf32>
    %129 = vector.broadcast %121 : vector<16x1xf32> to vector<16x64xf32>
    %130 = arith.subf %117, %129 : vector<16x64xf32>
    %cst_46 = arith.constant 9.99999974E-6 : f32
    %131 = vector.broadcast %cst_46 : f32 to vector<16x1xf32>
    %132 = arith.addf %128, %131 : vector<16x1xf32>
    %133 = math.rsqrt %132 : vector<16x1xf32>
    %134 = vector.broadcast %133 : vector<16x1xf32> to vector<16x64xf32>
    %135 = arith.mulf %130, %134 : vector<16x64xf32>
    %c0_47 = arith.constant 0 : index
    %c0_48 = arith.constant 0 : index
    %136 = vector.load %arg10[%c0_47, %c0_48] : memref<1x64xf32, #tpu.memory_space<vmem>>, vector<1x64xf32>
    %137 = vector.broadcast %136 : vector<1x64xf32> to vector<16x64xf32>
    %138 = arith.mulf %135, %137 : vector<16x64xf32>
    %c0_49 = arith.constant 0 : index
    %c0_50 = arith.constant 0 : index
    %139 = vector.load %arg11[%c0_49, %c0_50] : memref<1x64xf32, #tpu.memory_space<vmem>>, vector<1x64xf32>
    %140 = vector.broadcast %139 : vector<1x64xf32> to vector<16x64xf32>
    %141 = arith.addf %138, %140 : vector<16x64xf32>
    %c0_51 = arith.constant 0 : index
    %c0_52 = arith.constant 0 : index
    %c0_53 = arith.constant 0 : index
    %142 = vector.load %arg12[%c0_51, %c0_52, %c0_53] : memref<1x16x64xf32, #tpu.memory_space<vmem>>, vector<1x16x64xf32>
    %143 = vector.shape_cast %142 : vector<1x16x64xf32> to vector<16x64xf32>
    %144 = vector.shape_cast %141 : vector<16x64xf32> to vector<1x16x64xf32>
    tpu.vector_store %arg12[%c0_51, %c0_52, %c0_53], %144 {strides = array<i32>} : memref<1x16x64xf32, #tpu.memory_space<vmem>>, vector<1x16x64xf32>,
    return
  }
  func.func @transform_0(%arg0: i32) -> (i32, i32, i32) {
    %c0_i32 = arith.constant 0 : i32
    %c0_i32_0 = arith.constant 0 : i32
    %c0_i32_1 = arith.constant 0 : i32
    return %arg0, %c0_i32, %c0_i32_0 : i32, i32, i32
  }
  func.func @transform_1(%arg0: i32) -> (i32, i32, i32) {
    %c0_i32 = arith.constant 0 : i32
    %c0_i32_0 = arith.constant 0 : i32
    %c0_i32_1 = arith.constant 0 : i32
    return %arg0, %c0_i32, %c0_i32_0 : i32, i32, i32
  }
  func.func @transform_2(%arg0: i32) -> (i32, i32, i32) {
    %c0_i32 = arith.constant 0 : i32
    %c0_i32_0 = arith.constant 0 : i32
    %c0_i32_1 = arith.constant 0 : i32
    return %arg0, %c0_i32, %c0_i32_0 : i32, i32, i32
  }
  func.func @transform_3(%arg0: i32) -> (i32, i32) {
    %c0_i32 = arith.constant 0 : i32
    %c0_i32_0 = arith.constant 0 : i32
    %c0_i32_1 = arith.constant 0 : i32
    return %c0_i32, %c0_i32_0 : i32, i32
  }
  func.func @transform_4(%arg0: i32) -> (i32, i32) {
    %c0_i32 = arith.constant 0 : i32
    %c0_i32_0 = arith.constant 0 : i32
    %c0_i32_1 = arith.constant 0 : i32
    return %c0_i32, %c0_i32_0 : i32, i32
  }
  func.func @transform_5(%arg0: i32) -> (i32, i32) {
    %c0_i32 = arith.constant 0 : i32
    %c0_i32_0 = arith.constant 0 : i32
    %c0_i32_1 = arith.constant 0 : i32
    return %c0_i32, %c0_i32_0 : i32, i32
  }
  func.func @transform_6(%arg0: i32) -> (i32, i32) {
    %c0_i32 = arith.constant 0 : i32
    %c0_i32_0 = arith.constant 0 : i32
    %c0_i32_1 = arith.constant 0 : i32
    return %c0_i32, %c0_i32_0 : i32, i32
  }
  func.func @transform_7(%arg0: i32) -> (i32, i32) {
    %c0_i32 = arith.constant 0 : i32
    %c0_i32_0 = arith.constant 0 : i32
    %c0_i32_1 = arith.constant 0 : i32
    return %c0_i32, %c0_i32_0 : i32, i32
  }
  func.func @transform_8(%arg0: i32) -> (i32, i32) {
    %c0_i32 = arith.constant 0 : i32
    %c0_i32_0 = arith.constant 0 : i32
    %c0_i32_1 = arith.constant 0 : i32
    return %c0_i32, %c0_i32_0 : i32, i32
  }
  func.func @transform_9(%arg0: i32) -> (i32, i32) {
    %c0_i32 = arith.constant 0 : i32
    %c0_i32_0 = arith.constant 0 : i32
    %c0_i32_1 = arith.constant 0 : i32
    return %c0_i32, %c0_i32_0 : i32, i32
  }
  func.func @transform_10(%arg0: i32) -> (i32, i32) {
    %c0_i32 = arith.constant 0 : i32
    %c0_i32_0 = arith.constant 0 : i32
    %c0_i32_1 = arith.constant 0 : i32
    return %c0_i32, %c0_i32_0 : i32, i32
  }
  func.func @transform_11(%arg0: i32) -> (i32, i32, i32) {
    %c0_i32 = arith.constant 0 : i32
    %c0_i32_0 = arith.constant 0 : i32
    %c0_i32_1 = arith.constant 0 : i32
    return %arg0, %c0_i32, %c0_i32_0 : i32, i32, i32
  }
}

module attributes {stable_mosaic.version = 11 : i64} {
  func.func @_ffn_block_kernel(%arg0: i32, %arg1: memref<1x16x64xf32, #tpu.memory_space<vmem>>, %arg2: memref<64x128xbf16, #tpu.memory_space<vmem>>, %arg3: memref<1x128xf32, #tpu.memory_space<vmem>>, %arg4: memref<128x64xbf16, #tpu.memory_space<vmem>>, %arg5: memref<1x64xf32, #tpu.memory_space<vmem>>, %arg6: memref<1x64xf32, #tpu.memory_space<vmem>>, %arg7: memref<1x64xf32, #tpu.memory_space<vmem>>, %arg8: memref<1x16x64xf32, #tpu.memory_space<vmem>>) attributes {dimension_semantics = [#tpu.dimension_semantics<parallel>], iteration_bounds = array<i64: 2>, scalar_prefetch = 0 : i64, scratch_operands = 0 : i64, tpu.core_type = #tpu.core_type<tc>, window_params = [{transform_indices = @transform_0, window_bounds = array<i64: 1, 16, 64>}, {pipeline_mode = #tpu.pipeline_mode<synchronous>, transform_indices = @transform_1, window_bounds = array<i64: 64, 128>}, {pipeline_mode = #tpu.pipeline_mode<synchronous>, transform_indices = @transform_2, window_bounds = array<i64: 1, 128>}, {pipeline_mode = #tpu.pipeline_mode<synchronous>, transform_indices = @transform_3, window_bounds = array<i64: 128, 64>}, {pipeline_mode = #tpu.pipeline_mode<synchronous>, transform_indices = @transform_4, window_bounds = array<i64: 1, 64>}, {pipeline_mode = #tpu.pipeline_mode<synchronous>, transform_indices = @transform_5, window_bounds = array<i64: 1, 64>}, {pipeline_mode = #tpu.pipeline_mode<synchronous>, transform_indices = @transform_6, window_bounds = array<i64: 1, 64>}, {transform_indices = @transform_7, window_bounds = array<i64: 1, 16, 64>}]} {
    %c0 = arith.constant 0 : index
    %c0_0 = arith.constant 0 : index
    %c0_1 = arith.constant 0 : index
    %0 = vector.load %arg1[%c0, %c0_0, %c0_1] : memref<1x16x64xf32, #tpu.memory_space<vmem>>, vector<1x16x64xf32>
    %1 = vector.shape_cast %0 : vector<1x16x64xf32> to vector<16x64xf32>
    %2 = arith.truncf %1 : vector<16x64xf32> to vector<16x64xbf16>
    %c0_2 = arith.constant 0 : index
    %c0_3 = arith.constant 0 : index
    %3 = vector.load %arg2[%c0_2, %c0_3] : memref<64x128xbf16, #tpu.memory_space<vmem>>, vector<64x128xbf16>
    %cst = arith.constant dense<0.000000e+00> : vector<16x128xf32>
    %4 = tpu.matmul %2, %3, %cst {dimension_numbers = #tpu.dot_dimension_numbers<[1], [0], [0], [1], [0, 0, 1, 1], [], []>} : vector<16x64xbf16>, vector<64x128xbf16>, vector<16x128xf32> -> vector<16x128xf32>
    %c0_4 = arith.constant 0 : index
    %c0_5 = arith.constant 0 : index
    %5 = vector.load %arg3[%c0_4, %c0_5] : memref<1x128xf32, #tpu.memory_space<vmem>>, vector<1x128xf32>
    %6 = vector.broadcast %5 : vector<1x128xf32> to vector<16x128xf32>
    %7 = arith.addf %4, %6 : vector<16x128xf32>
    %cst_6 = arith.constant 0.000000e+00 : f32
    %8 = vector.broadcast %cst_6 : f32 to vector<16x128xf32>
    %9 = arith.maximumf %7, %8 : vector<16x128xf32>
    %10 = arith.truncf %9 : vector<16x128xf32> to vector<16x128xbf16>
    %c0_7 = arith.constant 0 : index
    %c0_8 = arith.constant 0 : index
    %11 = vector.load %arg4[%c0_7, %c0_8] : memref<128x64xbf16, #tpu.memory_space<vmem>>, vector<128x64xbf16>
    %cst_9 = arith.constant dense<0.000000e+00> : vector<16x64xf32>
    %12 = tpu.matmul %10, %11, %cst_9 {dimension_numbers = #tpu.dot_dimension_numbers<[1], [0], [0], [1], [0, 0, 1, 1], [], []>} : vector<16x128xbf16>, vector<128x64xbf16>, vector<16x64xf32> -> vector<16x64xf32>
    %c0_10 = arith.constant 0 : index
    %c0_11 = arith.constant 0 : index
    %13 = vector.load %arg5[%c0_10, %c0_11] : memref<1x64xf32, #tpu.memory_space<vmem>>, vector<1x64xf32>
    %14 = vector.broadcast %13 : vector<1x64xf32> to vector<16x64xf32>
    %15 = arith.addf %12, %14 : vector<16x64xf32>
    %16 = arith.addf %1, %15 : vector<16x64xf32>
    %cst_12 = arith.constant dense<0.000000e+00> : vector<16xf32>
    %17 = vector.multi_reduction <add>, %16, %cst_12 [1] : vector<16x64xf32> to vector<16xf32>
    %18 = vector.shape_cast %17 : vector<16xf32> to vector<16x1xf32>
    %cst_13 = arith.constant 6.400000e+01 : f32
    %19 = vector.broadcast %cst_13 : f32 to vector<16x1xf32>
    %20 = arith.divf %18, %19 : vector<16x1xf32>
    %21 = vector.broadcast %20 : vector<16x1xf32> to vector<16x64xf32>
    %22 = arith.subf %16, %21 : vector<16x64xf32>
    %23 = arith.mulf %22, %22 : vector<16x64xf32>
    %cst_14 = arith.constant dense<0.000000e+00> : vector<16xf32>
    %24 = vector.multi_reduction <add>, %23, %cst_14 [1] : vector<16x64xf32> to vector<16xf32>
    %25 = vector.shape_cast %24 : vector<16xf32> to vector<16x1xf32>
    %cst_15 = arith.constant 6.400000e+01 : f32
    %26 = vector.broadcast %cst_15 : f32 to vector<16x1xf32>
    %27 = arith.divf %25, %26 : vector<16x1xf32>
    %28 = vector.broadcast %20 : vector<16x1xf32> to vector<16x64xf32>
    %29 = arith.subf %16, %28 : vector<16x64xf32>
    %cst_16 = arith.constant 9.99999974E-6 : f32
    %30 = vector.broadcast %cst_16 : f32 to vector<16x1xf32>
    %31 = arith.addf %27, %30 : vector<16x1xf32>
    %32 = math.rsqrt %31 : vector<16x1xf32>
    %33 = vector.broadcast %32 : vector<16x1xf32> to vector<16x64xf32>
    %34 = arith.mulf %29, %33 : vector<16x64xf32>
    %c0_17 = arith.constant 0 : index
    %c0_18 = arith.constant 0 : index
    %35 = vector.load %arg6[%c0_17, %c0_18] : memref<1x64xf32, #tpu.memory_space<vmem>>, vector<1x64xf32>
    %36 = vector.broadcast %35 : vector<1x64xf32> to vector<16x64xf32>
    %37 = arith.mulf %34, %36 : vector<16x64xf32>
    %c0_19 = arith.constant 0 : index
    %c0_20 = arith.constant 0 : index
    %38 = vector.load %arg7[%c0_19, %c0_20] : memref<1x64xf32, #tpu.memory_space<vmem>>, vector<1x64xf32>
    %39 = vector.broadcast %38 : vector<1x64xf32> to vector<16x64xf32>
    %40 = arith.addf %37, %39 : vector<16x64xf32>
    %c0_21 = arith.constant 0 : index
    %c0_22 = arith.constant 0 : index
    %c0_23 = arith.constant 0 : index
    %41 = vector.load %arg8[%c0_21, %c0_22, %c0_23] : memref<1x16x64xf32, #tpu.memory_space<vmem>>, vector<1x16x64xf32>
    %42 = vector.shape_cast %41 : vector<1x16x64xf32> to vector<16x64xf32>
    %43 = vector.shape_cast %40 : vector<16x64xf32> to vector<1x16x64xf32>
    tpu.vector_store %arg8[%c0_21, %c0_22, %c0_23], %43 {strides = array<i32>} : memref<1x16x64xf32, #tpu.memory_space<vmem>>, vector<1x16x64xf32>,
    return
  }
  func.func @transform_0(%arg0: i32) -> (i32, i32, i32) {
    %c0_i32 = arith.constant 0 : i32
    %c0_i32_0 = arith.constant 0 : i32
    %c0_i32_1 = arith.constant 0 : i32
    return %arg0, %c0_i32, %c0_i32_0 : i32, i32, i32
  }
  func.func @transform_1(%arg0: i32) -> (i32, i32) {
    %c0_i32 = arith.constant 0 : i32
    %c0_i32_0 = arith.constant 0 : i32
    %c0_i32_1 = arith.constant 0 : i32
    return %c0_i32, %c0_i32_0 : i32, i32
  }
  func.func @transform_2(%arg0: i32) -> (i32, i32) {
    %c0_i32 = arith.constant 0 : i32
    %c0_i32_0 = arith.constant 0 : i32
    %c0_i32_1 = arith.constant 0 : i32
    return %c0_i32, %c0_i32_0 : i32, i32
  }
  func.func @transform_3(%arg0: i32) -> (i32, i32) {
    %c0_i32 = arith.constant 0 : i32
    %c0_i32_0 = arith.constant 0 : i32
    %c0_i32_1 = arith.constant 0 : i32
    return %c0_i32, %c0_i32_0 : i32, i32
  }
  func.func @transform_4(%arg0: i32) -> (i32, i32) {
    %c0_i32 = arith.constant 0 : i32
    %c0_i32_0 = arith.constant 0 : i32
    %c0_i32_1 = arith.constant 0 : i32
    return %c0_i32, %c0_i32_0 : i32, i32
  }
  func.func @transform_5(%arg0: i32) -> (i32, i32) {
    %c0_i32 = arith.constant 0 : i32
    %c0_i32_0 = arith.constant 0 : i32
    %c0_i32_1 = arith.constant 0 : i32
    return %c0_i32, %c0_i32_0 : i32, i32
  }
  func.func @transform_6(%arg0: i32) -> (i32, i32) {
    %c0_i32 = arith.constant 0 : i32
    %c0_i32_0 = arith.constant 0 : i32
    %c0_i32_1 = arith.constant 0 : i32
    return %c0_i32, %c0_i32_0 : i32, i32
  }
  func.func @transform_7(%arg0: i32) -> (i32, i32, i32) {
    %c0_i32 = arith.constant 0 : i32
    %c0_i32_0 = arith.constant 0 : i32
    %c0_i32_1 = arith.constant 0 : i32
    return %arg0, %c0_i32, %c0_i32_0 : i32, i32, i32
  }
}

module attributes {stable_mosaic.version = 11 : i64} {
  func.func @_head_ce_kernel(%arg0: i32, %arg1: memref<30x64xf32, #tpu.memory_space<vmem>>, %arg2: memref<64x64xbf16, #tpu.memory_space<vmem>>, %arg3: memref<1x64xf32, #tpu.memory_space<vmem>>, %arg4: memref<64x128xbf16, #tpu.memory_space<vmem>>, %arg5: memref<30x1xi32, #tpu.memory_space<vmem>>, %arg6: memref<30x1xf32, #tpu.memory_space<vmem>>, %arg7: memref<1x1xf32, #tpu.memory_space<vmem>>, %arg8: memref<1x1xf32, #tpu.memory_space<vmem>>, %arg9: memref<1x1xf32, #tpu.memory_space<vmem>>, %arg10: memref<30x64xbf16, #tpu.memory_space<vmem>>, %arg11: memref<30x1xf32, #tpu.memory_space<vmem>>, %arg12: memref<30x1xf32, #tpu.memory_space<vmem>>, %arg13: memref<30x1xf32, #tpu.memory_space<vmem>>) attributes {dimension_semantics = [#tpu.dimension_semantics<arbitrary>], iteration_bounds = array<i64: 2>, scalar_prefetch = 0 : i64, scratch_operands = 4 : i64, tpu.core_type = #tpu.core_type<tc>, window_params = [{pipeline_mode = #tpu.pipeline_mode<synchronous>, transform_indices = @transform_0, window_bounds = array<i64: 30, 64>}, {pipeline_mode = #tpu.pipeline_mode<synchronous>, transform_indices = @transform_1, window_bounds = array<i64: 64, 64>}, {pipeline_mode = #tpu.pipeline_mode<synchronous>, transform_indices = @transform_2, window_bounds = array<i64: 1, 64>}, {transform_indices = @transform_3, window_bounds = array<i64: 64, 128>}, {pipeline_mode = #tpu.pipeline_mode<synchronous>, transform_indices = @transform_4, window_bounds = array<i64: 30, 1>}, {pipeline_mode = #tpu.pipeline_mode<synchronous>, transform_indices = @transform_5, window_bounds = array<i64: 30, 1>}, {pipeline_mode = #tpu.pipeline_mode<synchronous>, transform_indices = @transform_6, window_bounds = array<i64: 1, 1>}, {pipeline_mode = #tpu.pipeline_mode<synchronous>, transform_indices = @transform_7, window_bounds = array<i64: 1, 1>}, {pipeline_mode = #tpu.pipeline_mode<synchronous>, transform_indices = @transform_8, window_bounds = array<i64: 1, 1>}]} {
    %c0_i32 = arith.constant 0 : i32
    %0 = arith.cmpi eq, %arg0, %c0_i32 : i32
    %1 = arith.extui %0 : i1 to i32
    %c0_i32_0 = arith.constant 0 : i32
    %2 = arith.cmpi ne, %1, %c0_i32_0 : i32
    scf.if %2 {
      %c0_23 = arith.constant 0 : index
      %c0_24 = arith.constant 0 : index
      %39 = vector.load %arg1[%c0_23, %c0_24] : memref<30x64xf32, #tpu.memory_space<vmem>>, vector<30x64xf32>
      %40 = arith.truncf %39 : vector<30x64xf32> to vector<30x64xbf16>
      %c0_25 = arith.constant 0 : index
      %c0_26 = arith.constant 0 : index
      %41 = vector.load %arg2[%c0_25, %c0_26] : memref<64x64xbf16, #tpu.memory_space<vmem>>, vector<64x64xbf16>
      %cst_27 = arith.constant dense<0.000000e+00> : vector<30x64xf32>
      %42 = tpu.matmul %40, %41, %cst_27 {dimension_numbers = #tpu.dot_dimension_numbers<[1], [0], [0], [1], [0, 0, 1, 1], [], []>} : vector<30x64xbf16>, vector<64x64xbf16>, vector<30x64xf32> -> vector<30x64xf32>
      %c0_28 = arith.constant 0 : index
      %c0_29 = arith.constant 0 : index
      %43 = vector.load %arg3[%c0_28, %c0_29] : memref<1x64xf32, #tpu.memory_space<vmem>>, vector<1x64xf32>
      %44 = vector.broadcast %43 : vector<1x64xf32> to vector<30x64xf32>
      %45 = arith.addf %42, %44 : vector<30x64xf32>
      %46 = math.tanh %45 : vector<30x64xf32>
      %47 = arith.truncf %46 : vector<30x64xf32> to vector<30x64xbf16>
      %c0_30 = arith.constant 0 : index
      %c0_31 = arith.constant 0 : index
      %48 = vector.load %arg10[%c0_30, %c0_31] : memref<30x64xbf16, #tpu.memory_space<vmem>>, vector<30x64xbf16>
      tpu.vector_store %arg10[%c0_30, %c0_31], %47 {strides = array<i32>} : memref<30x64xbf16, #tpu.memory_space<vmem>>, vector<30x64xbf16>,
      %cst_32 = arith.constant 0xFF800000 : f32
      %49 = vector.broadcast %cst_32 : f32 to vector<30x1xf32>
      %c0_33 = arith.constant 0 : index
      %c0_34 = arith.constant 0 : index
      %50 = vector.load %arg11[%c0_33, %c0_34] : memref<30x1xf32, #tpu.memory_space<vmem>>, vector<30x1xf32>
      tpu.vector_store %arg11[%c0_33, %c0_34], %49 {strides = array<i32>} : memref<30x1xf32, #tpu.memory_space<vmem>>, vector<30x1xf32>,
      %cst_35 = arith.constant 0.000000e+00 : f32
      %51 = vector.broadcast %cst_35 : f32 to vector<30x1xf32>
      %c0_36 = arith.constant 0 : index
      %c0_37 = arith.constant 0 : index
      %52 = vector.load %arg12[%c0_36, %c0_37] : memref<30x1xf32, #tpu.memory_space<vmem>>, vector<30x1xf32>
      tpu.vector_store %arg12[%c0_36, %c0_37], %51 {strides = array<i32>} : memref<30x1xf32, #tpu.memory_space<vmem>>, vector<30x1xf32>,
      %cst_38 = arith.constant 0.000000e+00 : f32
      %53 = vector.broadcast %cst_38 : f32 to vector<30x1xf32>
      %c0_39 = arith.constant 0 : index
      %c0_40 = arith.constant 0 : index
      %54 = vector.load %arg13[%c0_39, %c0_40] : memref<30x1xf32, #tpu.memory_space<vmem>>, vector<30x1xf32>
      tpu.vector_store %arg13[%c0_39, %c0_40], %53 {strides = array<i32>} : memref<30x1xf32, #tpu.memory_space<vmem>>, vector<30x1xf32>,
    } else {
    }
    %c0 = arith.constant 0 : index
    %c0_1 = arith.constant 0 : index
    %3 = vector.load %arg10[%c0, %c0_1] : memref<30x64xbf16, #tpu.memory_space<vmem>>, vector<30x64xbf16>
    %c0_2 = arith.constant 0 : index
    %c0_3 = arith.constant 0 : index
    %4 = vector.load %arg4[%c0_2, %c0_3] : memref<64x128xbf16, #tpu.memory_space<vmem>>, vector<64x128xbf16>
    %cst = arith.constant dense<0.000000e+00> : vector<30x128xf32>
    %5 = tpu.matmul %3, %4, %cst {dimension_numbers = #tpu.dot_dimension_numbers<[1], [0], [0], [1], [0, 0, 1, 1], [], []>} : vector<30x64xbf16>, vector<64x128xbf16>, vector<30x128xf32> -> vector<30x128xf32>
    %c0_4 = arith.constant 0 : index
    %c0_5 = arith.constant 0 : index
    %6 = vector.load %arg11[%c0_4, %c0_5] : memref<30x1xf32, #tpu.memory_space<vmem>>, vector<30x1xf32>
    %cst_6 = arith.constant dense<0xFF800000> : vector<30xf32>
    %7 = vector.multi_reduction <maximumf>, %5, %cst_6 [1] : vector<30x128xf32> to vector<30xf32>
    %8 = vector.shape_cast %7 : vector<30xf32> to vector<30x1xf32>
    %9 = arith.maximumf %6, %8 : vector<30x1xf32>
    %c0_7 = arith.constant 0 : index
    %c0_8 = arith.constant 0 : index
    %10 = vector.load %arg12[%c0_7, %c0_8] : memref<30x1xf32, #tpu.memory_space<vmem>>, vector<30x1xf32>
    %11 = arith.subf %6, %9 : vector<30x1xf32>
    %12 = math.exp %11 : vector<30x1xf32>
    %13 = arith.mulf %10, %12 : vector<30x1xf32>
    %14 = vector.broadcast %9 : vector<30x1xf32> to vector<30x128xf32>
    %15 = arith.subf %5, %14 : vector<30x128xf32>
    %16 = math.exp %15 : vector<30x128xf32>
    %cst_9 = arith.constant dense<0.000000e+00> : vector<30xf32>
    %17 = vector.multi_reduction <add>, %16, %cst_9 [1] : vector<30x128xf32> to vector<30xf32>
    %18 = vector.shape_cast %17 : vector<30xf32> to vector<30x1xf32>
    %19 = arith.addf %13, %18 : vector<30x1xf32>
    %c0_10 = arith.constant 0 : index
    %c0_11 = arith.constant 0 : index
    %20 = vector.load %arg12[%c0_10, %c0_11] : memref<30x1xf32, #tpu.memory_space<vmem>>, vector<30x1xf32>
    tpu.vector_store %arg12[%c0_10, %c0_11], %19 {strides = array<i32>} : memref<30x1xf32, #tpu.memory_space<vmem>>, vector<30x1xf32>,
    %c0_12 = arith.constant 0 : index
    %c0_13 = arith.constant 0 : index
    %21 = vector.load %arg11[%c0_12, %c0_13] : memref<30x1xf32, #tpu.memory_space<vmem>>, vector<30x1xf32>
    tpu.vector_store %arg11[%c0_12, %c0_13], %9 {strides = array<i32>} : memref<30x1xf32, #tpu.memory_space<vmem>>, vector<30x1xf32>,
    %c0_14 = arith.constant 0 : index
    %c0_15 = arith.constant 0 : index
    %22 = vector.load %arg5[%c0_14, %c0_15] : memref<30x1xi32, #tpu.memory_space<vmem>>, vector<30x1xi32>
    %23 = tpu.iota {dimensions = array<i32: 1>} : vector<30x128xi32>
    %c128_i32 = arith.constant 128 : i32
    %24 = arith.muli %arg0, %c128_i32 : i32
    %25 = vector.broadcast %24 : i32 to vector<30x128xi32>
    %26 = arith.addi %23, %25 : vector<30x128xi32>
    %c0_16 = arith.constant 0 : index
    %c0_17 = arith.constant 0 : index
    %27 = vector.load %arg13[%c0_16, %c0_17] : memref<30x1xf32, #tpu.memory_space<vmem>>, vector<30x1xf32>
    %28 = vector.broadcast %22 : vector<30x1xi32> to vector<30x128xi32>
    %29 = arith.cmpi eq, %26, %28 : vector<30x128xi32>
    %cst_18 = arith.constant 0.000000e+00 : f32
    %30 = vector.broadcast %cst_18 : f32 to vector<30x128xf32>
    %31 = arith.select %29, %5, %30 : vector<30x128xi1>, vector<30x128xf32>
    %cst_19 = arith.constant dense<0.000000e+00> : vector<30xf32>
    %32 = vector.multi_reduction <add>, %31, %cst_19 [1] : vector<30x128xf32> to vector<30xf32>
    %33 = vector.shape_cast %32 : vector<30xf32> to vector<30x1xf32>
    %34 = arith.addf %27, %33 : vector<30x1xf32>
    %c0_20 = arith.constant 0 : index
    %c0_21 = arith.constant 0 : index
    %35 = vector.load %arg13[%c0_20, %c0_21] : memref<30x1xf32, #tpu.memory_space<vmem>>, vector<30x1xf32>
    tpu.vector_store %arg13[%c0_20, %c0_21], %34 {strides = array<i32>} : memref<30x1xf32, #tpu.memory_space<vmem>>, vector<30x1xf32>,
    %c1_i32 = arith.constant 1 : i32
    %36 = arith.cmpi eq, %arg0, %c1_i32 : i32
    %37 = arith.extui %36 : i1 to i32
    %c0_i32_22 = arith.constant 0 : i32
    %38 = arith.cmpi ne, %37, %c0_i32_22 : i32
    scf.if %38 {
      %c0_23 = arith.constant 0 : index
      %c0_24 = arith.constant 0 : index
      %39 = vector.load %arg11[%c0_23, %c0_24] : memref<30x1xf32, #tpu.memory_space<vmem>>, vector<30x1xf32>
      %c0_25 = arith.constant 0 : index
      %c0_26 = arith.constant 0 : index
      %40 = vector.load %arg12[%c0_25, %c0_26] : memref<30x1xf32, #tpu.memory_space<vmem>>, vector<30x1xf32>
      %41 = math.log %40 : vector<30x1xf32>
      %42 = arith.addf %39, %41 : vector<30x1xf32>
      %c0_27 = arith.constant 0 : index
      %c0_28 = arith.constant 0 : index
      %43 = vector.load %arg13[%c0_27, %c0_28] : memref<30x1xf32, #tpu.memory_space<vmem>>, vector<30x1xf32>
      %44 = arith.subf %42, %43 : vector<30x1xf32>
      %c0_29 = arith.constant 0 : index
      %c0_30 = arith.constant 0 : index
      %45 = vector.load %arg6[%c0_29, %c0_30] : memref<30x1xf32, #tpu.memory_space<vmem>>, vector<30x1xf32>
      %c-1_i32 = arith.constant -1 : i32
      %46 = vector.broadcast %c-1_i32 : i32 to vector<30x1xi32>
      %47 = arith.cmpi eq, %22, %46 : vector<30x1xi32>
      %cst_31 = arith.constant 0.000000e+00 : f32
      %cst_32 = arith.constant 1.000000e+00 : f32
      %48 = vector.broadcast %cst_31 : f32 to vector<30x1xf32>
      %49 = vector.broadcast %cst_32 : f32 to vector<30x1xf32>
      %50 = arith.select %47, %48, %49 : vector<30x1xi1>, vector<30x1xf32>
      %51 = arith.mulf %45, %50 : vector<30x1xf32>
      %52 = arith.mulf %44, %51 : vector<30x1xf32>
      %53 = vector.shape_cast %52 : vector<30x1xf32> to vector<1x30x1xf32>
      %cst_33 = arith.constant dense<0.000000e+00> : vector<1xf32>
      %54 = vector.multi_reduction <add>, %53, %cst_33 [1, 2] : vector<1x30x1xf32> to vector<1xf32>
      %55 = vector.shape_cast %54 : vector<1xf32> to vector<1x1x1xf32>
      %56 = vector.extract %55[0, 0, 0] : f32 from vector<1x1x1xf32>
      %57 = vector.broadcast %56 : f32 to vector<1x1xf32>
      %c0_34 = arith.constant 0 : index
      %c0_35 = arith.constant 0 : index
      %58 = vector.load %arg7[%c0_34, %c0_35] : memref<1x1xf32, #tpu.memory_space<vmem>>, vector<1x1xf32>
      tpu.vector_store %arg7[%c0_34, %c0_35], %57 {strides = array<i32>} : memref<1x1xf32, #tpu.memory_space<vmem>>, vector<1x1xf32>,
      %59 = vector.shape_cast %51 : vector<30x1xf32> to vector<1x30x1xf32>
      %cst_36 = arith.constant dense<0.000000e+00> : vector<1xf32>
      %60 = vector.multi_reduction <add>, %59, %cst_36 [1, 2] : vector<1x30x1xf32> to vector<1xf32>
      %61 = vector.shape_cast %60 : vector<1xf32> to vector<1x1x1xf32>
      %62 = vector.extract %61[0, 0, 0] : f32 from vector<1x1x1xf32>
      %63 = vector.broadcast %62 : f32 to vector<1x1xf32>
      %c0_37 = arith.constant 0 : index
      %c0_38 = arith.constant 0 : index
      %64 = vector.load %arg8[%c0_37, %c0_38] : memref<1x1xf32, #tpu.memory_space<vmem>>, vector<1x1xf32>
      tpu.vector_store %arg8[%c0_37, %c0_38], %63 {strides = array<i32>} : memref<1x1xf32, #tpu.memory_space<vmem>>, vector<1x1xf32>,
      %65 = vector.shape_cast %45 : vector<30x1xf32> to vector<1x30x1xf32>
      %cst_39 = arith.constant dense<0.000000e+00> : vector<1xf32>
      %66 = vector.multi_reduction <add>, %65, %cst_39 [1, 2] : vector<1x30x1xf32> to vector<1xf32>
      %67 = vector.shape_cast %66 : vector<1xf32> to vector<1x1x1xf32>
      %68 = vector.extract %67[0, 0, 0] : f32 from vector<1x1x1xf32>
      %69 = vector.broadcast %68 : f32 to vector<1x1xf32>
      %c0_40 = arith.constant 0 : index
      %c0_41 = arith.constant 0 : index
      %70 = vector.load %arg9[%c0_40, %c0_41] : memref<1x1xf32, #tpu.memory_space<vmem>>, vector<1x1xf32>
      tpu.vector_store %arg9[%c0_40, %c0_41], %69 {strides = array<i32>} : memref<1x1xf32, #tpu.memory_space<vmem>>, vector<1x1xf32>,
    } else {
    }
    return
  }
  func.func @transform_0(%arg0: i32) -> (i32, i32) {
    %c0_i32 = arith.constant 0 : i32
    %c0_i32_0 = arith.constant 0 : i32
    %c0_i32_1 = arith.constant 0 : i32
    return %c0_i32, %c0_i32_0 : i32, i32
  }
  func.func @transform_1(%arg0: i32) -> (i32, i32) {
    %c0_i32 = arith.constant 0 : i32
    %c0_i32_0 = arith.constant 0 : i32
    %c0_i32_1 = arith.constant 0 : i32
    return %c0_i32, %c0_i32_0 : i32, i32
  }
  func.func @transform_2(%arg0: i32) -> (i32, i32) {
    %c0_i32 = arith.constant 0 : i32
    %c0_i32_0 = arith.constant 0 : i32
    %c0_i32_1 = arith.constant 0 : i32
    return %c0_i32, %c0_i32_0 : i32, i32
  }
  func.func @transform_3(%arg0: i32) -> (i32, i32) {
    %c0_i32 = arith.constant 0 : i32
    %c0_i32_0 = arith.constant 0 : i32
    return %c0_i32, %arg0 : i32, i32
  }
  func.func @transform_4(%arg0: i32) -> (i32, i32) {
    %c0_i32 = arith.constant 0 : i32
    %c0_i32_0 = arith.constant 0 : i32
    %c0_i32_1 = arith.constant 0 : i32
    return %c0_i32, %c0_i32_0 : i32, i32
  }
  func.func @transform_5(%arg0: i32) -> (i32, i32) {
    %c0_i32 = arith.constant 0 : i32
    %c0_i32_0 = arith.constant 0 : i32
    %c0_i32_1 = arith.constant 0 : i32
    return %c0_i32, %c0_i32_0 : i32, i32
  }
  func.func @transform_6(%arg0: i32) -> (i32, i32) {
    %c0_i32 = arith.constant 0 : i32
    %c0_i32_0 = arith.constant 0 : i32
    %c0_i32_1 = arith.constant 0 : i32
    return %c0_i32, %c0_i32_0 : i32, i32
  }
  func.func @transform_7(%arg0: i32) -> (i32, i32) {
    %c0_i32 = arith.constant 0 : i32
    %c0_i32_0 = arith.constant 0 : i32
    %c0_i32_1 = arith.constant 0 : i32
    return %c0_i32, %c0_i32_0 : i32, i32
  }
  func.func @transform_8(%arg0: i32) -> (i32, i32) {
    %c0_i32 = arith.constant 0 : i32
    %c0_i32_0 = arith.constant 0 : i32
    %c0_i32_1 = arith.constant 0 : i32
    return %c0_i32, %c0_i32_0 : i32, i32
  }
}

</mosaic_0001>

<llo_original>
// kernel: seq2seq_forward.6
$region0: #{seq2seq_forward.6}
  #allocation0 [shape = 'u32[]', space=smem, size = 0x4, offset = 0x4, fixed_abs, tag = 'smem constant byte address 0x4 - core index']
  #allocation1 [shape = 'u32[144,128]{1,0:T(1,128)}', space=vmem, size = 0x12000, scoped, tag = 'internal scratch']
  %s0 = inlined_call_operand.vmem [shape: f32[2,16,64], index: 0, kind: input, shape index: {}]
  %s1 = inlined_call_operand.vmem [shape: bf16[64,128], index: 1, kind: input, shape index: {}]
  %s2 = inlined_call_operand.vmem [shape: f32[1,128], index: 2, kind: input, shape index: {}]
  %s3 = inlined_call_operand.vmem [shape: bf16[128,64], index: 3, kind: input, shape index: {}]
  %s4 = inlined_call_operand.vmem [shape: f32[1,64], index: 4, kind: input, shape index: {}]
  %s5 = inlined_call_operand.vmem [shape: f32[1,64], index: 5, kind: input, shape index: {}]
  %s6 = inlined_call_operand.vmem [shape: f32[1,64], index: 6, kind: input, shape index: {}]
  %s7 = inlined_call_operand.vmem [shape: f32[2,16,64], index: 7, kind: output, shape index: {}]
  %s8 = sld [smem:[#allocation0]]
  $region61: #{seq2seq_forward.6} parent=0
    _
  %s10 = ssub.s32 1, %s8
  %s11 = scalar_select 0, %s10, %s8
  loop: start=0, step=1, limit=4
  $region2: #{seq2seq_forward.6} parent=0 // loop_pre_header
    _
  $region3: #{seq2seq_forward.6} parent=0 // loop_header
    %s13 = sphi 0, %s17
    %p14 = scmp.ge.s32.totalorder %s13, 4
    %s23 = sphi 0, %s25
    %s26 = sphi 0, %s23
    %s27 = sphi 0, %s26
    %s43 = sphi 0, %s27
    %s47 = sphi 0, %s47
    %s49 = sphi 0, %s47
    %s50 = sphi 0, %s49
    %s64 = sphi 0, %s50
    %s68 = sphi 0, %s68
    %s70 = sphi 0, %s68
    %s71 = sphi 0, %s70
    %s85 = sphi 0, %s71
    %s89 = sphi 0, %s89
    %s91 = sphi 0, %s89
    %s92 = sphi 0, %s91
    %s106 = sphi 0, %s92
    %s110 = sphi 0, %s110
    %s112 = sphi 0, %s110
    %s113 = sphi 0, %s112
    %s127 = sphi 0, %s113
    %s131 = sphi 0, %s131
    %s133 = sphi 0, %s131
    %s134 = sphi 0, %s133
    %s148 = sphi 0, %s134
    %s152 = sphi 0, %s152
    %s154 = sphi 0, %s152
    %s155 = sphi 0, %s154
    %s169 = sphi 0, %s155
    %s175 = sphi 0, %s177
    %s178 = sphi 0, %s175
    %s179 = sphi 0, %s178
    %s195 = sphi 0, %s179
  $region4: #{seq2seq_forward.6} parent=0 // loop_header_branch
    %16 = sbr.rel (%p14) target = $region8
  $region5: #{seq2seq_forward.6} parent=0 // loop_body
    %s18 = ssub.s32 %s13, 1
    %s19 = ssub.s32 %s13, 2
    %s20 = sadd.s32 %s13, 1
    %s21 = ssub.s32 %s13, %s20
    %p22 = scmp.eq.s32.totalorder %s21, 0
    %s24 = sadd.s32 %s23, 1
    %s25 = scalar_select %p22, %s23, %s24
    %p28 = pneg %p22
    %p29 = scmp.eq.s32.totalorder %s13, 1
    %p30 = por %p28, %p29
    %p31 = scmp.ne.s32.totalorder %s23, %s26
    %p32 = scmp.eq.s32.totalorder %s13, 0
    %p33 = por %p31, %p32
    %p34 = scmp.ne.s32.totalorder %s23, %s26
    %p35 = scmp.eq.s32.totalorder %s18, 1
    %p36 = por %p34, %p35
    %p37 = scmp.ne.s32.totalorder %s26, %s27
    %p38 = scmp.eq.s32.totalorder %s18, 0
    %p39 = por %p37, %p38
    %p40 = scmp.ne.s32.totalorder %s26, %s27
    %p41 = scmp.eq.s32.totalorder %s19, 1
    %p42 = por %p40, %p41
    %p44 = scmp.ne.s32.totalorder %s27, %s43
    %p45 = scmp.eq.s32.totalorder %s19, 0
    %p46 = por %p44, %p45
    %s48 = sadd.s32 %s47, 1
    %p51 = scmp.eq.s32.totalorder %s13, 1
    %p52 = scmp.ne.s32.totalorder %s47, %s49
    %p53 = scmp.eq.s32.totalorder %s13, 0
    %p54 = por %p52, %p53
    %p55 = scmp.ne.s32.totalorder %s47, %s49
    %p56 = scmp.eq.s32.totalorder %s18, 1
    %p57 = por %p55, %p56
    %p58 = scmp.ne.s32.totalorder %s49, %s50
    %p59 = scmp.eq.s32.totalorder %s18, 0
    %p60 = por %p58, %p59
    %p61 = scmp.ne.s32.totalorder %s49, %s50
    %p62 = scmp.eq.s32.totalorder %s19, 1
    %p63 = por %p61, %p62
    %p65 = scmp.ne.s32.totalorder %s50, %s64
    %p66 = scmp.eq.s32.totalorder %s19, 0
    %p67 = por %p65, %p66
    %s69 = sadd.s32 %s68, 1
    %p72 = scmp.eq.s32.totalorder %s13, 1
    %p73 = scmp.ne.s32.totalorder %s68, %s70
    %p74 = scmp.eq.s32.totalorder %s13, 0
    %p75 = por %p73, %p74
    %p76 = scmp.ne.s32.totalorder %s68, %s70
    %p77 = scmp.eq.s32.totalorder %s18, 1
    %p78 = por %p76, %p77
    %p79 = scmp.ne.s32.totalorder %s70, %s71
    %p80 = scmp.eq.s32.totalorder %s18, 0
    %p81 = por %p79, %p80
    %p82 = scmp.ne.s32.totalorder %s70, %s71
    %p83 = scmp.eq.s32.totalorder %s19, 1
    %p84 = por %p82, %p83
    %p86 = scmp.ne.s32.totalorder %s71, %s85
    %p87 = scmp.eq.s32.totalorder %s19, 0
    %p88 = por %p86, %p87
    %s90 = sadd.s32 %s89, 1
    %p93 = scmp.eq.s32.totalorder %s13, 1
    %p94 = scmp.ne.s32.totalorder %s89, %s91
    %p95 = scmp.eq.s32.totalorder %s13, 0
    %p96 = por %p94, %p95
    %p97 = scmp.ne.s32.totalorder %s89, %s91
    %p98 = scmp.eq.s32.totalorder %s18, 1
    %p99 = por %p97, %p98
    %p100 = scmp.ne.s32.totalorder %s91, %s92
    %p101 = scmp.eq.s32.totalorder %s18, 0
    %p102 = por %p100, %p101
    %p103 = scmp.ne.s32.totalorder %s91, %s92
    %p104 = scmp.eq.s32.totalorder %s19, 1
    %p105 = por %p103, %p104
    %p107 = scmp.ne.s32.totalorder %s92, %s106
    %p108 = scmp.eq.s32.totalorder %s19, 0
    %p109 = por %p107, %p108
    %s111 = sadd.s32 %s110, 1
    %p114 = scmp.eq.s32.totalorder %s13, 1
    %p115 = scmp.ne.s32.totalorder %s110, %s112
    %p116 = scmp.eq.s32.totalorder %s13, 0
    %p117 = por %p115, %p116
    %p118 = scmp.ne.s32.totalorder %s110, %s112
    %p119 = scmp.eq.s32.totalorder %s18, 1
    %p120 = por %p118, %p119
    %p121 = scmp.ne.s32.totalorder %s112, %s113
    %p122 = scmp.eq.s32.totalorder %s18, 0
    %p123 = por %p121, %p122
    %p124 = scmp.ne.s32.totalorder %s112, %s113
    %p125 = scmp.eq.s32.totalorder %s19, 1
    %p126 = por %p124, %p125
    %p128 = scmp.ne.s32.totalorder %s113, %s127
    %p129 = scmp.eq.s32.totalorder %s19, 0
    %p130 = por %p128, %p129
    %s132 = sadd.s32 %s131, 1
    %p135 = scmp.eq.s32.totalorder %s13, 1
    %p136 = scmp.ne.s32.totalorder %s131, %s133
    %p137 = scmp.eq.s32.totalorder %s13, 0
    %p138 = por %p136, %p137
    %p139 = scmp.ne.s32.totalorder %s131, %s133
    %p140 = scmp.eq.s32.totalorder %s18, 1
    %p141 = por %p139, %p140
    %p142 = scmp.ne.s32.totalorder %s133, %s134
    %p143 = scmp.eq.s32.totalorder %s18, 0
    %p144 = por %p142, %p143
    %p145 = scmp.ne.s32.totalorder %s133, %s134
    %p146 = scmp.eq.s32.totalorder %s19, 1
    %p147 = por %p145, %p146
    %p149 = scmp.ne.s32.totalorder %s134, %s148
    %p150 = scmp.eq.s32.totalorder %s19, 0
    %p151 = por %p149, %p150
    %s153 = sadd.s32 %s152, 1
    %p156 = scmp.eq.s32.totalorder %s13, 1
    %p157 = scmp.ne.s32.totalorder %s152, %s154
    %p158 = scmp.eq.s32.totalorder %s13, 0
    %p159 = por %p157, %p158
    %p160 = scmp.ne.s32.totalorder %s152, %s154
    %p161 = scmp.eq.s32.totalorder %s18, 1
    %p162 = por %p160, %p161
    %p163 = scmp.ne.s32.totalorder %s154, %s155
    %p164 = scmp.eq.s32.totalorder %s18, 0
    %p165 = por %p163, %p164
    %p166 = scmp.ne.s32.totalorder %s154, %s155
    %p167 = scmp.eq.s32.totalorder %s19, 1
    %p168 = por %p166, %p167
    %p170 = scmp.ne.s32.totalorder %s155, %s169
    %p171 = scmp.eq.s32.totalorder %s19, 0
    %p172 = por %p170, %p171
    %s173 = ssub.s32 %s13, %s20
    %p174 = scmp.eq.s32.totalorder %s173, 0
    %s176 = sadd.s32 %s175, 1
    %s177 = scalar_select %p174, %s175, %s176
    %p180 = pneg %p174
    %p181 = scmp.eq.s32.totalorder %s13, 1
    %p182 = por %p180, %p181
    %p183 = scmp.ne.s32.totalorder %s175, %s178
    %p184 = scmp.eq.s32.totalorder %s13, 0
    %p185 = por %p183, %p184
    %p186 = scmp.ne.s32.totalorder %s175, %s178
    %p187 = scmp.eq.s32.totalorder %s18, 1
    %p188 = por %p186, %p187
    %p189 = scmp.ne.s32.totalorder %s178, %s179
    %p190 = scmp.eq.s32.totalorder %s18, 0
    %p191 = por %p189, %p190
    %p192 = scmp.ne.s32.totalorder %s178, %s179
    %p193 = scmp.eq.s32.totalorder %s19, 1
    %p194 = por %p192, %p193
    %p196 = scmp.ne.s32.totalorder %s179, %s195
    %p197 = scmp.eq.s32.totalorder %s19, 0
    %p198 = por %p196, %p197
    %p199 = scmp.le.s32.totalorder 1, %s13
    %p200 = scmp.lt.s32.totalorder %s13, 3
    %p201 = pnand %p199, %p200
    %p202 = pneg %p201
    // Predicated region
    $region9: #{seq2seq_forward.6} parent=5 // pred_check
      _
    $region10: #{seq2seq_forward.6} parent=5 // pred_check_branch
      %204 = sbr.rel (%p201) target = $region12
    $region11: #{seq2seq_forward.6} parent=5 // pred_region
      %s205 = ssub.s32 %s13, 1
      // Predicated region
      $region13: #{seq2seq_forward.6} parent=11 // pred_check
        %p206 = pneg %p60
      $region14: #{seq2seq_forward.6} parent=11 // pred_check_branch
        %208 = sbr.rel (%p206) target = $region16
      $region15: #{seq2seq_forward.6} parent=11 // pred_region
        _
      $region16: #{seq2seq_forward.6} parent=11 // pred_fallthru
        _
      // Predicated region
      $region17: #{seq2seq_forward.6} parent=11 // pred_check
        %p209 = pneg %p81
      $region18: #{seq2seq_forward.6} parent=11 // pred_check_branch
        %211 = sbr.rel (%p209) target = $region20
      $region19: #{seq2seq_forward.6} parent=11 // pred_region
        _
      $region20: #{seq2seq_forward.6} parent=11 // pred_fallthru
        _
      // Predicated region
      $region21: #{seq2seq_forward.6} parent=11 // pred_check
        %p212 = pneg %p102
      $region22: #{seq2seq_forward.6} parent=11 // pred_check_branch
        %214 = sbr.rel (%p212) target = $region24
      $region23: #{seq2seq_forward.6} parent=11 // pred_region
        _
      $region24: #{seq2seq_forward.6} parent=11 // pred_fallthru
        _
      // Predicated region
      $region25: #{seq2seq_forward.6} parent=11 // pred_check
        %p215 = pneg %p123
      $region26: #{seq2seq_forward.6} parent=11 // pred_check_branch
        %217 = sbr.rel (%p215) target = $region28
      $region27: #{seq2seq_forward.6} parent=11 // pred_region
        _
      $region28: #{seq2seq_forward.6} parent=11 // pred_fallthru
        _
      // Predicated region
      $region29: #{seq2seq_forward.6} parent=11 // pred_check
        %p218 = pneg %p144
      $region30: #{seq2seq_forward.6} parent=11 // pred_check_branch
        %220 = sbr.rel (%p218) target = $region32
      $region31: #{seq2seq_forward.6} parent=11 // pred_region
        _
      $region32: #{seq2seq_forward.6} parent=11 // pred_fallthru
        _
      // Predicated region
      $region33: #{seq2seq_forward.6} parent=11 // pred_check
        %p221 = pneg %p165
      $region34: #{seq2seq_forward.6} parent=11 // pred_check_branch
        %223 = sbr.rel (%p221) target = $region36
      $region35: #{seq2seq_forward.6} parent=11 // pred_region
        _
      $region36: #{seq2seq_forward.6} parent=11 // pred_fallthru
        _
    $region12: #{seq2seq_forward.6} parent=5 // pred_fallthru
      _
    %p224 = scmp.lt.s32.totalorder %s13, 2
    // Predicated region
    $region37: #{seq2seq_forward.6} parent=5 // pred_check
      %p225 = pneg %p224
    $region38: #{seq2seq_forward.6} parent=5 // pred_check_branch
      %227 = sbr.rel (%p225) target = $region40
    $region39: #{seq2seq_forward.6} parent=5 // pred_region
      // Predicated region
      $region41: #{seq2seq_forward.6} parent=39 // pred_check
        %p228 = pneg %p33
      $region42: #{seq2seq_forward.6} parent=39 // pred_check_branch
        %230 = sbr.rel (%p228) target = $region44
      $region43: #{seq2seq_forward.6} parent=39 // pred_region
        %p231 = scmp.lt.s32.totalorder %s13, 1
        %s232 = scalar_select %p231, %s13, 1
        %s233 = smul.addr %s232, 2
        %s234 = smul.addr %s233, 8
        %s235 = scalar_lea.vmem %s0, %s234
      $region44: #{seq2seq_forward.6} parent=39 // pred_fallthru
        _
    $region40: #{seq2seq_forward.6} parent=5 // pred_fallthru
      _
    %p236 = scmp.le.s32.totalorder 1, %s13
    %p237 = scmp.lt.s32.totalorder %s13, 3
    %p238 = pnand %p236, %p237
    %p239 = pneg %p238
    // Predicated region
    $region45: #{seq2seq_forward.6} parent=5 // pred_check
      _
    $region46: #{seq2seq_forward.6} parent=5 // pred_check_branch
      %241 = sbr.rel (%p238) target = $region48
    $region47: #{seq2seq_forward.6} parent=5 // pred_region
      %s242 = ssub.s32 %s13, 1
      %p243 = scmp.lt.s32.totalorder %s18, 1
      %s244 = scalar_select %p243, %s18, 1
      %s245 = smul.addr %s244, 2
      %s246 = smul.addr %s245, 8
      %s247 = scalar_lea.vmem %s0, %s246
      %p248 = pneg %p39
      %p249 = pneg %p36
      %p250 = pneg %p60
      %p251 = pneg %p57
      %p252 = pneg %p81
      %p253 = pneg %p78
      %p254 = pneg %p102
      %p255 = pneg %p99
      %p256 = pneg %p123
      %p257 = pneg %p120
      %p258 = pneg %p144
      %p259 = pneg %p141
      %p260 = pneg %p165
      %p261 = pneg %p162
      %p262 = pneg %p191
      %p263 = pneg %p188
      %p264 = scmp.lt.s32.totalorder %s18, 1
      %s265 = scalar_select %p264, %s18, 1
      %s266 = smul.addr %s265, 2
      %s267 = smul.addr %s266, 8
      %s268 = scalar_lea.vmem %s7, %s267
      %p269 = scmp.lt.s32.totalorder %s18, 1
      %s270 = scalar_select %p269, %s18, 1
      %s271 = smul.addr %s270, 2
      %s272 = smul.addr %s271, 8
      %s273 = scalar_lea.vmem %s0, %s272
      %p274 = scmp.lt.s32.totalorder %s18, 1
      %s275 = scalar_select %p274, %s18, 1
      %s276 = smul.addr %s275, 2
      %s277 = smul.addr %s276, 8
      %s278 = scalar_lea.vmem %s7, %s277
      %v280 = vld [vmem:[%s273] sm:$0xff]
      %v281 = vld [vmem:[%s273 + $0x8] sm:$0xff]
      %v282 = vpack.c.bf16 %v281, %v280
      %v283 = vld [vmem:[%s1] sm:$0xf]
      %v284 = vld [vmem:[%s1 + $0x4] sm:$0xf]
      %v285 = vld [vmem:[%s1 + $0x8] sm:$0xf]
      %v286 = vld [vmem:[%s1 + $0xc] sm:$0xf]
      %v287 = vld [vmem:[%s1 + $0x10] sm:$0xf]
      %v288 = vld [vmem:[%s1 + $0x14] sm:$0xf]
      %v289 = vld [vmem:[%s1 + $0x18] sm:$0xf]
      %v290 = vld [vmem:[%s1 + $0x1c] sm:$0xf]
      %v291 = vld [vmem:[%s2] sm:$0x1]
      %v293 = vlaneseq
      %v294 = vshrl.u32 %v293, 7
      %v295 = vsub.s32 0, %v294
      %v296 = vrot.slane %v291, %v295
      %v306 = vunpack.c.l.b16 %v283
      %v307 = vunpack.c.l.b16 %v284
      %v308 = vunpack.c.l.b16 %v285
      %v309 = vunpack.c.l.b16 %v286
      %v310 = vunpack.c.l.b16 %v287
      %v311 = vunpack.c.l.b16 %v288
      %v312 = vunpack.c.l.b16 %v289
      %v313 = vunpack.c.l.b16 %v290
      %v314 = vpack.c.b16 %v307, %v306
      %v315 = vpack.c.b16 %v309, %v308
      %v316 = vpack.c.b16 %v311, %v310
      %v317 = vpack.c.b16 %v313, %v312
      %vm322 = vcmask 523264
      %v324 = vsel %vm322, %v282, 0
      %326 = vmatprep.subr.bf16.mxu0 0
      %327 = vmatpush1.bf16.msra.mxu0 %v314
      %328 = vmatprep.subr.bf16.mxu0 0
      %329 = vmatpush1.bf16.msra.mxu0 %v315
      %330 = vmatprep.subr.bf16.mxu0 0
      %331 = vmatpush1.bf16.msra.mxu0 %v316
      %332 = vmatprep.subr.bf16.mxu0 0
      %333 = vmatpush1.bf16.msra.mxu0 %v317
      %334 = vmatprep.subr.bf16.mxu0 0
      %335 = vmatpush1.bf16.msra.mxu0 0
      %336 = vmatprep.subr.bf16.mxu0 0
      %337 = vmatpush1.bf16.msra.mxu0 0
      %338 = vmatprep.subr.bf16.mxu0 0
      %339 = vmatpush1.bf16.msra.mxu0 0
      %340 = vmatprep.subr.bf16.mxu0 0
      %341 = vmatpush1.bf16.msra.mxu0 0
      %342 = vmatprep.subr.bf16.mxu0 0
      %343 = vmatpush1.bf16.msra.mxu0 0
      %344 = vmatprep.subr.bf16.mxu0 0
      %345 = vmatpush1.bf16.msra.mxu0 0
      %346 = vmatprep.subr.bf16.mxu0 0
      %347 = vmatpush1.bf16.msra.mxu0 0
      %348 = vmatprep.subr.bf16.mxu0 0
      %349 = vmatpush1.bf16.msra.mxu0 0
      %350 = vmatprep.subr.bf16.mxu0 0
      %351 = vmatpush1.bf16.msra.mxu0 0
      %352 = vmatprep.subr.bf16.mxu0 0
      %353 = vmatpush1.bf16.msra.mxu0 0
      %354 = vmatprep.subr.bf16.mxu0 0
      %355 = vmatpush1.bf16.msra.mxu0 0
      %356 = vmatprep.subr.bf16.mxu0 0
      %357 = vmatpush1.bf16.msra.mxu0 0
      %358 = vmatprep.mubr.bf16.mxu0 0
      %359 = vmatmul.mubr.bf16.gmra.mrb[0].mxu0 %v324
      %v360 = vpop.f32.mrb[0].mxu0
      %v361 = vadd.f32 %v296, %v360
      %v362 = vpop.f32.mrb[0].mxu0
      %v363 = vpop.f32.mrb[0].mxu0
      %v364 = vadd.f32 %v296, %v363
      %v365 = vpop.f32.mrb[0].mxu0
      %366 = vdwg.mxu0
      %v367 = vmax.f32 %v361, 0.0
      %v368 = vmax.f32 %v364, 0.0
      %v369 = vpack.c.bf16 %v368, %v367
      %v370 = vld [vmem:[%s3] sm:$0xf]
      %v371 = vld [vmem:[%s3 + $0x4] sm:$0xf]
      %v372 = vld [vmem:[%s3 + $0x8] sm:$0xf]
      %v373 = vld [vmem:[%s3 + $0xc] sm:$0xf]
      %v374 = vld [vmem:[%s3 + $0x10] sm:$0xf]
      %v375 = vld [vmem:[%s3 + $0x14] sm:$0xf]
      %v376 = vld [vmem:[%s3 + $0x18] sm:$0xf]
      %v377 = vld [vmem:[%s3 + $0x1c] sm:$0xf]
      %v378 = vld [vmem:[%s3 + $0x20] sm:$0xf]
      %v379 = vld [vmem:[%s3 + $0x24] sm:$0xf]
      %v380 = vld [vmem:[%s3 + $0x28] sm:$0xf]
      %v381 = vld [vmem:[%s3 + $0x2c] sm:$0xf]
      %v382 = vld [vmem:[%s3 + $0x30] sm:$0xf]
      %v383 = vld [vmem:[%s3 + $0x34] sm:$0xf]
      %v384 = vld [vmem:[%s3 + $0x38] sm:$0xf]
      %v385 = vld [vmem:[%s3 + $0x3c] sm:$0xf]
      %v386 = vld [vmem:[%s4] sm:$0x1]
      %v388 = vlaneseq
      %v389 = vshrl.u32 %v388, 7
      %v390 = vsub.s32 0, %v389
      %v391 = vrot.slane %v386, %v390
      %v409 = vunpack.c.l.b16 %v370
      %v410 = vunpack.c.l.b16 %v371
      %v411 = vunpack.c.l.b16 %v372
      %v412 = vunpack.c.l.b16 %v373
      %v413 = vunpack.c.l.b16 %v374
      %v414 = vunpack.c.l.b16 %v375
      %v415 = vunpack.c.l.b16 %v376
      %v416 = vunpack.c.l.b16 %v377
      %v417 = vunpack.c.l.b16 %v378
      %v418 = vunpack.c.l.b16 %v379
      %v419 = vunpack.c.l.b16 %v380
      %v420 = vunpack.c.l.b16 %v381
      %v421 = vunpack.c.l.b16 %v382
      %v422 = vunpack.c.l.b16 %v383
      %v423 = vunpack.c.l.b16 %v384
      %v424 = vunpack.c.l.b16 %v385
      %v425 = vpack.c.b16 %v410, %v409
      %v426 = vpack.c.b16 %v412, %v411
      %v427 = vpack.c.b16 %v414, %v413
      %v428 = vpack.c.b16 %v416, %v415
      %v429 = vpack.c.b16 %v418, %v417
      %v430 = vpack.c.b16 %v420, %v419
      %v431 = vpack.c.b16 %v422, %v421
      %v432 = vpack.c.b16 %v424, %v423
      %441 = vmatprep.subr.bf16.mxu0 0
      %442 = vmatpush1.bf16.msra.mxu0 %v425
      %443 = vmatprep.subr.bf16.mxu0 0
      %444 = vmatpush1.bf16.msra.mxu0 %v426
      %445 = vmatprep.subr.bf16.mxu0 0
      %446 = vmatpush1.bf16.msra.mxu0 %v427
      %447 = vmatprep.subr.bf16.mxu0 0
      %448 = vmatpush1.bf16.msra.mxu0 %v428
      %449 = vmatprep.subr.bf16.mxu0 0
      %450 = vmatpush1.bf16.msra.mxu0 %v429
      %451 = vmatprep.subr.bf16.mxu0 0
      %452 = vmatpush1.bf16.msra.mxu0 %v430
      %453 = vmatprep.subr.bf16.mxu0 0
      %454 = vmatpush1.bf16.msra.mxu0 %v431
      %455 = vmatprep.subr.bf16.mxu0 0
      %456 = vmatpush1.bf16.msra.mxu0 %v432
      %457 = vmatprep.subr.bf16.mxu0 0
      %458 = vmatpush1.bf16.msra.mxu0 0
      %459 = vmatprep.subr.bf16.mxu0 0
      %460 = vmatpush1.bf16.msra.mxu0 0
      %461 = vmatprep.subr.bf16.mxu0 0
      %462 = vmatpush1.bf16.msra.mxu0 0
      %463 = vmatprep.subr.bf16.mxu0 0
      %464 = vmatpush1.bf16.msra.mxu0 0
      %465 = vmatprep.subr.bf16.mxu0 0
      %466 = vmatpush1.bf16.msra.mxu0 0
      %467 = vmatprep.subr.bf16.mxu0 0
      %468 = vmatpush1.bf16.msra.mxu0 0
      %469 = vmatprep.subr.bf16.mxu0 0
      %470 = vmatpush1.bf16.msra.mxu0 0
      %471 = vmatprep.subr.bf16.mxu0 0
      %472 = vmatpush1.bf16.msra.mxu0 0
      %473 = vmatprep.mubr.bf16.mxu0 0
      %474 = vmatmul.mubr.bf16.gmra.mrb[0].mxu0 %v369
      %v475 = vpop.f32.mrb[0].mxu0
      %v476 = vadd.f32 %v391, %v475
      %v477 = vpop.f32.mrb[0].mxu0
      %v478 = vpop.f32.mrb[0].mxu0
      %v479 = vadd.f32 %v391, %v478
      %v480 = vpop.f32.mrb[0].mxu0
      %481 = vdwg.mxu0
      %v482 = vadd.f32 %v280, %v476
      %v483 = vadd.f32 %v281, %v479
      %v484 = vsel %vm322, %v482, 0.0
      %485 = vadd.xlane.f32.xlu0 %v484
      %v486 = vpop.xlane.xlu0 %485
      %v487 = vsel %vm322, %v483, 0.0
      %488 = vadd.xlane.f32.xlu0 %v487
      %v489 = vpop.xlane.xlu0 %488
      %v490 = vrcp.pop 64.0
      %v491 = vmul.f32 %v486, %v490
      %v492 = vmul.f32 %v489, %v490
      %v493 = vsub.f32 %v482, %v491
      %v494 = vsub.f32 %v483, %v492
      %v495 = vmul.f32 %v493, %v493
      %v496 = vmul.f32 %v494, %v494
      %v497 = vsel %vm322, %v495, 0.0
      %498 = vadd.xlane.f32.xlu0 %v497
      %v499 = vpop.xlane.xlu0 %498
      %v500 = vsel %vm322, %v496, 0.0
      %501 = vadd.xlane.f32.xlu0 %v500
      %v502 = vpop.xlane.xlu0 %501
      %v503 = vmul.f32 %v499, %v490
      %v504 = vmul.f32 %v502, %v490
      %v505 = vadd.f32 %v503, 1e-05
      %v506 = vadd.f32 %v504, 1e-05
      %v507 = vrsqrt.pop %v505
      %v508 = vrsqrt.pop %v506
      %v509 = vmul.f32 %v493, %v507
      %v510 = vmul.f32 %v494, %v508
      %v511 = vld [vmem:[%s5] sm:$0x1]
      %v513 = vlaneseq
      %v514 = vshrl.u32 %v513, 7
      %v515 = vsub.s32 0, %v514
      %v516 = vrot.slane %v511, %v515
      %v518 = vmul.f32 %v509, %v516
      %v519 = vmul.f32 %v510, %v516
      %v520 = vld [vmem:[%s6] sm:$0x1]
      %v522 = vlaneseq
      %v523 = vshrl.u32 %v522, 7
      %v524 = vsub.s32 0, %v523
      %v525 = vrot.slane %v520, %v524
      %v527 = vadd.f32 %v518, %v525
      %v528 = vadd.f32 %v519, %v525
      %529 = vst.msk [vmem:[%s278] sm:$0xff] %vm322, %v527
      %530 = vst.msk [vmem:[%s278 + $0x8] sm:$0xff] %vm322, %v528
      %p531 = scmp.lt.s32.totalorder %s18, 1
      %s532 = scalar_select %p531, %s18, 1
      %s533 = smul.addr %s532, 2
      %s534 = smul.addr %s533, 8
      %s535 = scalar_lea.vmem %s7, %s534
      // Predicated region
      $region49: #{seq2seq_forward.6} parent=47 // pred_check
        %p536 = pneg %p188
      $region50: #{seq2seq_forward.6} parent=47 // pred_check_branch
        %538 = sbr.rel (%p536) target = $region52
      $region51: #{seq2seq_forward.6} parent=47 // pred_region
        _
      $region52: #{seq2seq_forward.6} parent=47 // pred_fallthru
        _
    $region48: #{seq2seq_forward.6} parent=5 // pred_fallthru
      _
    %p539 = scmp.le.s32.totalorder 2, %s13
    // Predicated region
    $region53: #{seq2seq_forward.6} parent=5 // pred_check
      %p540 = pneg %p539
    $region54: #{seq2seq_forward.6} parent=5 // pred_check_branch
      %542 = sbr.rel (%p540) target = $region56
    $region55: #{seq2seq_forward.6} parent=5 // pred_region
      %s543 = ssub.s32 %s13, 2
      // Predicated region
      $region57: #{seq2seq_forward.6} parent=55 // pred_check
        %p544 = pneg %p194
      $region58: #{seq2seq_forward.6} parent=55 // pred_check_branch
        %546 = sbr.rel (%p544) target = $region60
      $region59: #{seq2seq_forward.6} parent=55 // pred_region
        %p547 = scmp.lt.s32.totalorder %s19, 1
        %s548 = scalar_select %p547, %s19, 1
        %s549 = smul.addr %s548, 2
        %s550 = smul.addr %s549, 8
        %s551 = scalar_lea.vmem %s7, %s550
      $region60: #{seq2seq_forward.6} parent=55 // pred_fallthru
        _
    $region56: #{seq2seq_forward.6} parent=5 // pred_fallthru
      _
  $region6: #{seq2seq_forward.6} parent=0 // loop_footer
    %s17 = sadd.s32 1, %s13
  $region7: #{seq2seq_forward.6} parent=0 // loop_footer_branch
    %12 = sbr.rel target = $region3
  $region8: #{seq2seq_forward.6} parent=0 // loop_exit
    _

// kernel: seq2seq_forward.4
$region0: #{seq2seq_forward.4}
  #allocation0 [shape = 'u32[]', space=smem, size = 0x4, offset = 0x4, fixed_abs, tag = 'smem constant byte address 0x4 - core index']
  #allocation1 [shape = 'u32[144,128]{1,0:T(1,128)}', space=vmem, size = 0x12000, scoped, tag = 'internal scratch']
  %s0 = inlined_call_operand.vmem [shape: f32[2,16,64], index: 0, kind: input, shape index: {}, may-alias: {0,1}]
  %s1 = inlined_call_operand.vmem [shape: f32[2,16,64], index: 1, kind: input, shape index: {}, may-alias: {0,1}]
  %s2 = inlined_call_operand.vmem [shape: f32[2,1,16], index: 2, kind: input, shape index: {}]
  %s3 = inlined_call_operand.vmem [shape: bf16[64,64], index: 3, kind: input, shape index: {}]
  %s4 = inlined_call_operand.vmem [shape: f32[1,64], index: 4, kind: input, shape index: {}]
  %s5 = inlined_call_operand.vmem [shape: bf16[64,128], index: 5, kind: input, shape index: {}]
  %s6 = inlined_call_operand.vmem [shape: f32[1,128], index: 6, kind: input, shape index: {}]
  %s7 = inlined_call_operand.vmem [shape: bf16[64,64], index: 7, kind: input, shape index: {}]
  %s8 = inlined_call_operand.vmem [shape: f32[1,64], index: 8, kind: input, shape index: {}]
  %s9 = inlined_call_operand.vmem [shape: f32[1,64], index: 9, kind: input, shape index: {}]
  %s10 = inlined_call_operand.vmem [shape: f32[1,64], index: 10, kind: input, shape index: {}]
  %s11 = inlined_call_operand.vmem [shape: f32[2,16,64], index: 11, kind: output, shape index: {}]
  %s12 = sld [smem:[#allocation0]]
  $region77: #{seq2seq_forward.4} parent=0
    _
  %s14 = ssub.s32 1, %s12
  %s15 = scalar_select 0, %s14, %s12
  loop: start=0, step=1, limit=4
  $region2: #{seq2seq_forward.4} parent=0 // loop_pre_header
    _
  $region3: #{seq2seq_forward.4} parent=0 // loop_header
    %s17 = sphi 0, %s21
    %p18 = scmp.ge.s32.totalorder %s17, 4
    %s27 = sphi 0, %s29
    %s30 = sphi 0, %s27
    %s31 = sphi 0, %s30
    %s47 = sphi 0, %s31
    %s53 = sphi 0, %s55
    %s56 = sphi 0, %s53
    %s57 = sphi 0, %s56
    %s73 = sphi 0, %s57
    %s79 = sphi 0, %s81
    %s82 = sphi 0, %s79
    %s83 = sphi 0, %s82
    %s99 = sphi 0, %s83
    %s103 = sphi 0, %s103
    %s105 = sphi 0, %s103
    %s106 = sphi 0, %s105
    %s120 = sphi 0, %s106
    %s124 = sphi 0, %s124
    %s126 = sphi 0, %s124
    %s127 = sphi 0, %s126
    %s141 = sphi 0, %s127
    %s145 = sphi 0, %s145
    %s147 = sphi 0, %s145
    %s148 = sphi 0, %s147
    %s162 = sphi 0, %s148
    %s166 = sphi 0, %s166
    %s168 = sphi 0, %s166
    %s169 = sphi 0, %s168
    %s183 = sphi 0, %s169
    %s187 = sphi 0, %s187
    %s189 = sphi 0, %s187
    %s190 = sphi 0, %s189
    %s204 = sphi 0, %s190
    %s208 = sphi 0, %s208
    %s210 = sphi 0, %s208
    %s211 = sphi 0, %s210
    %s225 = sphi 0, %s211
    %s229 = sphi 0, %s229
    %s231 = sphi 0, %s229
    %s232 = sphi 0, %s231
    %s246 = sphi 0, %s232
    %s250 = sphi 0, %s250
    %s252 = sphi 0, %s250
    %s253 = sphi 0, %s252
    %s267 = sphi 0, %s253
    %s273 = sphi 0, %s275
    %s276 = sphi 0, %s273
    %s277 = sphi 0, %s276
    %s293 = sphi 0, %s277
  $region4: #{seq2seq_forward.4} parent=0 // loop_header_branch
    %20 = sbr.rel (%p18) target = $region8
  $region5: #{seq2seq_forward.4} parent=0 // loop_body
    %s22 = ssub.s32 %s17, 1
    %s23 = ssub.s32 %s17, 2
    %s24 = sadd.s32 %s17, 1
    %s25 = ssub.s32 %s17, %s24
    %p26 = scmp.eq.s32.totalorder %s25, 0
    %s28 = sadd.s32 %s27, 1
    %s29 = scalar_select %p26, %s27, %s28
    %p32 = pneg %p26
    %p33 = scmp.eq.s32.totalorder %s17, 1
    %p34 = por %p32, %p33
    %p35 = scmp.ne.s32.totalorder %s27, %s30
    %p36 = scmp.eq.s32.totalorder %s17, 0
    %p37 = por %p35, %p36
    %p38 = scmp.ne.s32.totalorder %s27, %s30
    %p39 = scmp.eq.s32.totalorder %s22, 1
    %p40 = por %p38, %p39
    %p41 = scmp.ne.s32.totalorder %s30, %s31
    %p42 = scmp.eq.s32.totalorder %s22, 0
    %p43 = por %p41, %p42
    %p44 = scmp.ne.s32.totalorder %s30, %s31
    %p45 = scmp.eq.s32.totalorder %s23, 1
    %p46 = por %p44, %p45
    %p48 = scmp.ne.s32.totalorder %s31, %s47
    %p49 = scmp.eq.s32.totalorder %s23, 0
    %p50 = por %p48, %p49
    %s51 = ssub.s32 %s17, %s24
    %p52 = scmp.eq.s32.totalorder %s51, 0
    %s54 = sadd.s32 %s53, 1
    %s55 = scalar_select %p52, %s53, %s54
    %p58 = pneg %p52
    %p59 = scmp.eq.s32.totalorder %s17, 1
    %p60 = por %p58, %p59
    %p61 = scmp.ne.s32.totalorder %s53, %s56
    %p62 = scmp.eq.s32.totalorder %s17, 0
    %p63 = por %p61, %p62
    %p64 = scmp.ne.s32.totalorder %s53, %s56
    %p65 = scmp.eq.s32.totalorder %s22, 1
    %p66 = por %p64, %p65
    %p67 = scmp.ne.s32.totalorder %s56, %s57
    %p68 = scmp.eq.s32.totalorder %s22, 0
    %p69 = por %p67, %p68
    %p70 = scmp.ne.s32.totalorder %s56, %s57
    %p71 = scmp.eq.s32.totalorder %s23, 1
    %p72 = por %p70, %p71
    %p74 = scmp.ne.s32.totalorder %s57, %s73
    %p75 = scmp.eq.s32.totalorder %s23, 0
    %p76 = por %p74, %p75
    %s77 = ssub.s32 %s17, %s24
    %p78 = scmp.eq.s32.totalorder %s77, 0
    %s80 = sadd.s32 %s79, 1
    %s81 = scalar_select %p78, %s79, %s80
    %p84 = pneg %p78
    %p85 = scmp.eq.s32.totalorder %s17, 1
    %p86 = por %p84, %p85
    %p87 = scmp.ne.s32.totalorder %s79, %s82
    %p88 = scmp.eq.s32.totalorder %s17, 0
    %p89 = por %p87, %p88
    %p90 = scmp.ne.s32.totalorder %s79, %s82
    %p91 = scmp.eq.s32.totalorder %s22, 1
    %p92 = por %p90, %p91
    %p93 = scmp.ne.s32.totalorder %s82, %s83
    %p94 = scmp.eq.s32.totalorder %s22, 0
    %p95 = por %p93, %p94
    %p96 = scmp.ne.s32.totalorder %s82, %s83
    %p97 = scmp.eq.s32.totalorder %s23, 1
    %p98 = por %p96, %p97
    %p100 = scmp.ne.s32.totalorder %s83, %s99
    %p101 = scmp.eq.s32.totalorder %s23, 0
    %p102 = por %p100, %p101
    %s104 = sadd.s32 %s103, 1
    %p107 = scmp.eq.s32.totalorder %s17, 1
    %p108 = scmp.ne.s32.totalorder %s103, %s105
    %p109 = scmp.eq.s32.totalorder %s17, 0
    %p110 = por %p108, %p109
    %p111 = scmp.ne.s32.totalorder %s103, %s105
    %p112 = scmp.eq.s32.totalorder %s22, 1
    %p113 = por %p111, %p112
    %p114 = scmp.ne.s32.totalorder %s105, %s106
    %p115 = scmp.eq.s32.totalorder %s22, 0
    %p116 = por %p114, %p115
    %p117 = scmp.ne.s32.totalorder %s105, %s106
    %p118 = scmp.eq.s32.totalorder %s23, 1
    %p119 = por %p117, %p118
    %p121 = scmp.ne.s32.totalorder %s106, %s120
    %p122 = scmp.eq.s32.totalorder %s23, 0
    %p123 = por %p121, %p122
    %s125 = sadd.s32 %s124, 1
    %p128 = scmp.eq.s32.totalorder %s17, 1
    %p129 = scmp.ne.s32.totalorder %s124, %s126
    %p130 = scmp.eq.s32.totalorder %s17, 0
    %p131 = por %p129, %p130
    %p132 = scmp.ne.s32.totalorder %s124, %s126
    %p133 = scmp.eq.s32.totalorder %s22, 1
    %p134 = por %p132, %p133
    %p135 = scmp.ne.s32.totalorder %s126, %s127
    %p136 = scmp.eq.s32.totalorder %s22, 0
    %p137 = por %p135, %p136
    %p138 = scmp.ne.s32.totalorder %s126, %s127
    %p139 = scmp.eq.s32.totalorder %s23, 1
    %p140 = por %p138, %p139
    %p142 = scmp.ne.s32.totalorder %s127, %s141
    %p143 = scmp.eq.s32.totalorder %s23, 0
    %p144 = por %p142, %p143
    %s146 = sadd.s32 %s145, 1
    %p149 = scmp.eq.s32.totalorder %s17, 1
    %p150 = scmp.ne.s32.totalorder %s145, %s147
    %p151 = scmp.eq.s32.totalorder %s17, 0
    %p152 = por %p150, %p151
    %p153 = scmp.ne.s32.totalorder %s145, %s147
    %p154 = scmp.eq.s32.totalorder %s22, 1
    %p155 = por %p153, %p154
    %p156 = scmp.ne.s32.totalorder %s147, %s148
    %p157 = scmp.eq.s32.totalorder %s22, 0
    %p158 = por %p156, %p157
    %p159 = scmp.ne.s32.totalorder %s147, %s148
    %p160 = scmp.eq.s32.totalorder %s23, 1
    %p161 = por %p159, %p160
    %p163 = scmp.ne.s32.totalorder %s148, %s162
    %p164 = scmp.eq.s32.totalorder %s23, 0
    %p165 = por %p163, %p164
    %s167 = sadd.s32 %s166, 1
    %p170 = scmp.eq.s32.totalorder %s17, 1
    %p171 = scmp.ne.s32.totalorder %s166, %s168
    %p172 = scmp.eq.s32.totalorder %s17, 0
    %p173 = por %p171, %p172
    %p174 = scmp.ne.s32.totalorder %s166, %s168
    %p175 = scmp.eq.s32.totalorder %s22, 1
    %p176 = por %p174, %p175
    %p177 = scmp.ne.s32.totalorder %s168, %s169
    %p178 = scmp.eq.s32.totalorder %s22, 0
    %p179 = por %p177, %p178
    %p180 = scmp.ne.s32.totalorder %s168, %s169
    %p181 = scmp.eq.s32.totalorder %s23, 1
    %p182 = por %p180, %p181
    %p184 = scmp.ne.s32.totalorder %s169, %s183
    %p185 = scmp.eq.s32.totalorder %s23, 0
    %p186 = por %p184, %p185
    %s188 = sadd.s32 %s187, 1
    %p191 = scmp.eq.s32.totalorder %s17, 1
    %p192 = scmp.ne.s32.totalorder %s187, %s189
    %p193 = scmp.eq.s32.totalorder %s17, 0
    %p194 = por %p192, %p193
    %p195 = scmp.ne.s32.totalorder %s187, %s189
    %p196 = scmp.eq.s32.totalorder %s22, 1
    %p197 = por %p195, %p196
    %p198 = scmp.ne.s32.totalorder %s189, %s190
    %p199 = scmp.eq.s32.totalorder %s22, 0
    %p200 = por %p198, %p199
    %p201 = scmp.ne.s32.totalorder %s189, %s190
    %p202 = scmp.eq.s32.totalorder %s23, 1
    %p203 = por %p201, %p202
    %p205 = scmp.ne.s32.totalorder %s190, %s204
    %p206 = scmp.eq.s32.totalorder %s23, 0
    %p207 = por %p205, %p206
    %s209 = sadd.s32 %s208, 1
    %p212 = scmp.eq.s32.totalorder %s17, 1
    %p213 = scmp.ne.s32.totalorder %s208, %s210
    %p214 = scmp.eq.s32.totalorder %s17, 0
    %p215 = por %p213, %p214
    %p216 = scmp.ne.s32.totalorder %s208, %s210
    %p217 = scmp.eq.s32.totalorder %s22, 1
    %p218 = por %p216, %p217
    %p219 = scmp.ne.s32.totalorder %s210, %s211
    %p220 = scmp.eq.s32.totalorder %s22, 0
    %p221 = por %p219, %p220
    %p222 = scmp.ne.s32.totalorder %s210, %s211
    %p223 = scmp.eq.s32.totalorder %s23, 1
    %p224 = por %p222, %p223
    %p226 = scmp.ne.s32.totalorder %s211, %s225
    %p227 = scmp.eq.s32.totalorder %s23, 0
    %p228 = por %p226, %p227
    %s230 = sadd.s32 %s229, 1
    %p233 = scmp.eq.s32.totalorder %s17, 1
    %p234 = scmp.ne.s32.totalorder %s229, %s231
    %p235 = scmp.eq.s32.totalorder %s17, 0
    %p236 = por %p234, %p235
    %p237 = scmp.ne.s32.totalorder %s229, %s231
    %p238 = scmp.eq.s32.totalorder %s22, 1
    %p239 = por %p237, %p238
    %p240 = scmp.ne.s32.totalorder %s231, %s232
    %p241 = scmp.eq.s32.totalorder %s22, 0
    %p242 = por %p240, %p241
    %p243 = scmp.ne.s32.totalorder %s231, %s232
    %p244 = scmp.eq.s32.totalorder %s23, 1
    %p245 = por %p243, %p244
    %p247 = scmp.ne.s32.totalorder %s232, %s246
    %p248 = scmp.eq.s32.totalorder %s23, 0
    %p249 = por %p247, %p248
    %s251 = sadd.s32 %s250, 1
    %p254 = scmp.eq.s32.totalorder %s17, 1
    %p255 = scmp.ne.s32.totalorder %s250, %s252
    %p256 = scmp.eq.s32.totalorder %s17, 0
    %p257 = por %p255, %p256
    %p258 = scmp.ne.s32.totalorder %s250, %s252
    %p259 = scmp.eq.s32.totalorder %s22, 1
    %p260 = por %p258, %p259
    %p261 = scmp.ne.s32.totalorder %s252, %s253
    %p262 = scmp.eq.s32.totalorder %s22, 0
    %p263 = por %p261, %p262
    %p264 = scmp.ne.s32.totalorder %s252, %s253
    %p265 = scmp.eq.s32.totalorder %s23, 1
    %p266 = por %p264, %p265
    %p268 = scmp.ne.s32.totalorder %s253, %s267
    %p269 = scmp.eq.s32.totalorder %s23, 0
    %p270 = por %p268, %p269
    %s271 = ssub.s32 %s17, %s24
    %p272 = scmp.eq.s32.totalorder %s271, 0
    %s274 = sadd.s32 %s273, 1
    %s275 = scalar_select %p272, %s273, %s274
    %p278 = pneg %p272
    %p279 = scmp.eq.s32.totalorder %s17, 1
    %p280 = por %p278, %p279
    %p281 = scmp.ne.s32.totalorder %s273, %s276
    %p282 = scmp.eq.s32.totalorder %s17, 0
    %p283 = por %p281, %p282
    %p284 = scmp.ne.s32.totalorder %s273, %s276
    %p285 = scmp.eq.s32.totalorder %s22, 1
    %p286 = por %p284, %p285
    %p287 = scmp.ne.s32.totalorder %s276, %s277
    %p288 = scmp.eq.s32.totalorder %s22, 0
    %p289 = por %p287, %p288
    %p290 = scmp.ne.s32.totalorder %s276, %s277
    %p291 = scmp.eq.s32.totalorder %s23, 1
    %p292 = por %p290, %p291
    %p294 = scmp.ne.s32.totalorder %s277, %s293
    %p295 = scmp.eq.s32.totalorder %s23, 0
    %p296 = por %p294, %p295
    %p297 = scmp.le.s32.totalorder 1, %s17
    %p298 = scmp.lt.s32.totalorder %s17, 3
    %p299 = pnand %p297, %p298
    %p300 = pneg %p299
    // Predicated region
    $region9: #{seq2seq_forward.4} parent=5 // pred_check
      _
    $region10: #{seq2seq_forward.4} parent=5 // pred_check_branch
      %302 = sbr.rel (%p299) target = $region12
    $region11: #{seq2seq_forward.4} parent=5 // pred_region
      %s303 = ssub.s32 %s17, 1
      // Predicated region
      $region13: #{seq2seq_forward.4} parent=11 // pred_check
        %p304 = pneg %p116
      $region14: #{seq2seq_forward.4} parent=11 // pred_check_branch
        %306 = sbr.rel (%p304) target = $region16
      $region15: #{seq2seq_forward.4} parent=11 // pred_region
        _
      $region16: #{seq2seq_forward.4} parent=11 // pred_fallthru
        _
      // Predicated region
      $region17: #{seq2seq_forward.4} parent=11 // pred_check
        %p307 = pneg %p137
      $region18: #{seq2seq_forward.4} parent=11 // pred_check_branch
        %309 = sbr.rel (%p307) target = $region20
      $region19: #{seq2seq_forward.4} parent=11 // pred_region
        _
      $region20: #{seq2seq_forward.4} parent=11 // pred_fallthru
        _
      // Predicated region
      $region21: #{seq2seq_forward.4} parent=11 // pred_check
        %p310 = pneg %p158
      $region22: #{seq2seq_forward.4} parent=11 // pred_check_branch
        %312 = sbr.rel (%p310) target = $region24
      $region23: #{seq2seq_forward.4} parent=11 // pred_region
        _
      $region24: #{seq2seq_forward.4} parent=11 // pred_fallthru
        _
      // Predicated region
      $region25: #{seq2seq_forward.4} parent=11 // pred_check
        %p313 = pneg %p179
      $region26: #{seq2seq_forward.4} parent=11 // pred_check_branch
        %315 = sbr.rel (%p313) target = $region28
      $region27: #{seq2seq_forward.4} parent=11 // pred_region
        _
      $region28: #{seq2seq_forward.4} parent=11 // pred_fallthru
        _
      // Predicated region
      $region29: #{seq2seq_forward.4} parent=11 // pred_check
        %p316 = pneg %p200
      $region30: #{seq2seq_forward.4} parent=11 // pred_check_branch
        %318 = sbr.rel (%p316) target = $region32
      $region31: #{seq2seq_forward.4} parent=11 // pred_region
        _
      $region32: #{seq2seq_forward.4} parent=11 // pred_fallthru
        _
      // Predicated region
      $region33: #{seq2seq_forward.4} parent=11 // pred_check
        %p319 = pneg %p221
      $region34: #{seq2seq_forward.4} parent=11 // pred_check_branch
        %321 = sbr.rel (%p319) target = $region36
      $region35: #{seq2seq_forward.4} parent=11 // pred_region
        _
      $region36: #{seq2seq_forward.4} parent=11 // pred_fallthru
        _
      // Predicated region
      $region37: #{seq2seq_forward.4} parent=11 // pred_check
        %p322 = pneg %p242
      $region38: #{seq2seq_forward.4} parent=11 // pred_check_branch
        %324 = sbr.rel (%p322) target = $region40
      $region39: #{seq2seq_forward.4} parent=11 // pred_region
        _
      $region40: #{seq2seq_forward.4} parent=11 // pred_fallthru
        _
      // Predicated region
      $region41: #{seq2seq_forward.4} parent=11 // pred_check
        %p325 = pneg %p263
      $region42: #{seq2seq_forward.4} parent=11 // pred_check_branch
        %327 = sbr.rel (%p325) target = $region44
      $region43: #{seq2seq_forward.4} parent=11 // pred_region
        _
      $region44: #{seq2seq_forward.4} parent=11 // pred_fallthru
        _
    $region12: #{seq2seq_forward.4} parent=5 // pred_fallthru
      _
    %p328 = scmp.lt.s32.totalorder %s17, 2
    // Predicated region
    $region45: #{seq2seq_forward.4} parent=5 // pred_check
      %p329 = pneg %p328
    $region46: #{seq2seq_forward.4} parent=5 // pred_check_branch
      %331 = sbr.rel (%p329) target = $region48
    $region47: #{seq2seq_forward.4} parent=5 // pred_region
      // Predicated region
      $region49: #{seq2seq_forward.4} parent=47 // pred_check
        %p332 = pneg %p37
      $region50: #{seq2seq_forward.4} parent=47 // pred_check_branch
        %334 = sbr.rel (%p332) target = $region52
      $region51: #{seq2seq_forward.4} parent=47 // pred_region
        %p335 = scmp.lt.s32.totalorder %s17, 1
        %s336 = scalar_select %p335, %s17, 1
        %s337 = smul.addr %s336, 2
        %s338 = smul.addr %s337, 8
        %s339 = scalar_lea.vmem %s0, %s338
      $region52: #{seq2seq_forward.4} parent=47 // pred_fallthru
        _
      // Predicated region
      $region53: #{seq2seq_forward.4} parent=47 // pred_check
        %p340 = pneg %p63
      $region54: #{seq2seq_forward.4} parent=47 // pred_check_branch
        %342 = sbr.rel (%p340) target = $region56
      $region55: #{seq2seq_forward.4} parent=47 // pred_region
        %p343 = scmp.lt.s32.totalorder %s17, 1
        %s344 = scalar_select %p343, %s17, 1
        %s345 = smul.addr %s344, 2
        %s346 = smul.addr %s345, 8
        %s347 = scalar_lea.vmem %s1, %s346
      $region56: #{seq2seq_forward.4} parent=47 // pred_fallthru
        _
      // Predicated region
      $region57: #{seq2seq_forward.4} parent=47 // pred_check
        %p348 = pneg %p89
      $region58: #{seq2seq_forward.4} parent=47 // pred_check_branch
        %350 = sbr.rel (%p348) target = $region60
      $region59: #{seq2seq_forward.4} parent=47 // pred_region
        %p351 = scmp.lt.s32.totalorder %s17, 1
        %s352 = scalar_select %p351, %s17, 1
        %s353 = scalar_lea.vmem %s2, %s352
      $region60: #{seq2seq_forward.4} parent=47 // pred_fallthru
        _
    $region48: #{seq2seq_forward.4} parent=5 // pred_fallthru
      _
    %p354 = scmp.le.s32.totalorder 1, %s17
    %p355 = scmp.lt.s32.totalorder %s17, 3
    %p356 = pnand %p354, %p355
    %p357 = pneg %p356
    // Predicated region
    $region61: #{seq2seq_forward.4} parent=5 // pred_check
      _
    $region62: #{seq2seq_forward.4} parent=5 // pred_check_branch
      %359 = sbr.rel (%p356) target = $region64
    $region63: #{seq2seq_forward.4} parent=5 // pred_region
      %s360 = ssub.s32 %s17, 1
      %p361 = scmp.lt.s32.totalorder %s22, 1
      %s362 = scalar_select %p361, %s22, 1
      %s363 = smul.addr %s362, 2
      %s364 = smul.addr %s363, 8
      %s365 = scalar_lea.vmem %s0, %s364
      %p366 = pneg %p43
      %p367 = pneg %p40
      %p368 = scmp.lt.s32.totalorder %s22, 1
      %s369 = scalar_select %p368, %s22, 1
      %s370 = smul.addr %s369, 2
      %s371 = smul.addr %s370, 8
      %s372 = scalar_lea.vmem %s1, %s371
      %p373 = pneg %p69
      %p374 = pneg %p66
      %p375 = scmp.lt.s32.totalorder %s22, 1
      %s376 = scalar_select %p375, %s22, 1
      %s377 = scalar_lea.vmem %s2, %s376
      %p378 = pneg %p95
      %p379 = pneg %p92
      %p380 = pneg %p116
      %p381 = pneg %p113
      %p382 = pneg %p137
      %p383 = pneg %p134
      %p384 = pneg %p158
      %p385 = pneg %p155
      %p386 = pneg %p179
      %p387 = pneg %p176
      %p388 = pneg %p200
      %p389 = pneg %p197
      %p390 = pneg %p221
      %p391 = pneg %p218
      %p392 = pneg %p242
      %p393 = pneg %p239
      %p394 = pneg %p263
      %p395 = pneg %p260
      %p396 = pneg %p289
      %p397 = pneg %p286
      %p398 = scmp.lt.s32.totalorder %s22, 1
      %s399 = scalar_select %p398, %s22, 1
      %s400 = smul.addr %s399, 2
      %s401 = smul.addr %s400, 8
      %s402 = scalar_lea.vmem %s11, %s401
      %p403 = scmp.lt.s32.totalorder %s22, 1
      %s404 = scalar_select %p403, %s22, 1
      %s405 = smul.addr %s404, 2
      %s406 = smul.addr %s405, 8
      %s407 = scalar_lea.vmem %s0, %s406
      %p408 = scmp.lt.s32.totalorder %s22, 1
      %s409 = scalar_select %p408, %s22, 1
      %s410 = smul.addr %s409, 2
      %s411 = smul.addr %s410, 8
      %s412 = scalar_lea.vmem %s1, %s411
      %p413 = scmp.lt.s32.totalorder %s22, 1
      %s414 = scalar_select %p413, %s22, 1
      %s415 = scalar_lea.vmem %s2, %s414
      %p416 = scmp.lt.s32.totalorder %s22, 1
      %s417 = scalar_select %p416, %s22, 1
      %s418 = smul.addr %s417, 2
      %s419 = smul.addr %s418, 8
      %s420 = scalar_lea.vmem %s11, %s419
      %v422 = vld [vmem:[%s407] sm:$0xff]
      %v423 = vld [vmem:[%s407 + $0x8] sm:$0xff]
      %v424 = vld [vmem:[%s412] sm:$0xff]
      %v425 = vld [vmem:[%s412 + $0x8] sm:$0xff]
      %v426 = vpack.c.bf16 %v423, %v422
      %v427 = vld [vmem:[%s3] sm:$0xf]
      %v428 = vld [vmem:[%s3 + $0x4] sm:$0xf]
      %v429 = vld [vmem:[%s3 + $0x8] sm:$0xf]
      %v430 = vld [vmem:[%s3 + $0xc] sm:$0xf]
      %v431 = vld [vmem:[%s3 + $0x10] sm:$0xf]
      %v432 = vld [vmem:[%s3 + $0x14] sm:$0xf]
      %v433 = vld [vmem:[%s3 + $0x18] sm:$0xf]
      %v434 = vld [vmem:[%s3 + $0x1c] sm:$0xf]
      %v435 = vld [vmem:[%s4] sm:$0x1]
      %v437 = vlaneseq
      %v438 = vshrl.u32 %v437, 7
      %v439 = vsub.s32 0, %v438
      %v440 = vrot.slane %v435, %v439
      %v450 = vunpack.c.l.b16 %v427
      %v451 = vunpack.c.l.b16 %v428
      %v452 = vunpack.c.l.b16 %v429
      %v453 = vunpack.c.l.b16 %v430
      %v454 = vunpack.c.l.b16 %v431
      %v455 = vunpack.c.l.b16 %v432
      %v456 = vunpack.c.l.b16 %v433
      %v457 = vunpack.c.l.b16 %v434
      %v458 = vpack.c.b16 %v451, %v450
      %v459 = vpack.c.b16 %v453, %v452
      %v460 = vpack.c.b16 %v455, %v454
      %v461 = vpack.c.b16 %v457, %v456
      %vm466 = vcmask 523264
      %v468 = vsel %vm466, %v426, 0
      %470 = vmatprep.subr.bf16.mxu0 0
      %471 = vmatpush1.bf16.msra.mxu0 %v458
      %472 = vmatprep.subr.bf16.mxu0 0
      %473 = vmatpush1.bf16.msra.mxu0 %v459
      %474 = vmatprep.subr.bf16.mxu0 0
      %475 = vmatpush1.bf16.msra.mxu0 %v460
      %476 = vmatprep.subr.bf16.mxu0 0
      %477 = vmatpush1.bf16.msra.mxu0 %v461
      %478 = vmatprep.subr.bf16.mxu0 0
      %479 = vmatpush1.bf16.msra.mxu0 0
      %480 = vmatprep.subr.bf16.mxu0 0
      %481 = vmatpush1.bf16.msra.mxu0 0
      %482 = vmatprep.subr.bf16.mxu0 0
      %483 = vmatpush1.bf16.msra.mxu0 0
      %484 = vmatprep.subr.bf16.mxu0 0
      %485 = vmatpush1.bf16.msra.mxu0 0
      %486 = vmatprep.subr.bf16.mxu0 0
      %487 = vmatpush1.bf16.msra.mxu0 0
      %488 = vmatprep.subr.bf16.mxu0 0
      %489 = vmatpush1.bf16.msra.mxu0 0
      %490 = vmatprep.subr.bf16.mxu0 0
      %491 = vmatpush1.bf16.msra.mxu0 0
      %492 = vmatprep.subr.bf16.mxu0 0
      %493 = vmatpush1.bf16.msra.mxu0 0
      %494 = vmatprep.subr.bf16.mxu0 0
      %495 = vmatpush1.bf16.msra.mxu0 0
      %496 = vmatprep.subr.bf16.mxu0 0
      %497 = vmatpush1.bf16.msra.mxu0 0
      %498 = vmatprep.subr.bf16.mxu0 0
      %499 = vmatpush1.bf16.msra.mxu0 0
      %500 = vmatprep.subr.bf16.mxu0 0
      %501 = vmatpush1.bf16.msra.mxu0 0
      %502 = vmatprep.mubr.bf16.mxu0 0
      %503 = vmatmul.mubr.bf16.gmra.mrb[0].mxu0 %v468
      %v504 = vpop.f32.mrb[0].mxu0
      %v505 = vadd.f32 %v440, %v504
      %v506 = vpop.f32.mrb[0].mxu0
      %v507 = vpop.f32.mrb[0].mxu0
      %v508 = vadd.f32 %v440, %v507
      %v509 = vpop.f32.mrb[0].mxu0
      %510 = vdwg.mxu0
      %v511 = vpack.c.bf16 %v425, %v424
      %v512 = vld [vmem:[%s5] sm:$0xf]
      %v513 = vld [vmem:[%s5 + $0x4] sm:$0xf]
      %v514 = vld [vmem:[%s5 + $0x8] sm:$0xf]
      %v515 = vld [vmem:[%s5 + $0xc] sm:$0xf]
      %v516 = vld [vmem:[%s5 + $0x10] sm:$0xf]
      %v517 = vld [vmem:[%s5 + $0x14] sm:$0xf]
      %v518 = vld [vmem:[%s5 + $0x18] sm:$0xf]
      %v519 = vld [vmem:[%s5 + $0x1c] sm:$0xf]
      %v520 = vld [vmem:[%s6] sm:$0x1]
      %v522 = vlaneseq
      %v523 = vshrl.u32 %v522, 7
      %v524 = vsub.s32 0, %v523
      %v525 = vrot.slane %v520, %v524
      %v535 = vunpack.c.l.b16 %v512
      %v536 = vunpack.c.l.b16 %v513
      %v537 = vunpack.c.l.b16 %v514
      %v538 = vunpack.c.l.b16 %v515
      %v539 = vunpack.c.l.b16 %v516
      %v540 = vunpack.c.l.b16 %v517
      %v541 = vunpack.c.l.b16 %v518
      %v542 = vunpack.c.l.b16 %v519
      %v543 = vpack.c.b16 %v536, %v535
      %v544 = vpack.c.b16 %v538, %v537
      %v545 = vpack.c.b16 %v540, %v539
      %v546 = vpack.c.b16 %v542, %v541
      %v552 = vsel %vm466, %v511, 0
      %554 = vmatprep.subr.bf16.mxu0 0
      %555 = vmatpush1.bf16.msra.mxu0 %v543
      %556 = vmatprep.subr.bf16.mxu0 0
      %557 = vmatpush1.bf16.msra.mxu0 %v544
      %558 = vmatprep.subr.bf16.mxu0 0
      %559 = vmatpush1.bf16.msra.mxu0 %v545
      %560 = vmatprep.subr.bf16.mxu0 0
      %561 = vmatpush1.bf16.msra.mxu0 %v546
      %562 = vmatprep.subr.bf16.mxu0 0
      %563 = vmatpush1.bf16.msra.mxu0 0
      %564 = vmatprep.subr.bf16.mxu0 0
      %565 = vmatpush1.bf16.msra.mxu0 0
      %566 = vmatprep.subr.bf16.mxu0 0
      %567 = vmatpush1.bf16.msra.mxu0 0
      %568 = vmatprep.subr.bf16.mxu0 0
      %569 = vmatpush1.bf16.msra.mxu0 0
      %570 = vmatprep.subr.bf16.mxu0 0
      %571 = vmatpush1.bf16.msra.mxu0 0
      %572 = vmatprep.subr.bf16.mxu0 0
      %573 = vmatpush1.bf16.msra.mxu0 0
      %574 = vmatprep.subr.bf16.mxu0 0
      %575 = vmatpush1.bf16.msra.mxu0 0
      %576 = vmatprep.subr.bf16.mxu0 0
      %577 = vmatpush1.bf16.msra.mxu0 0
      %578 = vmatprep.subr.bf16.mxu0 0
      %579 = vmatpush1.bf16.msra.mxu0 0
      %580 = vmatprep.subr.bf16.mxu0 0
      %581 = vmatpush1.bf16.msra.mxu0 0
      %582 = vmatprep.subr.bf16.mxu0 0
      %583 = vmatpush1.bf16.msra.mxu0 0
      %584 = vmatprep.subr.bf16.mxu0 0
      %585 = vmatpush1.bf16.msra.mxu0 0
      %586 = vmatprep.mubr.bf16.mxu0 0
      %587 = vmatmul.mubr.bf16.gmra.mrb[0].mxu0 %v552
      %v588 = vpop.f32.mrb[0].mxu0
      %v589 = vadd.f32 %v525, %v588
      %v590 = vpop.f32.mrb[0].mxu0
      %v591 = vpop.f32.mrb[0].mxu0
      %v592 = vadd.f32 %v525, %v591
      %v593 = vpop.f32.mrb[0].mxu0
      %594 = vdwg.mxu0
      %v595 = vld [vmem:[%s415] sm:$0x1]
      %v597 = vlaneseq
      %v598 = vshrl.u32 %v597, 7
      %v599 = vsub.s32 0, %v598
      %v600 = vrot.slane %v595, %v599
      %v602 = vlaneseq
      %v603 = vshrl.u32 %v602, 7
      %v604 = vadd.s32 %v603, 8
      %v605 = vlaneseq
      %v606 = vand.u32 %v605, 127
      %vm607 = vcmp.le.s32.totalorder %v606, %v603
      %vm608 = vcmp.le.s32.totalorder %v606, %v604
      %v609 = vsel %vm607, 0.0, -10000.0
      %v610 = vsel %vm608, 0.0, -10000.0
      %v611 = vadd.f32 %v600, %v609
      %v612 = vadd.f32 %v600, %v610
      %v613 = vpack.c.bf16 %v508, %v505
      %v614 = vpack.c.bf16 %v592, %v589
      %vm615 = vcmask 130048
      %v617 = vsel %vm615, %v613, 0
      %v620 = vsel %vm615, %v614, 0
      %622 = vmatprep.subr.bf16.mxu0 0
      %623 = vmatpush1.bf16.xpose.msra.mxu0 %v620
      %624 = vmatprep.subr.bf16.mxu0 0
      %625 = vmatpush1.bf16.xpose.msra.mxu0 0
      %626 = vmatprep.subr.bf16.mxu0 0
      %627 = vmatpush1.bf16.xpose.msra.mxu0 0
      %628 = vmatprep.subr.bf16.mxu0 0
      %629 = vmatpush1.bf16.xpose.msra.mxu0 0
      %630 = vmatprep.subr.bf16.mxu0 0
      %631 = vmatpush1.bf16.xpose.msra.mxu0 0
      %632 = vmatprep.subr.bf16.mxu0 0
      %633 = vmatpush1.bf16.xpose.msra.mxu0 0
      %634 = vmatprep.subr.bf16.mxu0 0
      %635 = vmatpush1.bf16.xpose.msra.mxu0 0
      %636 = vmatprep.subr.bf16.mxu0 0
      %637 = vmatpush1.bf16.xpose.msra.mxu0 0
      %638 = vmatprep.subr.bf16.mxu0 0
      %639 = vmatpush1.bf16.xpose.msra.mxu0 0
      %640 = vmatprep.subr.bf16.mxu0 0
      %641 = vmatpush1.bf16.xpose.msra.mxu0 0
      %642 = vmatprep.subr.bf16.mxu0 0
      %643 = vmatpush1.bf16.xpose.msra.mxu0 0
      %644 = vmatprep.subr.bf16.mxu0 0
      %645 = vmatpush1.bf16.xpose.msra.mxu0 0
      %646 = vmatprep.subr.bf16.mxu0 0
      %647 = vmatpush1.bf16.xpose.msra.mxu0 0
      %648 = vmatprep.subr.bf16.mxu0 0
      %649 = vmatpush1.bf16.xpose.msra.mxu0 0
      %650 = vmatprep.subr.bf16.mxu0 0
      %651 = vmatpush1.bf16.xpose.msra.mxu0 0
      %652 = vmatprep.subr.bf16.mxu0 0
      %653 = vmatpush1.bf16.xpose.msra.mxu0 0
      %654 = vmatprep.mubr.bf16.mxu0 0
      %655 = vmatmul.mubr.bf16.gmra.mrb[0].mxu0 %v617
      %v656 = vpop.f32.mrb[0].mxu0
      %v657 = vadd.f32 0.0, %v656
      %v658 = vpop.f32.mrb[0].mxu0
      %v659 = vpop.f32.mrb[0].mxu0
      %v660 = vadd.f32 0.0, %v659
      %v661 = vpop.f32.mrb[0].mxu0
      %662 = vdwg.mxu0
      %v663 = vmul.f32 %v657, 0.25
      %v664 = vmul.f32 %v660, 0.25
      %v665 = vadd.f32 %v663, %v611
      %v666 = vadd.f32 %v664, %v612
      %v667 = vsel %vm615, %v665, -inf
      %668 = vmax.xlane.f32.xlu0 %v667
      %v669 = vpop.xlane.xlu0 %668
      %v670 = vsel %vm615, %v666, -inf
      %671 = vmax.xlane.f32.xlu0 %v670
      %v672 = vpop.xlane.xlu0 %671
      %v673 = vsub.f32 %v665, %v669
      %v674 = vsub.f32 %v666, %v672
      %v675 = vmul.f32 %v673, 1.442695
      %v676 = vpow.pop %v675
      %v677 = vmul.f32 %v674, 1.442695
      %v678 = vpow.pop %v677
      %v679 = vsel %vm615, %v676, 0.0
      %680 = vadd.xlane.f32.xlu0 %v679
      %v681 = vpop.xlane.xlu0 %680
      %v682 = vsel %vm615, %v678, 0.0
      %683 = vadd.xlane.f32.xlu0 %v682
      %v684 = vpop.xlane.xlu0 %683
      %v685 = vrcp.pop %v681
      %v686 = vrcp.pop %v684
      %v687 = vmul.f32 %v676, %v685
      %v688 = vmul.f32 %v678, %v686
      %v689 = vpack.c.bf16 %v688, %v687
      %691 = vrot.lane.b32.xlu0 %v614, 64
      %v692 = vpop.permute.xlu0 %691
      %v695 = vsel %vm615, %v689, 0
      %697 = vmatprep.subr.bf16.mxu0 0
      %698 = vmatpush1.bf16.msra.mxu0 %v692
      %699 = vmatprep.subr.bf16.mxu0 0
      %700 = vmatpush1.bf16.msra.mxu0 0
      %701 = vmatprep.subr.bf16.mxu0 0
      %702 = vmatpush1.bf16.msra.mxu0 0
      %703 = vmatprep.subr.bf16.mxu0 0
      %704 = vmatpush1.bf16.msra.mxu0 0
      %705 = vmatprep.subr.bf16.mxu0 0
      %706 = vmatpush1.bf16.msra.mxu0 0
      %707 = vmatprep.subr.bf16.mxu0 0
      %708 = vmatpush1.bf16.msra.mxu0 0
      %709 = vmatprep.subr.bf16.mxu0 0
      %710 = vmatpush1.bf16.msra.mxu0 0
      %711 = vmatprep.subr.bf16.mxu0 0
      %712 = vmatpush1.bf16.msra.mxu0 0
      %713 = vmatprep.subr.bf16.mxu0 0
      %714 = vmatpush1.bf16.msra.mxu0 0
      %715 = vmatprep.subr.bf16.mxu0 0
      %716 = vmatpush1.bf16.msra.mxu0 0
      %717 = vmatprep.subr.bf16.mxu0 0
      %718 = vmatpush1.bf16.msra.mxu0 0
      %719 = vmatprep.subr.bf16.mxu0 0
      %720 = vmatpush1.bf16.msra.mxu0 0
      %721 = vmatprep.subr.bf16.mxu0 0
      %722 = vmatpush1.bf16.msra.mxu0 0
      %723 = vmatprep.subr.bf16.mxu0 0
      %724 = vmatpush1.bf16.msra.mxu0 0
      %725 = vmatprep.subr.bf16.mxu0 0
      %726 = vmatpush1.bf16.msra.mxu0 0
      %727 = vmatprep.subr.bf16.mxu0 0
      %728 = vmatpush1.bf16.msra.mxu0 0
      %729 = vmatprep.mubr.bf16.mxu0 0
      %730 = vmatmul.mubr.bf16.gmra.mrb[0].mxu0 %v695
      %v731 = vpop.f32.mrb[0].mxu0
      %v732 = vadd.f32 0.0, %v731
      %v733 = vpop.f32.mrb[0].mxu0
      %v734 = vpop.f32.mrb[0].mxu0
      %v735 = vadd.f32 0.0, %v734
      %v736 = vpop.f32.mrb[0].mxu0
      %737 = vdwg.mxu0
      %739 = vrot.lane.b32.xlu0 %v613, 112
      %v740 = vpop.permute.xlu0 %739
      %741 = vrot.lane.b32.xlu0 %v614, 112
      %v742 = vpop.permute.xlu0 %741
      %v744 = vsel %vm615, %v740, 0
      %v747 = vsel %vm615, %v742, 0
      %749 = vmatprep.subr.bf16.mxu0 0
      %750 = vmatpush1.bf16.xpose.msra.mxu0 %v747
      %751 = vmatprep.subr.bf16.mxu0 0
      %752 = vmatpush1.bf16.xpose.msra.mxu0 0
      %753 = vmatprep.subr.bf16.mxu0 0
      %754 = vmatpush1.bf16.xpose.msra.mxu0 0
      %755 = vmatprep.subr.bf16.mxu0 0
      %756 = vmatpush1.bf16.xpose.msra.mxu0 0
      %757 = vmatprep.subr.bf16.mxu0 0
      %758 = vmatpush1.bf16.xpose.msra.mxu0 0
      %759 = vmatprep.subr.bf16.mxu0 0
      %760 = vmatpush1.bf16.xpose.msra.mxu0 0
      %761 = vmatprep.subr.bf16.mxu0 0
      %762 = vmatpush1.bf16.xpose.msra.mxu0 0
      %763 = vmatprep.subr.bf16.mxu0 0
      %764 = vmatpush1.bf16.xpose.msra.mxu0 0
      %765 = vmatprep.subr.bf16.mxu0 0
      %766 = vmatpush1.bf16.xpose.msra.mxu0 0
      %767 = vmatprep.subr.bf16.mxu0 0
      %768 = vmatpush1.bf16.xpose.msra.mxu0 0
      %769 = vmatprep.subr.bf16.mxu0 0
      %770 = vmatpush1.bf16.xpose.msra.mxu0 0
      %771 = vmatprep.subr.bf16.mxu0 0
      %772 = vmatpush1.bf16.xpose.msra.mxu0 0
      %773 = vmatprep.subr.bf16.mxu0 0
      %774 = vmatpush1.bf16.xpose.msra.mxu0 0
      %775 = vmatprep.subr.bf16.mxu0 0
      %776 = vmatpush1.bf16.xpose.msra.mxu0 0
      %777 = vmatprep.subr.bf16.mxu0 0
      %778 = vmatpush1.bf16.xpose.msra.mxu0 0
      %779 = vmatprep.subr.bf16.mxu0 0
      %780 = vmatpush1.bf16.xpose.msra.mxu0 0
      %781 = vmatprep.mubr.bf16.mxu0 0
      %782 = vmatmul.mubr.bf16.gmra.mrb[0].mxu0 %v744
      %v783 = vpop.f32.mrb[0].mxu0
      %v784 = vadd.f32 0.0, %v783
      %v785 = vpop.f32.mrb[0].mxu0
      %v786 = vpop.f32.mrb[0].mxu0
      %v787 = vadd.f32 0.0, %v786
      %v788 = vpop.f32.mrb[0].mxu0
      %789 = vdwg.mxu0
      %v790 = vmul.f32 %v784, 0.25
      %v791 = vmul.f32 %v787, 0.25
      %v792 = vadd.f32 %v790, %v611
      %v793 = vadd.f32 %v791, %v612
      %v794 = vsel %vm615, %v792, -inf
      %795 = vmax.xlane.f32.xlu0 %v794
      %v796 = vpop.xlane.xlu0 %795
      %v797 = vsel %vm615, %v793, -inf
      %798 = vmax.xlane.f32.xlu0 %v797
      %v799 = vpop.xlane.xlu0 %798
      %v800 = vsub.f32 %v792, %v796
      %v801 = vsub.f32 %v793, %v799
      %v802 = vmul.f32 %v800, 1.442695
      %v803 = vpow.pop %v802
      %v804 = vmul.f32 %v801, 1.442695
      %v805 = vpow.pop %v804
      %v806 = vsel %vm615, %v803, 0.0
      %807 = vadd.xlane.f32.xlu0 %v806
      %v808 = vpop.xlane.xlu0 %807
      %v809 = vsel %vm615, %v805, 0.0
      %810 = vadd.xlane.f32.xlu0 %v809
      %v811 = vpop.xlane.xlu0 %810
      %v812 = vrcp.pop %v808
      %v813 = vrcp.pop %v811
      %v814 = vmul.f32 %v803, %v812
      %v815 = vmul.f32 %v805, %v813
      %v816 = vpack.c.bf16 %v815, %v814
      %817 = vrot.lane.b32.xlu0 %v614, 48
      %v818 = vpop.permute.xlu0 %817
      %v821 = vsel %vm615, %v816, 0
      %823 = vmatprep.subr.bf16.mxu0 0
      %824 = vmatpush1.bf16.msra.mxu0 %v818
      %825 = vmatprep.subr.bf16.mxu0 0
      %826 = vmatpush1.bf16.msra.mxu0 0
      %827 = vmatprep.subr.bf16.mxu0 0
      %828 = vmatpush1.bf16.msra.mxu0 0
      %829 = vmatprep.subr.bf16.mxu0 0
      %830 = vmatpush1.bf16.msra.mxu0 0
      %831 = vmatprep.subr.bf16.mxu0 0
      %832 = vmatpush1.bf16.msra.mxu0 0
      %833 = vmatprep.subr.bf16.mxu0 0
      %834 = vmatpush1.bf16.msra.mxu0 0
      %835 = vmatprep.subr.bf16.mxu0 0
      %836 = vmatpush1.bf16.msra.mxu0 0
      %837 = vmatprep.subr.bf16.mxu0 0
      %838 = vmatpush1.bf16.msra.mxu0 0
      %839 = vmatprep.subr.bf16.mxu0 0
      %840 = vmatpush1.bf16.msra.mxu0 0
      %841 = vmatprep.subr.bf16.mxu0 0
      %842 = vmatpush1.bf16.msra.mxu0 0
      %843 = vmatprep.subr.bf16.mxu0 0
      %844 = vmatpush1.bf16.msra.mxu0 0
      %845 = vmatprep.subr.bf16.mxu0 0
      %846 = vmatpush1.bf16.msra.mxu0 0
      %847 = vmatprep.subr.bf16.mxu0 0
      %848 = vmatpush1.bf16.msra.mxu0 0
      %849 = vmatprep.subr.bf16.mxu0 0
      %850 = vmatpush1.bf16.msra.mxu0 0
      %851 = vmatprep.subr.bf16.mxu0 0
      %852 = vmatpush1.bf16.msra.mxu0 0
      %853 = vmatprep.subr.bf16.mxu0 0
      %854 = vmatpush1.bf16.msra.mxu0 0
      %855 = vmatprep.mubr.bf16.mxu0 0
      %856 = vmatmul.mubr.bf16.gmra.mrb[0].mxu0 %v821
      %v857 = vpop.f32.mrb[0].mxu0
      %v858 = vadd.f32 0.0, %v857
      %v859 = vpop.f32.mrb[0].mxu0
      %v860 = vpop.f32.mrb[0].mxu0
      %v861 = vadd.f32 0.0, %v860
      %v862 = vpop.f32.mrb[0].mxu0
      %863 = vdwg.mxu0
      %864 = vrot.lane.b32.xlu0 %v613, 96
      %v865 = vpop.permute.xlu0 %864
      %866 = vrot.lane.b32.xlu0 %v614, 96
      %v867 = vpop.permute.xlu0 %866
      %v869 = vsel %vm615, %v865, 0
      %v872 = vsel %vm615, %v867, 0
      %874 = vmatprep.subr.bf16.mxu0 0
      %875 = vmatpush1.bf16.xpose.msra.mxu0 %v872
      %876 = vmatprep.subr.bf16.mxu0 0
      %877 = vmatpush1.bf16.xpose.msra.mxu0 0
      %878 = vmatprep.subr.bf16.mxu0 0
      %879 = vmatpush1.bf16.xpose.msra.mxu0 0
      %880 = vmatprep.subr.bf16.mxu0 0
      %881 = vmatpush1.bf16.xpose.msra.mxu0 0
      %882 = vmatprep.subr.bf16.mxu0 0
      %883 = vmatpush1.bf16.xpose.msra.mxu0 0
      %884 = vmatprep.subr.bf16.mxu0 0
      %885 = vmatpush1.bf16.xpose.msra.mxu0 0
      %886 = vmatprep.subr.bf16.mxu0 0
      %887 = vmatpush1.bf16.xpose.msra.mxu0 0
      %888 = vmatprep.subr.bf16.mxu0 0
      %889 = vmatpush1.bf16.xpose.msra.mxu0 0
      %890 = vmatprep.subr.bf16.mxu0 0
      %891 = vmatpush1.bf16.xpose.msra.mxu0 0
      %892 = vmatprep.subr.bf16.mxu0 0
      %893 = vmatpush1.bf16.xpose.msra.mxu0 0
      %894 = vmatprep.subr.bf16.mxu0 0
      %895 = vmatpush1.bf16.xpose.msra.mxu0 0
      %896 = vmatprep.subr.bf16.mxu0 0
      %897 = vmatpush1.bf16.xpose.msra.mxu0 0
      %898 = vmatprep.subr.bf16.mxu0 0
      %899 = vmatpush1.bf16.xpose.msra.mxu0 0
      %900 = vmatprep.subr.bf16.mxu0 0
      %901 = vmatpush1.bf16.xpose.msra.mxu0 0
      %902 = vmatprep.subr.bf16.mxu0 0
      %903 = vmatpush1.bf16.xpose.msra.mxu0 0
      %904 = vmatprep.subr.bf16.mxu0 0
      %905 = vmatpush1.bf16.xpose.msra.mxu0 0
      %906 = vmatprep.mubr.bf16.mxu0 0
      %907 = vmatmul.mubr.bf16.gmra.mrb[0].mxu0 %v869
      %v908 = vpop.f32.mrb[0].mxu0
      %v909 = vadd.f32 0.0, %v908
      %v910 = vpop.f32.mrb[0].mxu0
      %v911 = vpop.f32.mrb[0].mxu0
      %v912 = vadd.f32 0.0, %v911
      %v913 = vpop.f32.mrb[0].mxu0
      %914 = vdwg.mxu0
      %v915 = vmul.f32 %v909, 0.25
      %v916 = vmul.f32 %v912, 0.25
      %v917 = vadd.f32 %v915, %v611
      %v918 = vadd.f32 %v916, %v612
      %v919 = vsel %vm615, %v917, -inf
      %920 = vmax.xlane.f32.xlu0 %v919
      %v921 = vpop.xlane.xlu0 %920
      %v922 = vsel %vm615, %v918, -inf
      %923 = vmax.xlane.f32.xlu0 %v922
      %v924 = vpop.xlane.xlu0 %923
      %v925 = vsub.f32 %v917, %v921
      %v926 = vsub.f32 %v918, %v924
      %v927 = vmul.f32 %v925, 1.442695
      %v928 = vpow.pop %v927
      %v929 = vmul.f32 %v926, 1.442695
      %v930 = vpow.pop %v929
      %v931 = vsel %vm615, %v928, 0.0
      %932 = vadd.xlane.f32.xlu0 %v931
      %v933 = vpop.xlane.xlu0 %932
      %v934 = vsel %vm615, %v930, 0.0
      %935 = vadd.xlane.f32.xlu0 %v934
      %v936 = vpop.xlane.xlu0 %935
      %v937 = vrcp.pop %v933
      %v938 = vrcp.pop %v936
      %v939 = vmul.f32 %v928, %v937
      %v940 = vmul.f32 %v930, %v938
      %v941 = vpack.c.bf16 %v940, %v939
      %942 = vrot.lane.b32.xlu0 %v614, 32
      %v943 = vpop.permute.xlu0 %942
      %v946 = vsel %vm615, %v941, 0
      %948 = vmatprep.subr.bf16.mxu0 0
      %949 = vmatpush1.bf16.msra.mxu0 %v943
      %950 = vmatprep.subr.bf16.mxu0 0
      %951 = vmatpush1.bf16.msra.mxu0 0
      %952 = vmatprep.subr.bf16.mxu0 0
      %953 = vmatpush1.bf16.msra.mxu0 0
      %954 = vmatprep.subr.bf16.mxu0 0
      %955 = vmatpush1.bf16.msra.mxu0 0
      %956 = vmatprep.subr.bf16.mxu0 0
      %957 = vmatpush1.bf16.msra.mxu0 0
      %958 = vmatprep.subr.bf16.mxu0 0
      %959 = vmatpush1.bf16.msra.mxu0 0
      %960 = vmatprep.subr.bf16.mxu0 0
      %961 = vmatpush1.bf16.msra.mxu0 0
      %962 = vmatprep.subr.bf16.mxu0 0
      %963 = vmatpush1.bf16.msra.mxu0 0
      %964 = vmatprep.subr.bf16.mxu0 0
      %965 = vmatpush1.bf16.msra.mxu0 0
      %966 = vmatprep.subr.bf16.mxu0 0
      %967 = vmatpush1.bf16.msra.mxu0 0
      %968 = vmatprep.subr.bf16.mxu0 0
      %969 = vmatpush1.bf16.msra.mxu0 0
      %970 = vmatprep.subr.bf16.mxu0 0
      %971 = vmatpush1.bf16.msra.mxu0 0
      %972 = vmatprep.subr.bf16.mxu0 0
      %973 = vmatpush1.bf16.msra.mxu0 0
      %974 = vmatprep.subr.bf16.mxu0 0
      %975 = vmatpush1.bf16.msra.mxu0 0
      %976 = vmatprep.subr.bf16.mxu0 0
      %977 = vmatpush1.bf16.msra.mxu0 0
      %978 = vmatprep.subr.bf16.mxu0 0
      %979 = vmatpush1.bf16.msra.mxu0 0
      %980 = vmatprep.mubr.bf16.mxu0 0
      %981 = vmatmul.mubr.bf16.gmra.mrb[0].mxu0 %v946
      %v982 = vpop.f32.mrb[0].mxu0
      %v983 = vadd.f32 0.0, %v982
      %v984 = vpop.f32.mrb[0].mxu0
      %v985 = vpop.f32.mrb[0].mxu0
      %v986 = vadd.f32 0.0, %v985
      %v987 = vpop.f32.mrb[0].mxu0
      %988 = vdwg.mxu0
      %989 = vrot.lane.b32.xlu0 %v613, 80
      %v990 = vpop.permute.xlu0 %989
      %991 = vrot.lane.b32.xlu0 %v614, 80
      %v992 = vpop.permute.xlu0 %991
      %v994 = vsel %vm615, %v990, 0
      %v997 = vsel %vm615, %v992, 0
      %999 = vmatprep.subr.bf16.mxu0 0
      %1000 = vmatpush1.bf16.xpose.msra.mxu0 %v997
      %1001 = vmatprep.subr.bf16.mxu0 0
      %1002 = vmatpush1.bf16.xpose.msra.mxu0 0
      %1003 = vmatprep.subr.bf16.mxu0 0
      %1004 = vmatpush1.bf16.xpose.msra.mxu0 0
      %1005 = vmatprep.subr.bf16.mxu0 0
      %1006 = vmatpush1.bf16.xpose.msra.mxu0 0
      %1007 = vmatprep.subr.bf16.mxu0 0
      %1008 = vmatpush1.bf16.xpose.msra.mxu0 0
      %1009 = vmatprep.subr.bf16.mxu0 0
      %1010 = vmatpush1.bf16.xpose.msra.mxu0 0
      %1011 = vmatprep.subr.bf16.mxu0 0
      %1012 = vmatpush1.bf16.xpose.msra.mxu0 0
      %1013 = vmatprep.subr.bf16.mxu0 0
      %1014 = vmatpush1.bf16.xpose.msra.mxu0 0
      %1015 = vmatprep.subr.bf16.mxu0 0
      %1016 = vmatpush1.bf16.xpose.msra.mxu0 0
      %1017 = vmatprep.subr.bf16.mxu0 0
      %1018 = vmatpush1.bf16.xpose.msra.mxu0 0
      %1019 = vmatprep.subr.bf16.mxu0 0
      %1020 = vmatpush1.bf16.xpose.msra.mxu0 0
      %1021 = vmatprep.subr.bf16.mxu0 0
      %1022 = vmatpush1.bf16.xpose.msra.mxu0 0
      %1023 = vmatprep.subr.bf16.mxu0 0
      %1024 = vmatpush1.bf16.xpose.msra.mxu0 0
      %1025 = vmatprep.subr.bf16.mxu0 0
      %1026 = vmatpush1.bf16.xpose.msra.mxu0 0
      %1027 = vmatprep.subr.bf16.mxu0 0
      %1028 = vmatpush1.bf16.xpose.msra.mxu0 0
      %1029 = vmatprep.subr.bf16.mxu0 0
      %1030 = vmatpush1.bf16.xpose.msra.mxu0 0
      %1031 = vmatprep.mubr.bf16.mxu0 0
      %1032 = vmatmul.mubr.bf16.gmra.mrb[0].mxu0 %v994
      %v1033 = vpop.f32.mrb[0].mxu0
      %v1034 = vadd.f32 0.0, %v1033
      %v1035 = vpop.f32.mrb[0].mxu0
      %v1036 = vpop.f32.mrb[0].mxu0
      %v1037 = vadd.f32 0.0, %v1036
      %v1038 = vpop.f32.mrb[0].mxu0
      %1039 = vdwg.mxu0
      %v1040 = vmul.f32 %v1034, 0.25
      %v1041 = vmul.f32 %v1037, 0.25
      %v1042 = vadd.f32 %v1040, %v611
      %v1043 = vadd.f32 %v1041, %v612
      %v1044 = vsel %vm615, %v1042, -inf
      %1045 = vmax.xlane.f32.xlu0 %v1044
      %v1046 = vpop.xlane.xlu0 %1045
      %v1047 = vsel %vm615, %v1043, -inf
      %1048 = vmax.xlane.f32.xlu0 %v1047
      %v1049 = vpop.xlane.xlu0 %1048
      %v1050 = vsub.f32 %v1042, %v1046
      %v1051 = vsub.f32 %v1043, %v1049
      %v1052 = vmul.f32 %v1050, 1.442695
      %v1053 = vpow.pop %v1052
      %v1054 = vmul.f32 %v1051, 1.442695
      %v1055 = vpow.pop %v1054
      %v1056 = vsel %vm615, %v1053, 0.0
      %1057 = vadd.xlane.f32.xlu0 %v1056
      %v1058 = vpop.xlane.xlu0 %1057
      %v1059 = vsel %vm615, %v1055, 0.0
      %1060 = vadd.xlane.f32.xlu0 %v1059
      %v1061 = vpop.xlane.xlu0 %1060
      %v1062 = vrcp.pop %v1058
      %v1063 = vrcp.pop %v1061
      %v1064 = vmul.f32 %v1053, %v1062
      %v1065 = vmul.f32 %v1055, %v1063
      %v1066 = vpack.c.bf16 %v1065, %v1064
      %1067 = vrot.lane.b32.xlu0 %v614, 16
      %v1068 = vpop.permute.xlu0 %1067
      %v1071 = vsel %vm615, %v1066, 0
      %1073 = vmatprep.subr.bf16.mxu0 0
      %1074 = vmatpush1.bf16.msra.mxu0 %v1068
      %1075 = vmatprep.subr.bf16.mxu0 0
      %1076 = vmatpush1.bf16.msra.mxu0 0
      %1077 = vmatprep.subr.bf16.mxu0 0
      %1078 = vmatpush1.bf16.msra.mxu0 0
      %1079 = vmatprep.subr.bf16.mxu0 0
      %1080 = vmatpush1.bf16.msra.mxu0 0
      %1081 = vmatprep.subr.bf16.mxu0 0
      %1082 = vmatpush1.bf16.msra.mxu0 0
      %1083 = vmatprep.subr.bf16.mxu0 0
      %1084 = vmatpush1.bf16.msra.mxu0 0
      %1085 = vmatprep.subr.bf16.mxu0 0
      %1086 = vmatpush1.bf16.msra.mxu0 0
      %1087 = vmatprep.subr.bf16.mxu0 0
      %1088 = vmatpush1.bf16.msra.mxu0 0
      %1089 = vmatprep.subr.bf16.mxu0 0
      %1090 = vmatpush1.bf16.msra.mxu0 0
      %1091 = vmatprep.subr.bf16.mxu0 0
      %1092 = vmatpush1.bf16.msra.mxu0 0
      %1093 = vmatprep.subr.bf16.mxu0 0
      %1094 = vmatpush1.bf16.msra.mxu0 0
      %1095 = vmatprep.subr.bf16.mxu0 0
      %1096 = vmatpush1.bf16.msra.mxu0 0
      %1097 = vmatprep.subr.bf16.mxu0 0
      %1098 = vmatpush1.bf16.msra.mxu0 0
      %1099 = vmatprep.subr.bf16.mxu0 0
      %1100 = vmatpush1.bf16.msra.mxu0 0
      %1101 = vmatprep.subr.bf16.mxu0 0
      %1102 = vmatpush1.bf16.msra.mxu0 0
      %1103 = vmatprep.subr.bf16.mxu0 0
      %1104 = vmatpush1.bf16.msra.mxu0 0
      %1105 = vmatprep.mubr.bf16.mxu0 0
      %1106 = vmatmul.mubr.bf16.gmra.mrb[0].mxu0 %v1071
      %v1107 = vpop.f32.mrb[0].mxu0
      %v1108 = vadd.f32 0.0, %v1107
      %v1109 = vpop.f32.mrb[0].mxu0
      %v1110 = vpop.f32.mrb[0].mxu0
      %v1111 = vadd.f32 0.0, %v1110
      %v1112 = vpop.f32.mrb[0].mxu0
      %1113 = vdwg.mxu0
      %1116 = vrot.lane.b32.xlu0 %v858, 16
      %v1117 = vpop.permute.xlu0 %1116
      %1118 = vrot.lane.b32.xlu0 %v861, 16
      %v1119 = vpop.permute.xlu0 %1118
      %1124 = vrot.lane.b32.xlu0 %v983, 32
      %v1125 = vpop.permute.xlu0 %1124
      %1126 = vrot.lane.b32.xlu0 %v986, 32
      %v1127 = vpop.permute.xlu0 %1126
      %1132 = vrot.lane.b32.xlu0 %v1108, 48
      %v1133 = vpop.permute.xlu0 %1132
      %1134 = vrot.lane.b32.xlu0 %v1111, 48
      %v1135 = vpop.permute.xlu0 %1134
      %v1138 = vsel %vm615, %v732, %v1117
      %v1139 = vsel %vm615, %v735, %v1119
      %vm1140 = vcmask 261120
      %v1141 = vsel %vm1140, %v1138, %v1125
      %v1142 = vsel %vm1140, %v1139, %v1127
      %vm1143 = vcmask 392192
      %v1144 = vsel %vm1143, %v1141, %v1133
      %v1145 = vsel %vm1143, %v1142, %v1135
      %v1146 = vpack.c.bf16 %v1145, %v1144
      %v1147 = vld [vmem:[%s7] sm:$0xf]
      %v1148 = vld [vmem:[%s7 + $0x4] sm:$0xf]
      %v1149 = vld [vmem:[%s7 + $0x8] sm:$0xf]
      %v1150 = vld [vmem:[%s7 + $0xc] sm:$0xf]
      %v1151 = vld [vmem:[%s7 + $0x10] sm:$0xf]
      %v1152 = vld [vmem:[%s7 + $0x14] sm:$0xf]
      %v1153 = vld [vmem:[%s7 + $0x18] sm:$0xf]
      %v1154 = vld [vmem:[%s7 + $0x1c] sm:$0xf]
      %v1155 = vld [vmem:[%s8] sm:$0x1]
      %v1157 = vlaneseq
      %v1158 = vshrl.u32 %v1157, 7
      %v1159 = vsub.s32 0, %v1158
      %v1160 = vrot.slane %v1155, %v1159
      %v1170 = vunpack.c.l.b16 %v1147
      %v1171 = vunpack.c.l.b16 %v1148
      %v1172 = vunpack.c.l.b16 %v1149
      %v1173 = vunpack.c.l.b16 %v1150
      %v1174 = vunpack.c.l.b16 %v1151
      %v1175 = vunpack.c.l.b16 %v1152
      %v1176 = vunpack.c.l.b16 %v1153
      %v1177 = vunpack.c.l.b16 %v1154
      %v1178 = vpack.c.b16 %v1171, %v1170
      %v1179 = vpack.c.b16 %v1173, %v1172
      %v1180 = vpack.c.b16 %v1175, %v1174
      %v1181 = vpack.c.b16 %v1177, %v1176
      %v1187 = vsel %vm466, %v1146, 0
      %1189 = vmatprep.subr.bf16.mxu0 0
      %1190 = vmatpush1.bf16.msra.mxu0 %v1178
      %1191 = vmatprep.subr.bf16.mxu0 0
      %1192 = vmatpush1.bf16.msra.mxu0 %v1179
      %1193 = vmatprep.subr.bf16.mxu0 0
      %1194 = vmatpush1.bf16.msra.mxu0 %v1180
      %1195 = vmatprep.subr.bf16.mxu0 0
      %1196 = vmatpush1.bf16.msra.mxu0 %v1181
      %1197 = vmatprep.subr.bf16.mxu0 0
      %1198 = vmatpush1.bf16.msra.mxu0 0
      %1199 = vmatprep.subr.bf16.mxu0 0
      %1200 = vmatpush1.bf16.msra.mxu0 0
      %1201 = vmatprep.subr.bf16.mxu0 0
      %1202 = vmatpush1.bf16.msra.mxu0 0
      %1203 = vmatprep.subr.bf16.mxu0 0
      %1204 = vmatpush1.bf16.msra.mxu0 0
      %1205 = vmatprep.subr.bf16.mxu0 0
      %1206 = vmatpush1.bf16.msra.mxu0 0
      %1207 = vmatprep.subr.bf16.mxu0 0
      %1208 = vmatpush1.bf16.msra.mxu0 0
      %1209 = vmatprep.subr.bf16.mxu0 0
      %1210 = vmatpush1.bf16.msra.mxu0 0
      %1211 = vmatprep.subr.bf16.mxu0 0
      %1212 = vmatpush1.bf16.msra.mxu0 0
      %1213 = vmatprep.subr.bf16.mxu0 0
      %1214 = vmatpush1.bf16.msra.mxu0 0
      %1215 = vmatprep.subr.bf16.mxu0 0
      %1216 = vmatpush1.bf16.msra.mxu0 0
      %1217 = vmatprep.subr.bf16.mxu0 0
      %1218 = vmatpush1.bf16.msra.mxu0 0
      %1219 = vmatprep.subr.bf16.mxu0 0
      %1220 = vmatpush1.bf16.msra.mxu0 0
      %1221 = vmatprep.mubr.bf16.mxu0 0
      %1222 = vmatmul.mubr.bf16.gmra.mrb[0].mxu0 %v1187
      %v1223 = vpop.f32.mrb[0].mxu0
      %v1224 = vadd.f32 %v1160, %v1223
      %v1225 = vpop.f32.mrb[0].mxu0
      %v1226 = vpop.f32.mrb[0].mxu0
      %v1227 = vadd.f32 %v1160, %v1226
      %v1228 = vpop.f32.mrb[0].mxu0
      %1229 = vdwg.mxu0
      %v1230 = vadd.f32 %v422, %v1224
      %v1231 = vadd.f32 %v423, %v1227
      %v1232 = vsel %vm466, %v1230, 0.0
      %1233 = vadd.xlane.f32.xlu0 %v1232
      %v1234 = vpop.xlane.xlu0 %1233
      %v1235 = vsel %vm466, %v1231, 0.0
      %1236 = vadd.xlane.f32.xlu0 %v1235
      %v1237 = vpop.xlane.xlu0 %1236
      %v1238 = vrcp.pop 64.0
      %v1239 = vmul.f32 %v1234, %v1238
      %v1240 = vmul.f32 %v1237, %v1238
      %v1241 = vsub.f32 %v1230, %v1239
      %v1242 = vsub.f32 %v1231, %v1240
      %v1243 = vmul.f32 %v1241, %v1241
      %v1244 = vmul.f32 %v1242, %v1242
      %v1245 = vsel %vm466, %v1243, 0.0
      %1246 = vadd.xlane.f32.xlu0 %v1245
      %v1247 = vpop.xlane.xlu0 %1246
      %v1248 = vsel %vm466, %v1244, 0.0
      %1249 = vadd.xlane.f32.xlu0 %v1248
      %v1250 = vpop.xlane.xlu0 %1249
      %v1251 = vmul.f32 %v1247, %v1238
      %v1252 = vmul.f32 %v1250, %v1238
      %v1253 = vadd.f32 %v1251, 1e-05
      %v1254 = vadd.f32 %v1252, 1e-05
      %v1255 = vrsqrt.pop %v1253
      %v1256 = vrsqrt.pop %v1254
      %v1257 = vmul.f32 %v1241, %v1255
      %v1258 = vmul.f32 %v1242, %v1256
      %v1259 = vld [vmem:[%s9] sm:$0x1]
      %v1261 = vlaneseq
      %v1262 = vshrl.u32 %v1261, 7
      %v1263 = vsub.s32 0, %v1262
      %v1264 = vrot.slane %v1259, %v1263
      %v1266 = vmul.f32 %v1257, %v1264
      %v1267 = vmul.f32 %v1258, %v1264
      %v1268 = vld [vmem:[%s10] sm:$0x1]
      %v1270 = vlaneseq
      %v1271 = vshrl.u32 %v1270, 7
      %v1272 = vsub.s32 0, %v1271
      %v1273 = vrot.slane %v1268, %v1272
      %v1275 = vadd.f32 %v1266, %v1273
      %v1276 = vadd.f32 %v1267, %v1273
      %1277 = vst.msk [vmem:[%s420] sm:$0xff] %vm466, %v1275
      %1278 = vst.msk [vmem:[%s420 + $0x8] sm:$0xff] %vm466, %v1276
      %p1279 = scmp.lt.s32.totalorder %s22, 1
      %s1280 = scalar_select %p1279, %s22, 1
      %s1281 = smul.addr %s1280, 2
      %s1282 = smul.addr %s1281, 8
      %s1283 = scalar_lea.vmem %s11, %s1282
      // Predicated region
      $region65: #{seq2seq_forward.4} parent=63 // pred_check
        %p1284 = pneg %p286
      $region66: #{seq2seq_forward.4} parent=63 // pred_check_branch
        %1286 = sbr.rel (%p1284) target = $region68
      $region67: #{seq2seq_forward.4} parent=63 // pred_region
        _
      $region68: #{seq2seq_forward.4} parent=63 // pred_fallthru
        _
    $region64: #{seq2seq_forward.4} parent=5 // pred_fallthru
      _
    %p1287 = scmp.le.s32.totalorder 2, %s17
    // Predicated region
    $region69: #{seq2seq_forward.4} parent=5 // pred_check
      %p1288 = pneg %p1287
    $region70: #{seq2seq_forward.4} parent=5 // pred_check_branch
      %1290 = sbr.rel (%p1288) target = $region72
    $region71: #{seq2seq_forward.4} parent=5 // pred_region
      %s1291 = ssub.s32 %s17, 2
      // Predicated region
      $region73: #{seq2seq_forward.4} parent=71 // pred_check
        %p1292 = pneg %p292
      $region74: #{seq2seq_forward.4} parent=71 // pred_check_branch
        %1294 = sbr.rel (%p1292) target = $region76
      $region75: #{seq2seq_forward.4} parent=71 // pred_region
        %p1295 = scmp.lt.s32.totalorder %s23, 1
        %s1296 = scalar_select %p1295, %s23, 1
        %s1297 = smul.addr %s1296, 2
        %s1298 = smul.addr %s1297, 8
        %s1299 = scalar_lea.vmem %s11, %s1298
      $region76: #{seq2seq_forward.4} parent=71 // pred_fallthru
        _
    $region72: #{seq2seq_forward.4} parent=5 // pred_fallthru
      _
  $region6: #{seq2seq_forward.4} parent=0 // loop_footer
    %s21 = sadd.s32 1, %s17
  $region7: #{seq2seq_forward.4} parent=0 // loop_footer_branch
    %16 = sbr.rel target = $region3
  $region8: #{seq2seq_forward.4} parent=0 // loop_exit
    _

// kernel: seq2seq_forward.5
$region0: #{seq2seq_forward.5}
  #allocation0 [shape = 'u32[]', space=smem, size = 0x4, offset = 0x4, fixed_abs, tag = 'smem constant byte address 0x4 - core index']
  #allocation1 [shape = 'u32[144,128]{1,0:T(1,128)}', space=vmem, size = 0x12000, scoped, tag = 'internal scratch']
  %s0 = inlined_call_operand.vmem [shape: f32[2,16,64], index: 0, kind: input, shape index: {}]
  %s1 = inlined_call_operand.vmem [shape: f32[2,16,64], index: 1, kind: input, shape index: {}]
  %s2 = inlined_call_operand.vmem [shape: f32[2,1,16], index: 2, kind: input, shape index: {}]
  %s3 = inlined_call_operand.vmem [shape: bf16[64,64], index: 3, kind: input, shape index: {}]
  %s4 = inlined_call_operand.vmem [shape: f32[1,64], index: 4, kind: input, shape index: {}]
  %s5 = inlined_call_operand.vmem [shape: bf16[64,128], index: 5, kind: input, shape index: {}]
  %s6 = inlined_call_operand.vmem [shape: f32[1,128], index: 6, kind: input, shape index: {}]
  %s7 = inlined_call_operand.vmem [shape: bf16[64,64], index: 7, kind: input, shape index: {}]
  %s8 = inlined_call_operand.vmem [shape: f32[1,64], index: 8, kind: input, shape index: {}]
  %s9 = inlined_call_operand.vmem [shape: f32[1,64], index: 9, kind: input, shape index: {}]
  %s10 = inlined_call_operand.vmem [shape: f32[1,64], index: 10, kind: input, shape index: {}]
  %s11 = inlined_call_operand.vmem [shape: f32[2,16,64], index: 11, kind: output, shape index: {}]
  %s12 = sld [smem:[#allocation0]]
  $region77: #{seq2seq_forward.5} parent=0
    _
  %s14 = ssub.s32 1, %s12
  %s15 = scalar_select 0, %s14, %s12
  loop: start=0, step=1, limit=4
  $region2: #{seq2seq_forward.5} parent=0 // loop_pre_header
    _
  $region3: #{seq2seq_forward.5} parent=0 // loop_header
    %s17 = sphi 0, %s21
    %p18 = scmp.ge.s32.totalorder %s17, 4
    %s27 = sphi 0, %s29
    %s30 = sphi 0, %s27
    %s31 = sphi 0, %s30
    %s47 = sphi 0, %s31
    %s53 = sphi 0, %s55
    %s56 = sphi 0, %s53
    %s57 = sphi 0, %s56
    %s73 = sphi 0, %s57
    %s79 = sphi 0, %s81
    %s82 = sphi 0, %s79
    %s83 = sphi 0, %s82
    %s99 = sphi 0, %s83
    %s103 = sphi 0, %s103
    %s105 = sphi 0, %s103
    %s106 = sphi 0, %s105
    %s120 = sphi 0, %s106
    %s124 = sphi 0, %s124
    %s126 = sphi 0, %s124
    %s127 = sphi 0, %s126
    %s141 = sphi 0, %s127
    %s145 = sphi 0, %s145
    %s147 = sphi 0, %s145
    %s148 = sphi 0, %s147
    %s162 = sphi 0, %s148
    %s166 = sphi 0, %s166
    %s168 = sphi 0, %s166
    %s169 = sphi 0, %s168
    %s183 = sphi 0, %s169
    %s187 = sphi 0, %s187
    %s189 = sphi 0, %s187
    %s190 = sphi 0, %s189
    %s204 = sphi 0, %s190
    %s208 = sphi 0, %s208
    %s210 = sphi 0, %s208
    %s211 = sphi 0, %s210
    %s225 = sphi 0, %s211
    %s229 = sphi 0, %s229
    %s231 = sphi 0, %s229
    %s232 = sphi 0, %s231
    %s246 = sphi 0, %s232
    %s250 = sphi 0, %s250
    %s252 = sphi 0, %s250
    %s253 = sphi 0, %s252
    %s267 = sphi 0, %s253
    %s273 = sphi 0, %s275
    %s276 = sphi 0, %s273
    %s277 = sphi 0, %s276
    %s293 = sphi 0, %s277
  $region4: #{seq2seq_forward.5} parent=0 // loop_header_branch
    %20 = sbr.rel (%p18) target = $region8
  $region5: #{seq2seq_forward.5} parent=0 // loop_body
    %s22 = ssub.s32 %s17, 1
    %s23 = ssub.s32 %s17, 2
    %s24 = sadd.s32 %s17, 1
    %s25 = ssub.s32 %s17, %s24
    %p26 = scmp.eq.s32.totalorder %s25, 0
    %s28 = sadd.s32 %s27, 1
    %s29 = scalar_select %p26, %s27, %s28
    %p32 = pneg %p26
    %p33 = scmp.eq.s32.totalorder %s17, 1
    %p34 = por %p32, %p33
    %p35 = scmp.ne.s32.totalorder %s27, %s30
    %p36 = scmp.eq.s32.totalorder %s17, 0
    %p37 = por %p35, %p36
    %p38 = scmp.ne.s32.totalorder %s27, %s30
    %p39 = scmp.eq.s32.totalorder %s22, 1
    %p40 = por %p38, %p39
    %p41 = scmp.ne.s32.totalorder %s30, %s31
    %p42 = scmp.eq.s32.totalorder %s22, 0
    %p43 = por %p41, %p42
    %p44 = scmp.ne.s32.totalorder %s30, %s31
    %p45 = scmp.eq.s32.totalorder %s23, 1
    %p46 = por %p44, %p45
    %p48 = scmp.ne.s32.totalorder %s31, %s47
    %p49 = scmp.eq.s32.totalorder %s23, 0
    %p50 = por %p48, %p49
    %s51 = ssub.s32 %s17, %s24
    %p52 = scmp.eq.s32.totalorder %s51, 0
    %s54 = sadd.s32 %s53, 1
    %s55 = scalar_select %p52, %s53, %s54
    %p58 = pneg %p52
    %p59 = scmp.eq.s32.totalorder %s17, 1
    %p60 = por %p58, %p59
    %p61 = scmp.ne.s32.totalorder %s53, %s56
    %p62 = scmp.eq.s32.totalorder %s17, 0
    %p63 = por %p61, %p62
    %p64 = scmp.ne.s32.totalorder %s53, %s56
    %p65 = scmp.eq.s32.totalorder %s22, 1
    %p66 = por %p64, %p65
    %p67 = scmp.ne.s32.totalorder %s56, %s57
    %p68 = scmp.eq.s32.totalorder %s22, 0
    %p69 = por %p67, %p68
    %p70 = scmp.ne.s32.totalorder %s56, %s57
    %p71 = scmp.eq.s32.totalorder %s23, 1
    %p72 = por %p70, %p71
    %p74 = scmp.ne.s32.totalorder %s57, %s73
    %p75 = scmp.eq.s32.totalorder %s23, 0
    %p76 = por %p74, %p75
    %s77 = ssub.s32 %s17, %s24
    %p78 = scmp.eq.s32.totalorder %s77, 0
    %s80 = sadd.s32 %s79, 1
    %s81 = scalar_select %p78, %s79, %s80
    %p84 = pneg %p78
    %p85 = scmp.eq.s32.totalorder %s17, 1
    %p86 = por %p84, %p85
    %p87 = scmp.ne.s32.totalorder %s79, %s82
    %p88 = scmp.eq.s32.totalorder %s17, 0
    %p89 = por %p87, %p88
    %p90 = scmp.ne.s32.totalorder %s79, %s82
    %p91 = scmp.eq.s32.totalorder %s22, 1
    %p92 = por %p90, %p91
    %p93 = scmp.ne.s32.totalorder %s82, %s83
    %p94 = scmp.eq.s32.totalorder %s22, 0
    %p95 = por %p93, %p94
    %p96 = scmp.ne.s32.totalorder %s82, %s83
    %p97 = scmp.eq.s32.totalorder %s23, 1
    %p98 = por %p96, %p97
    %p100 = scmp.ne.s32.totalorder %s83, %s99
    %p101 = scmp.eq.s32.totalorder %s23, 0
    %p102 = por %p100, %p101
    %s104 = sadd.s32 %s103, 1
    %p107 = scmp.eq.s32.totalorder %s17, 1
    %p108 = scmp.ne.s32.totalorder %s103, %s105
    %p109 = scmp.eq.s32.totalorder %s17, 0
    %p110 = por %p108, %p109
    %p111 = scmp.ne.s32.totalorder %s103, %s105
    %p112 = scmp.eq.s32.totalorder %s22, 1
    %p113 = por %p111, %p112
    %p114 = scmp.ne.s32.totalorder %s105, %s106
    %p115 = scmp.eq.s32.totalorder %s22, 0
    %p116 = por %p114, %p115
    %p117 = scmp.ne.s32.totalorder %s105, %s106
    %p118 = scmp.eq.s32.totalorder %s23, 1
    %p119 = por %p117, %p118
    %p121 = scmp.ne.s32.totalorder %s106, %s120
    %p122 = scmp.eq.s32.totalorder %s23, 0
    %p123 = por %p121, %p122
    %s125 = sadd.s32 %s124, 1
    %p128 = scmp.eq.s32.totalorder %s17, 1
    %p129 = scmp.ne.s32.totalorder %s124, %s126
    %p130 = scmp.eq.s32.totalorder %s17, 0
    %p131 = por %p129, %p130
    %p132 = scmp.ne.s32.totalorder %s124, %s126
    %p133 = scmp.eq.s32.totalorder %s22, 1
    %p134 = por %p132, %p133
    %p135 = scmp.ne.s32.totalorder %s126, %s127
    %p136 = scmp.eq.s32.totalorder %s22, 0
    %p137 = por %p135, %p136
    %p138 = scmp.ne.s32.totalorder %s126, %s127
    %p139 = scmp.eq.s32.totalorder %s23, 1
    %p140 = por %p138, %p139
    %p142 = scmp.ne.s32.totalorder %s127, %s141
    %p143 = scmp.eq.s32.totalorder %s23, 0
    %p144 = por %p142, %p143
    %s146 = sadd.s32 %s145, 1
    %p149 = scmp.eq.s32.totalorder %s17, 1
    %p150 = scmp.ne.s32.totalorder %s145, %s147
    %p151 = scmp.eq.s32.totalorder %s17, 0
    %p152 = por %p150, %p151
    %p153 = scmp.ne.s32.totalorder %s145, %s147
    %p154 = scmp.eq.s32.totalorder %s22, 1
    %p155 = por %p153, %p154
    %p156 = scmp.ne.s32.totalorder %s147, %s148
    %p157 = scmp.eq.s32.totalorder %s22, 0
    %p158 = por %p156, %p157
    %p159 = scmp.ne.s32.totalorder %s147, %s148
    %p160 = scmp.eq.s32.totalorder %s23, 1
    %p161 = por %p159, %p160
    %p163 = scmp.ne.s32.totalorder %s148, %s162
    %p164 = scmp.eq.s32.totalorder %s23, 0
    %p165 = por %p163, %p164
    %s167 = sadd.s32 %s166, 1
    %p170 = scmp.eq.s32.totalorder %s17, 1
    %p171 = scmp.ne.s32.totalorder %s166, %s168
    %p172 = scmp.eq.s32.totalorder %s17, 0
    %p173 = por %p171, %p172
    %p174 = scmp.ne.s32.totalorder %s166, %s168
    %p175 = scmp.eq.s32.totalorder %s22, 1
    %p176 = por %p174, %p175
    %p177 = scmp.ne.s32.totalorder %s168, %s169
    %p178 = scmp.eq.s32.totalorder %s22, 0
    %p179 = por %p177, %p178
    %p180 = scmp.ne.s32.totalorder %s168, %s169
    %p181 = scmp.eq.s32.totalorder %s23, 1
    %p182 = por %p180, %p181
    %p184 = scmp.ne.s32.totalorder %s169, %s183
    %p185 = scmp.eq.s32.totalorder %s23, 0
    %p186 = por %p184, %p185
    %s188 = sadd.s32 %s187, 1
    %p191 = scmp.eq.s32.totalorder %s17, 1
    %p192 = scmp.ne.s32.totalorder %s187, %s189
    %p193 = scmp.eq.s32.totalorder %s17, 0
    %p194 = por %p192, %p193
    %p195 = scmp.ne.s32.totalorder %s187, %s189
    %p196 = scmp.eq.s32.totalorder %s22, 1
    %p197 = por %p195, %p196
    %p198 = scmp.ne.s32.totalorder %s189, %s190
    %p199 = scmp.eq.s32.totalorder %s22, 0
    %p200 = por %p198, %p199
    %p201 = scmp.ne.s32.totalorder %s189, %s190
    %p202 = scmp.eq.s32.totalorder %s23, 1
    %p203 = por %p201, %p202
    %p205 = scmp.ne.s32.totalorder %s190, %s204
    %p206 = scmp.eq.s32.totalorder %s23, 0
    %p207 = por %p205, %p206
    %s209 = sadd.s32 %s208, 1
    %p212 = scmp.eq.s32.totalorder %s17, 1
    %p213 = scmp.ne.s32.totalorder %s208, %s210
    %p214 = scmp.eq.s32.totalorder %s17, 0
    %p215 = por %p213, %p214
    %p216 = scmp.ne.s32.totalorder %s208, %s210
    %p217 = scmp.eq.s32.totalorder %s22, 1
    %p218 = por %p216, %p217
    %p219 = scmp.ne.s32.totalorder %s210, %s211
    %p220 = scmp.eq.s32.totalorder %s22, 0
    %p221 = por %p219, %p220
    %p222 = scmp.ne.s32.totalorder %s210, %s211
    %p223 = scmp.eq.s32.totalorder %s23, 1
    %p224 = por %p222, %p223
    %p226 = scmp.ne.s32.totalorder %s211, %s225
    %p227 = scmp.eq.s32.totalorder %s23, 0
    %p228 = por %p226, %p227
    %s230 = sadd.s32 %s229, 1
    %p233 = scmp.eq.s32.totalorder %s17, 1
    %p234 = scmp.ne.s32.totalorder %s229, %s231
    %p235 = scmp.eq.s32.totalorder %s17, 0
    %p236 = por %p234, %p235
    %p237 = scmp.ne.s32.totalorder %s229, %s231
    %p238 = scmp.eq.s32.totalorder %s22, 1
    %p239 = por %p237, %p238
    %p240 = scmp.ne.s32.totalorder %s231, %s232
    %p241 = scmp.eq.s32.totalorder %s22, 0
    %p242 = por %p240, %p241
    %p243 = scmp.ne.s32.totalorder %s231, %s232
    %p244 = scmp.eq.s32.totalorder %s23, 1
    %p245 = por %p243, %p244
    %p247 = scmp.ne.s32.totalorder %s232, %s246
    %p248 = scmp.eq.s32.totalorder %s23, 0
    %p249 = por %p247, %p248
    %s251 = sadd.s32 %s250, 1
    %p254 = scmp.eq.s32.totalorder %s17, 1
    %p255 = scmp.ne.s32.totalorder %s250, %s252
    %p256 = scmp.eq.s32.totalorder %s17, 0
    %p257 = por %p255, %p256
    %p258 = scmp.ne.s32.totalorder %s250, %s252
    %p259 = scmp.eq.s32.totalorder %s22, 1
    %p260 = por %p258, %p259
    %p261 = scmp.ne.s32.totalorder %s252, %s253
    %p262 = scmp.eq.s32.totalorder %s22, 0
    %p263 = por %p261, %p262
    %p264 = scmp.ne.s32.totalorder %s252, %s253
    %p265 = scmp.eq.s32.totalorder %s23, 1
    %p266 = por %p264, %p265
    %p268 = scmp.ne.s32.totalorder %s253, %s267
    %p269 = scmp.eq.s32.totalorder %s23, 0
    %p270 = por %p268, %p269
    %s271 = ssub.s32 %s17, %s24
    %p272 = scmp.eq.s32.totalorder %s271, 0
    %s274 = sadd.s32 %s273, 1
    %s275 = scalar_select %p272, %s273, %s274
    %p278 = pneg %p272
    %p279 = scmp.eq.s32.totalorder %s17, 1
    %p280 = por %p278, %p279
    %p281 = scmp.ne.s32.totalorder %s273, %s276
    %p282 = scmp.eq.s32.totalorder %s17, 0
    %p283 = por %p281, %p282
    %p284 = scmp.ne.s32.totalorder %s273, %s276
    %p285 = scmp.eq.s32.totalorder %s22, 1
    %p286 = por %p284, %p285
    %p287 = scmp.ne.s32.totalorder %s276, %s277
    %p288 = scmp.eq.s32.totalorder %s22, 0
    %p289 = por %p287, %p288
    %p290 = scmp.ne.s32.totalorder %s276, %s277
    %p291 = scmp.eq.s32.totalorder %s23, 1
    %p292 = por %p290, %p291
    %p294 = scmp.ne.s32.totalorder %s277, %s293
    %p295 = scmp.eq.s32.totalorder %s23, 0
    %p296 = por %p294, %p295
    %p297 = scmp.le.s32.totalorder 1, %s17
    %p298 = scmp.lt.s32.totalorder %s17, 3
    %p299 = pnand %p297, %p298
    %p300 = pneg %p299
    // Predicated region
    $region9: #{seq2seq_forward.5} parent=5 // pred_check
      _
    $region10: #{seq2seq_forward.5} parent=5 // pred_check_branch
      %302 = sbr.rel (%p299) target = $region12
    $region11: #{seq2seq_forward.5} parent=5 // pred_region
      %s303 = ssub.s32 %s17, 1
      // Predicated region
      $region13: #{seq2seq_forward.5} parent=11 // pred_check
        %p304 = pneg %p116
      $region14: #{seq2seq_forward.5} parent=11 // pred_check_branch
        %306 = sbr.rel (%p304) target = $region16
      $region15: #{seq2seq_forward.5} parent=11 // pred_region
        _
      $region16: #{seq2seq_forward.5} parent=11 // pred_fallthru
        _
      // Predicated region
      $region17: #{seq2seq_forward.5} parent=11 // pred_check
        %p307 = pneg %p137
      $region18: #{seq2seq_forward.5} parent=11 // pred_check_branch
        %309 = sbr.rel (%p307) target = $region20
      $region19: #{seq2seq_forward.5} parent=11 // pred_region
        _
      $region20: #{seq2seq_forward.5} parent=11 // pred_fallthru
        _
      // Predicated region
      $region21: #{seq2seq_forward.5} parent=11 // pred_check
        %p310 = pneg %p158
      $region22: #{seq2seq_forward.5} parent=11 // pred_check_branch
        %312 = sbr.rel (%p310) target = $region24
      $region23: #{seq2seq_forward.5} parent=11 // pred_region
        _
      $region24: #{seq2seq_forward.5} parent=11 // pred_fallthru
        _
      // Predicated region
      $region25: #{seq2seq_forward.5} parent=11 // pred_check
        %p313 = pneg %p179
      $region26: #{seq2seq_forward.5} parent=11 // pred_check_branch
        %315 = sbr.rel (%p313) target = $region28
      $region27: #{seq2seq_forward.5} parent=11 // pred_region
        _
      $region28: #{seq2seq_forward.5} parent=11 // pred_fallthru
        _
      // Predicated region
      $region29: #{seq2seq_forward.5} parent=11 // pred_check
        %p316 = pneg %p200
      $region30: #{seq2seq_forward.5} parent=11 // pred_check_branch
        %318 = sbr.rel (%p316) target = $region32
      $region31: #{seq2seq_forward.5} parent=11 // pred_region
        _
      $region32: #{seq2seq_forward.5} parent=11 // pred_fallthru
        _
      // Predicated region
      $region33: #{seq2seq_forward.5} parent=11 // pred_check
        %p319 = pneg %p221
      $region34: #{seq2seq_forward.5} parent=11 // pred_check_branch
        %321 = sbr.rel (%p319) target = $region36
      $region35: #{seq2seq_forward.5} parent=11 // pred_region
        _
      $region36: #{seq2seq_forward.5} parent=11 // pred_fallthru
        _
      // Predicated region
      $region37: #{seq2seq_forward.5} parent=11 // pred_check
        %p322 = pneg %p242
      $region38: #{seq2seq_forward.5} parent=11 // pred_check_branch
        %324 = sbr.rel (%p322) target = $region40
      $region39: #{seq2seq_forward.5} parent=11 // pred_region
        _
      $region40: #{seq2seq_forward.5} parent=11 // pred_fallthru
        _
      // Predicated region
      $region41: #{seq2seq_forward.5} parent=11 // pred_check
        %p325 = pneg %p263
      $region42: #{seq2seq_forward.5} parent=11 // pred_check_branch
        %327 = sbr.rel (%p325) target = $region44
      $region43: #{seq2seq_forward.5} parent=11 // pred_region
        _
      $region44: #{seq2seq_forward.5} parent=11 // pred_fallthru
        _
    $region12: #{seq2seq_forward.5} parent=5 // pred_fallthru
      _
    %p328 = scmp.lt.s32.totalorder %s17, 2
    // Predicated region
    $region45: #{seq2seq_forward.5} parent=5 // pred_check
      %p329 = pneg %p328
    $region46: #{seq2seq_forward.5} parent=5 // pred_check_branch
      %331 = sbr.rel (%p329) target = $region48
    $region47: #{seq2seq_forward.5} parent=5 // pred_region
      // Predicated region
      $region49: #{seq2seq_forward.5} parent=47 // pred_check
        %p332 = pneg %p37
      $region50: #{seq2seq_forward.5} parent=47 // pred_check_branch
        %334 = sbr.rel (%p332) target = $region52
      $region51: #{seq2seq_forward.5} parent=47 // pred_region
        %p335 = scmp.lt.s32.totalorder %s17, 1
        %s336 = scalar_select %p335, %s17, 1
        %s337 = smul.addr %s336, 2
        %s338 = smul.addr %s337, 8
        %s339 = scalar_lea.vmem %s0, %s338
      $region52: #{seq2seq_forward.5} parent=47 // pred_fallthru
        _
      // Predicated region
      $region53: #{seq2seq_forward.5} parent=47 // pred_check
        %p340 = pneg %p63
      $region54: #{seq2seq_forward.5} parent=47 // pred_check_branch
        %342 = sbr.rel (%p340) target = $region56
      $region55: #{seq2seq_forward.5} parent=47 // pred_region
        %p343 = scmp.lt.s32.totalorder %s17, 1
        %s344 = scalar_select %p343, %s17, 1
        %s345 = smul.addr %s344, 2
        %s346 = smul.addr %s345, 8
        %s347 = scalar_lea.vmem %s1, %s346
      $region56: #{seq2seq_forward.5} parent=47 // pred_fallthru
        _
      // Predicated region
      $region57: #{seq2seq_forward.5} parent=47 // pred_check
        %p348 = pneg %p89
      $region58: #{seq2seq_forward.5} parent=47 // pred_check_branch
        %350 = sbr.rel (%p348) target = $region60
      $region59: #{seq2seq_forward.5} parent=47 // pred_region
        %p351 = scmp.lt.s32.totalorder %s17, 1
        %s352 = scalar_select %p351, %s17, 1
        %s353 = scalar_lea.vmem %s2, %s352
      $region60: #{seq2seq_forward.5} parent=47 // pred_fallthru
        _
    $region48: #{seq2seq_forward.5} parent=5 // pred_fallthru
      _
    %p354 = scmp.le.s32.totalorder 1, %s17
    %p355 = scmp.lt.s32.totalorder %s17, 3
    %p356 = pnand %p354, %p355
    %p357 = pneg %p356
    // Predicated region
    $region61: #{seq2seq_forward.5} parent=5 // pred_check
      _
    $region62: #{seq2seq_forward.5} parent=5 // pred_check_branch
      %359 = sbr.rel (%p356) target = $region64
    $region63: #{seq2seq_forward.5} parent=5 // pred_region
      %s360 = ssub.s32 %s17, 1
      %p361 = scmp.lt.s32.totalorder %s22, 1
      %s362 = scalar_select %p361, %s22, 1
      %s363 = smul.addr %s362, 2
      %s364 = smul.addr %s363, 8
      %s365 = scalar_lea.vmem %s0, %s364
      %p366 = pneg %p43
      %p367 = pneg %p40
      %p368 = scmp.lt.s32.totalorder %s22, 1
      %s369 = scalar_select %p368, %s22, 1
      %s370 = smul.addr %s369, 2
      %s371 = smul.addr %s370, 8
      %s372 = scalar_lea.vmem %s1, %s371
      %p373 = pneg %p69
      %p374 = pneg %p66
      %p375 = scmp.lt.s32.totalorder %s22, 1
      %s376 = scalar_select %p375, %s22, 1
      %s377 = scalar_lea.vmem %s2, %s376
      %p378 = pneg %p95
      %p379 = pneg %p92
      %p380 = pneg %p116
      %p381 = pneg %p113
      %p382 = pneg %p137
      %p383 = pneg %p134
      %p384 = pneg %p158
      %p385 = pneg %p155
      %p386 = pneg %p179
      %p387 = pneg %p176
      %p388 = pneg %p200
      %p389 = pneg %p197
      %p390 = pneg %p221
      %p391 = pneg %p218
      %p392 = pneg %p242
      %p393 = pneg %p239
      %p394 = pneg %p263
      %p395 = pneg %p260
      %p396 = pneg %p289
      %p397 = pneg %p286
      %p398 = scmp.lt.s32.totalorder %s22, 1
      %s399 = scalar_select %p398, %s22, 1
      %s400 = smul.addr %s399, 2
      %s401 = smul.addr %s400, 8
      %s402 = scalar_lea.vmem %s11, %s401
      %p403 = scmp.lt.s32.totalorder %s22, 1
      %s404 = scalar_select %p403, %s22, 1
      %s405 = smul.addr %s404, 2
      %s406 = smul.addr %s405, 8
      %s407 = scalar_lea.vmem %s0, %s406
      %p408 = scmp.lt.s32.totalorder %s22, 1
      %s409 = scalar_select %p408, %s22, 1
      %s410 = smul.addr %s409, 2
      %s411 = smul.addr %s410, 8
      %s412 = scalar_lea.vmem %s1, %s411
      %p413 = scmp.lt.s32.totalorder %s22, 1
      %s414 = scalar_select %p413, %s22, 1
      %s415 = scalar_lea.vmem %s2, %s414
      %p416 = scmp.lt.s32.totalorder %s22, 1
      %s417 = scalar_select %p416, %s22, 1
      %s418 = smul.addr %s417, 2
      %s419 = smul.addr %s418, 8
      %s420 = scalar_lea.vmem %s11, %s419
      %v422 = vld [vmem:[%s407] sm:$0xff]
      %v423 = vld [vmem:[%s407 + $0x8] sm:$0xff]
      %v424 = vld [vmem:[%s412] sm:$0xff]
      %v425 = vld [vmem:[%s412 + $0x8] sm:$0xff]
      %v426 = vpack.c.bf16 %v423, %v422
      %v427 = vld [vmem:[%s3] sm:$0xf]
      %v428 = vld [vmem:[%s3 + $0x4] sm:$0xf]
      %v429 = vld [vmem:[%s3 + $0x8] sm:$0xf]
      %v430 = vld [vmem:[%s3 + $0xc] sm:$0xf]
      %v431 = vld [vmem:[%s3 + $0x10] sm:$0xf]
      %v432 = vld [vmem:[%s3 + $0x14] sm:$0xf]
      %v433 = vld [vmem:[%s3 + $0x18] sm:$0xf]
      %v434 = vld [vmem:[%s3 + $0x1c] sm:$0xf]
      %v435 = vld [vmem:[%s4] sm:$0x1]
      %v437 = vlaneseq
      %v438 = vshrl.u32 %v437, 7
      %v439 = vsub.s32 0, %v438
      %v440 = vrot.slane %v435, %v439
      %v450 = vunpack.c.l.b16 %v427
      %v451 = vunpack.c.l.b16 %v428
      %v452 = vunpack.c.l.b16 %v429
      %v453 = vunpack.c.l.b16 %v430
      %v454 = vunpack.c.l.b16 %v431
      %v455 = vunpack.c.l.b16 %v432
      %v456 = vunpack.c.l.b16 %v433
      %v457 = vunpack.c.l.b16 %v434
      %v458 = vpack.c.b16 %v451, %v450
      %v459 = vpack.c.b16 %v453, %v452
      %v460 = vpack.c.b16 %v455, %v454
      %v461 = vpack.c.b16 %v457, %v456
      %vm466 = vcmask 523264
      %v468 = vsel %vm466, %v426, 0
      %470 = vmatprep.subr.bf16.mxu0 0
      %471 = vmatpush1.bf16.msra.mxu0 %v458
      %472 = vmatprep.subr.bf16.mxu0 0
      %473 = vmatpush1.bf16.msra.mxu0 %v459
      %474 = vmatprep.subr.bf16.mxu0 0
      %475 = vmatpush1.bf16.msra.mxu0 %v460
      %476 = vmatprep.subr.bf16.mxu0 0
      %477 = vmatpush1.bf16.msra.mxu0 %v461
      %478 = vmatprep.subr.bf16.mxu0 0
      %479 = vmatpush1.bf16.msra.mxu0 0
      %480 = vmatprep.subr.bf16.mxu0 0
      %481 = vmatpush1.bf16.msra.mxu0 0
      %482 = vmatprep.subr.bf16.mxu0 0
      %483 = vmatpush1.bf16.msra.mxu0 0
      %484 = vmatprep.subr.bf16.mxu0 0
      %485 = vmatpush1.bf16.msra.mxu0 0
      %486 = vmatprep.subr.bf16.mxu0 0
      %487 = vmatpush1.bf16.msra.mxu0 0
      %488 = vmatprep.subr.bf16.mxu0 0
      %489 = vmatpush1.bf16.msra.mxu0 0
      %490 = vmatprep.subr.bf16.mxu0 0
      %491 = vmatpush1.bf16.msra.mxu0 0
      %492 = vmatprep.subr.bf16.mxu0 0
      %493 = vmatpush1.bf16.msra.mxu0 0
      %494 = vmatprep.subr.bf16.mxu0 0
      %495 = vmatpush1.bf16.msra.mxu0 0
      %496 = vmatprep.subr.bf16.mxu0 0
      %497 = vmatpush1.bf16.msra.mxu0 0
      %498 = vmatprep.subr.bf16.mxu0 0
      %499 = vmatpush1.bf16.msra.mxu0 0
      %500 = vmatprep.subr.bf16.mxu0 0
      %501 = vmatpush1.bf16.msra.mxu0 0
      %502 = vmatprep.mubr.bf16.mxu0 0
      %503 = vmatmul.mubr.bf16.gmra.mrb[0].mxu0 %v468
      %v504 = vpop.f32.mrb[0].mxu0
      %v505 = vadd.f32 %v440, %v504
      %v506 = vpop.f32.mrb[0].mxu0
      %v507 = vpop.f32.mrb[0].mxu0
      %v508 = vadd.f32 %v440, %v507
      %v509 = vpop.f32.mrb[0].mxu0
      %510 = vdwg.mxu0
      %v511 = vpack.c.bf16 %v425, %v424
      %v512 = vld [vmem:[%s5] sm:$0xf]
      %v513 = vld [vmem:[%s5 + $0x4] sm:$0xf]
      %v514 = vld [vmem:[%s5 + $0x8] sm:$0xf]
      %v515 = vld [vmem:[%s5 + $0xc] sm:$0xf]
      %v516 = vld [vmem:[%s5 + $0x10] sm:$0xf]
      %v517 = vld [vmem:[%s5 + $0x14] sm:$0xf]
      %v518 = vld [vmem:[%s5 + $0x18] sm:$0xf]
      %v519 = vld [vmem:[%s5 + $0x1c] sm:$0xf]
      %v520 = vld [vmem:[%s6] sm:$0x1]
      %v522 = vlaneseq
      %v523 = vshrl.u32 %v522, 7
      %v524 = vsub.s32 0, %v523
      %v525 = vrot.slane %v520, %v524
      %v535 = vunpack.c.l.b16 %v512
      %v536 = vunpack.c.l.b16 %v513
      %v537 = vunpack.c.l.b16 %v514
      %v538 = vunpack.c.l.b16 %v515
      %v539 = vunpack.c.l.b16 %v516
      %v540 = vunpack.c.l.b16 %v517
      %v541 = vunpack.c.l.b16 %v518
      %v542 = vunpack.c.l.b16 %v519
      %v543 = vpack.c.b16 %v536, %v535
      %v544 = vpack.c.b16 %v538, %v537
      %v545 = vpack.c.b16 %v540, %v539
      %v546 = vpack.c.b16 %v542, %v541
      %v552 = vsel %vm466, %v511, 0
      %554 = vmatprep.subr.bf16.mxu0 0
      %555 = vmatpush1.bf16.msra.mxu0 %v543
      %556 = vmatprep.subr.bf16.mxu0 0
      %557 = vmatpush1.bf16.msra.mxu0 %v544
      %558 = vmatprep.subr.bf16.mxu0 0
      %559 = vmatpush1.bf16.msra.mxu0 %v545
      %560 = vmatprep.subr.bf16.mxu0 0
      %561 = vmatpush1.bf16.msra.mxu0 %v546
      %562 = vmatprep.subr.bf16.mxu0 0
      %563 = vmatpush1.bf16.msra.mxu0 0
      %564 = vmatprep.subr.bf16.mxu0 0
      %565 = vmatpush1.bf16.msra.mxu0 0
      %566 = vmatprep.subr.bf16.mxu0 0
      %567 = vmatpush1.bf16.msra.mxu0 0
      %568 = vmatprep.subr.bf16.mxu0 0
      %569 = vmatpush1.bf16.msra.mxu0 0
      %570 = vmatprep.subr.bf16.mxu0 0
      %571 = vmatpush1.bf16.msra.mxu0 0
      %572 = vmatprep.subr.bf16.mxu0 0
      %573 = vmatpush1.bf16.msra.mxu0 0
      %574 = vmatprep.subr.bf16.mxu0 0
      %575 = vmatpush1.bf16.msra.mxu0 0
      %576 = vmatprep.subr.bf16.mxu0 0
      %577 = vmatpush1.bf16.msra.mxu0 0
      %578 = vmatprep.subr.bf16.mxu0 0
      %579 = vmatpush1.bf16.msra.mxu0 0
      %580 = vmatprep.subr.bf16.mxu0 0
      %581 = vmatpush1.bf16.msra.mxu0 0
      %582 = vmatprep.subr.bf16.mxu0 0
      %583 = vmatpush1.bf16.msra.mxu0 0
      %584 = vmatprep.subr.bf16.mxu0 0
      %585 = vmatpush1.bf16.msra.mxu0 0
      %586 = vmatprep.mubr.bf16.mxu0 0
      %587 = vmatmul.mubr.bf16.gmra.mrb[0].mxu0 %v552
      %v588 = vpop.f32.mrb[0].mxu0
      %v589 = vadd.f32 %v525, %v588
      %v590 = vpop.f32.mrb[0].mxu0
      %v591 = vpop.f32.mrb[0].mxu0
      %v592 = vadd.f32 %v525, %v591
      %v593 = vpop.f32.mrb[0].mxu0
      %594 = vdwg.mxu0
      %v595 = vld [vmem:[%s415] sm:$0x1]
      %v597 = vlaneseq
      %v598 = vshrl.u32 %v597, 7
      %v599 = vsub.s32 0, %v598
      %v600 = vrot.slane %v595, %v599
      %v602 = vpack.c.bf16 %v508, %v505
      %v603 = vpack.c.bf16 %v592, %v589
      %vm604 = vcmask 130048
      %v606 = vsel %vm604, %v602, 0
      %v609 = vsel %vm604, %v603, 0
      %611 = vmatprep.subr.bf16.mxu0 0
      %612 = vmatpush1.bf16.xpose.msra.mxu0 %v609
      %613 = vmatprep.subr.bf16.mxu0 0
      %614 = vmatpush1.bf16.xpose.msra.mxu0 0
      %615 = vmatprep.subr.bf16.mxu0 0
      %616 = vmatpush1.bf16.xpose.msra.mxu0 0
      %617 = vmatprep.subr.bf16.mxu0 0
      %618 = vmatpush1.bf16.xpose.msra.mxu0 0
      %619 = vmatprep.subr.bf16.mxu0 0
      %620 = vmatpush1.bf16.xpose.msra.mxu0 0
      %621 = vmatprep.subr.bf16.mxu0 0
      %622 = vmatpush1.bf16.xpose.msra.mxu0 0
      %623 = vmatprep.subr.bf16.mxu0 0
      %624 = vmatpush1.bf16.xpose.msra.mxu0 0
      %625 = vmatprep.subr.bf16.mxu0 0
      %626 = vmatpush1.bf16.xpose.msra.mxu0 0
      %627 = vmatprep.subr.bf16.mxu0 0
      %628 = vmatpush1.bf16.xpose.msra.mxu0 0
      %629 = vmatprep.subr.bf16.mxu0 0
      %630 = vmatpush1.bf16.xpose.msra.mxu0 0
      %631 = vmatprep.subr.bf16.mxu0 0
      %632 = vmatpush1.bf16.xpose.msra.mxu0 0
      %633 = vmatprep.subr.bf16.mxu0 0
      %634 = vmatpush1.bf16.xpose.msra.mxu0 0
      %635 = vmatprep.subr.bf16.mxu0 0
      %636 = vmatpush1.bf16.xpose.msra.mxu0 0
      %637 = vmatprep.subr.bf16.mxu0 0
      %638 = vmatpush1.bf16.xpose.msra.mxu0 0
      %639 = vmatprep.subr.bf16.mxu0 0
      %640 = vmatpush1.bf16.xpose.msra.mxu0 0
      %641 = vmatprep.subr.bf16.mxu0 0
      %642 = vmatpush1.bf16.xpose.msra.mxu0 0
      %643 = vmatprep.mubr.bf16.mxu0 0
      %644 = vmatmul.mubr.bf16.gmra.mrb[0].mxu0 %v606
      %v645 = vpop.f32.mrb[0].mxu0
      %v646 = vadd.f32 0.0, %v645
      %v647 = vpop.f32.mrb[0].mxu0
      %v648 = vpop.f32.mrb[0].mxu0
      %v649 = vadd.f32 0.0, %v648
      %v650 = vpop.f32.mrb[0].mxu0
      %651 = vdwg.mxu0
      %v652 = vmul.f32 %v646, 0.25
      %v653 = vmul.f32 %v649, 0.25
      %v654 = vadd.f32 %v652, %v600
      %v655 = vadd.f32 %v653, %v600
      %v656 = vsel %vm604, %v654, -inf
      %657 = vmax.xlane.f32.xlu0 %v656
      %v658 = vpop.xlane.xlu0 %657
      %v659 = vsel %vm604, %v655, -inf
      %660 = vmax.xlane.f32.xlu0 %v659
      %v661 = vpop.xlane.xlu0 %660
      %v662 = vsub.f32 %v654, %v658
      %v663 = vsub.f32 %v655, %v661
      %v664 = vmul.f32 %v662, 1.442695
      %v665 = vpow.pop %v664
      %v666 = vmul.f32 %v663, 1.442695
      %v667 = vpow.pop %v666
      %v668 = vsel %vm604, %v665, 0.0
      %669 = vadd.xlane.f32.xlu0 %v668
      %v670 = vpop.xlane.xlu0 %669
      %v671 = vsel %vm604, %v667, 0.0
      %672 = vadd.xlane.f32.xlu0 %v671
      %v673 = vpop.xlane.xlu0 %672
      %v674 = vrcp.pop %v670
      %v675 = vrcp.pop %v673
      %v676 = vmul.f32 %v665, %v674
      %v677 = vmul.f32 %v667, %v675
      %v678 = vpack.c.bf16 %v677, %v676
      %680 = vrot.lane.b32.xlu0 %v603, 64
      %v681 = vpop.permute.xlu0 %680
      %v684 = vsel %vm604, %v678, 0
      %686 = vmatprep.subr.bf16.mxu0 0
      %687 = vmatpush1.bf16.msra.mxu0 %v681
      %688 = vmatprep.subr.bf16.mxu0 0
      %689 = vmatpush1.bf16.msra.mxu0 0
      %690 = vmatprep.subr.bf16.mxu0 0
      %691 = vmatpush1.bf16.msra.mxu0 0
      %692 = vmatprep.subr.bf16.mxu0 0
      %693 = vmatpush1.bf16.msra.mxu0 0
      %694 = vmatprep.subr.bf16.mxu0 0
      %695 = vmatpush1.bf16.msra.mxu0 0
      %696 = vmatprep.subr.bf16.mxu0 0
      %697 = vmatpush1.bf16.msra.mxu0 0
      %698 = vmatprep.subr.bf16.mxu0 0
      %699 = vmatpush1.bf16.msra.mxu0 0
      %700 = vmatprep.subr.bf16.mxu0 0
      %701 = vmatpush1.bf16.msra.mxu0 0
      %702 = vmatprep.subr.bf16.mxu0 0
      %703 = vmatpush1.bf16.msra.mxu0 0
      %704 = vmatprep.subr.bf16.mxu0 0
      %705 = vmatpush1.bf16.msra.mxu0 0
      %706 = vmatprep.subr.bf16.mxu0 0
      %707 = vmatpush1.bf16.msra.mxu0 0
      %708 = vmatprep.subr.bf16.mxu0 0
      %709 = vmatpush1.bf16.msra.mxu0 0
      %710 = vmatprep.subr.bf16.mxu0 0
      %711 = vmatpush1.bf16.msra.mxu0 0
      %712 = vmatprep.subr.bf16.mxu0 0
      %713 = vmatpush1.bf16.msra.mxu0 0
      %714 = vmatprep.subr.bf16.mxu0 0
      %715 = vmatpush1.bf16.msra.mxu0 0
      %716 = vmatprep.subr.bf16.mxu0 0
      %717 = vmatpush1.bf16.msra.mxu0 0
      %718 = vmatprep.mubr.bf16.mxu0 0
      %719 = vmatmul.mubr.bf16.gmra.mrb[0].mxu0 %v684
      %v720 = vpop.f32.mrb[0].mxu0
      %v721 = vadd.f32 0.0, %v720
      %v722 = vpop.f32.mrb[0].mxu0
      %v723 = vpop.f32.mrb[0].mxu0
      %v724 = vadd.f32 0.0, %v723
      %v725 = vpop.f32.mrb[0].mxu0
      %726 = vdwg.mxu0
      %728 = vrot.lane.b32.xlu0 %v602, 112
      %v729 = vpop.permute.xlu0 %728
      %730 = vrot.lane.b32.xlu0 %v603, 112
      %v731 = vpop.permute.xlu0 %730
      %v733 = vsel %vm604, %v729, 0
      %v736 = vsel %vm604, %v731, 0
      %738 = vmatprep.subr.bf16.mxu0 0
      %739 = vmatpush1.bf16.xpose.msra.mxu0 %v736
      %740 = vmatprep.subr.bf16.mxu0 0
      %741 = vmatpush1.bf16.xpose.msra.mxu0 0
      %742 = vmatprep.subr.bf16.mxu0 0
      %743 = vmatpush1.bf16.xpose.msra.mxu0 0
      %744 = vmatprep.subr.bf16.mxu0 0
      %745 = vmatpush1.bf16.xpose.msra.mxu0 0
      %746 = vmatprep.subr.bf16.mxu0 0
      %747 = vmatpush1.bf16.xpose.msra.mxu0 0
      %748 = vmatprep.subr.bf16.mxu0 0
      %749 = vmatpush1.bf16.xpose.msra.mxu0 0
      %750 = vmatprep.subr.bf16.mxu0 0
      %751 = vmatpush1.bf16.xpose.msra.mxu0 0
      %752 = vmatprep.subr.bf16.mxu0 0
      %753 = vmatpush1.bf16.xpose.msra.mxu0 0
      %754 = vmatprep.subr.bf16.mxu0 0
      %755 = vmatpush1.bf16.xpose.msra.mxu0 0
      %756 = vmatprep.subr.bf16.mxu0 0
      %757 = vmatpush1.bf16.xpose.msra.mxu0 0
      %758 = vmatprep.subr.bf16.mxu0 0
      %759 = vmatpush1.bf16.xpose.msra.mxu0 0
      %760 = vmatprep.subr.bf16.mxu0 0
      %761 = vmatpush1.bf16.xpose.msra.mxu0 0
      %762 = vmatprep.subr.bf16.mxu0 0
      %763 = vmatpush1.bf16.xpose.msra.mxu0 0
      %764 = vmatprep.subr.bf16.mxu0 0
      %765 = vmatpush1.bf16.xpose.msra.mxu0 0
      %766 = vmatprep.subr.bf16.mxu0 0
      %767 = vmatpush1.bf16.xpose.msra.mxu0 0
      %768 = vmatprep.subr.bf16.mxu0 0
      %769 = vmatpush1.bf16.xpose.msra.mxu0 0
      %770 = vmatprep.mubr.bf16.mxu0 0
      %771 = vmatmul.mubr.bf16.gmra.mrb[0].mxu0 %v733
      %v772 = vpop.f32.mrb[0].mxu0
      %v773 = vadd.f32 0.0, %v772
      %v774 = vpop.f32.mrb[0].mxu0
      %v775 = vpop.f32.mrb[0].mxu0
      %v776 = vadd.f32 0.0, %v775
      %v777 = vpop.f32.mrb[0].mxu0
      %778 = vdwg.mxu0
      %v779 = vmul.f32 %v773, 0.25
      %v780 = vmul.f32 %v776, 0.25
      %v781 = vadd.f32 %v779, %v600
      %v782 = vadd.f32 %v780, %v600
      %v783 = vsel %vm604, %v781, -inf
      %784 = vmax.xlane.f32.xlu0 %v783
      %v785 = vpop.xlane.xlu0 %784
      %v786 = vsel %vm604, %v782, -inf
      %787 = vmax.xlane.f32.xlu0 %v786
      %v788 = vpop.xlane.xlu0 %787
      %v789 = vsub.f32 %v781, %v785
      %v790 = vsub.f32 %v782, %v788
      %v791 = vmul.f32 %v789, 1.442695
      %v792 = vpow.pop %v791
      %v793 = vmul.f32 %v790, 1.442695
      %v794 = vpow.pop %v793
      %v795 = vsel %vm604, %v792, 0.0
      %796 = vadd.xlane.f32.xlu0 %v795
      %v797 = vpop.xlane.xlu0 %796
      %v798 = vsel %vm604, %v794, 0.0
      %799 = vadd.xlane.f32.xlu0 %v798
      %v800 = vpop.xlane.xlu0 %799
      %v801 = vrcp.pop %v797
      %v802 = vrcp.pop %v800
      %v803 = vmul.f32 %v792, %v801
      %v804 = vmul.f32 %v794, %v802
      %v805 = vpack.c.bf16 %v804, %v803
      %806 = vrot.lane.b32.xlu0 %v603, 48
      %v807 = vpop.permute.xlu0 %806
      %v810 = vsel %vm604, %v805, 0
      %812 = vmatprep.subr.bf16.mxu0 0
      %813 = vmatpush1.bf16.msra.mxu0 %v807
      %814 = vmatprep.subr.bf16.mxu0 0
      %815 = vmatpush1.bf16.msra.mxu0 0
      %816 = vmatprep.subr.bf16.mxu0 0
      %817 = vmatpush1.bf16.msra.mxu0 0
      %818 = vmatprep.subr.bf16.mxu0 0
      %819 = vmatpush1.bf16.msra.mxu0 0
      %820 = vmatprep.subr.bf16.mxu0 0
      %821 = vmatpush1.bf16.msra.mxu0 0
      %822 = vmatprep.subr.bf16.mxu0 0
      %823 = vmatpush1.bf16.msra.mxu0 0
      %824 = vmatprep.subr.bf16.mxu0 0
      %825 = vmatpush1.bf16.msra.mxu0 0
      %826 = vmatprep.subr.bf16.mxu0 0
      %827 = vmatpush1.bf16.msra.mxu0 0
      %828 = vmatprep.subr.bf16.mxu0 0
      %829 = vmatpush1.bf16.msra.mxu0 0
      %830 = vmatprep.subr.bf16.mxu0 0
      %831 = vmatpush1.bf16.msra.mxu0 0
      %832 = vmatprep.subr.bf16.mxu0 0
      %833 = vmatpush1.bf16.msra.mxu0 0
      %834 = vmatprep.subr.bf16.mxu0 0
      %835 = vmatpush1.bf16.msra.mxu0 0
      %836 = vmatprep.subr.bf16.mxu0 0
      %837 = vmatpush1.bf16.msra.mxu0 0
      %838 = vmatprep.subr.bf16.mxu0 0
      %839 = vmatpush1.bf16.msra.mxu0 0
      %840 = vmatprep.subr.bf16.mxu0 0
      %841 = vmatpush1.bf16.msra.mxu0 0
      %842 = vmatprep.subr.bf16.mxu0 0
      %843 = vmatpush1.bf16.msra.mxu0 0
      %844 = vmatprep.mubr.bf16.mxu0 0
      %845 = vmatmul.mubr.bf16.gmra.mrb[0].mxu0 %v810
      %v846 = vpop.f32.mrb[0].mxu0
      %v847 = vadd.f32 0.0, %v846
      %v848 = vpop.f32.mrb[0].mxu0
      %v849 = vpop.f32.mrb[0].mxu0
      %v850 = vadd.f32 0.0, %v849
      %v851 = vpop.f32.mrb[0].mxu0
      %852 = vdwg.mxu0
      %853 = vrot.lane.b32.xlu0 %v602, 96
      %v854 = vpop.permute.xlu0 %853
      %855 = vrot.lane.b32.xlu0 %v603, 96
      %v856 = vpop.permute.xlu0 %855
      %v858 = vsel %vm604, %v854, 0
      %v861 = vsel %vm604, %v856, 0
      %863 = vmatprep.subr.bf16.mxu0 0
      %864 = vmatpush1.bf16.xpose.msra.mxu0 %v861
      %865 = vmatprep.subr.bf16.mxu0 0
      %866 = vmatpush1.bf16.xpose.msra.mxu0 0
      %867 = vmatprep.subr.bf16.mxu0 0
      %868 = vmatpush1.bf16.xpose.msra.mxu0 0
      %869 = vmatprep.subr.bf16.mxu0 0
      %870 = vmatpush1.bf16.xpose.msra.mxu0 0
      %871 = vmatprep.subr.bf16.mxu0 0
      %872 = vmatpush1.bf16.xpose.msra.mxu0 0
      %873 = vmatprep.subr.bf16.mxu0 0
      %874 = vmatpush1.bf16.xpose.msra.mxu0 0
      %875 = vmatprep.subr.bf16.mxu0 0
      %876 = vmatpush1.bf16.xpose.msra.mxu0 0
      %877 = vmatprep.subr.bf16.mxu0 0
      %878 = vmatpush1.bf16.xpose.msra.mxu0 0
      %879 = vmatprep.subr.bf16.mxu0 0
      %880 = vmatpush1.bf16.xpose.msra.mxu0 0
      %881 = vmatprep.subr.bf16.mxu0 0
      %882 = vmatpush1.bf16.xpose.msra.mxu0 0
      %883 = vmatprep.subr.bf16.mxu0 0
      %884 = vmatpush1.bf16.xpose.msra.mxu0 0
      %885 = vmatprep.subr.bf16.mxu0 0
      %886 = vmatpush1.bf16.xpose.msra.mxu0 0
      %887 = vmatprep.subr.bf16.mxu0 0
      %888 = vmatpush1.bf16.xpose.msra.mxu0 0
      %889 = vmatprep.subr.bf16.mxu0 0
      %890 = vmatpush1.bf16.xpose.msra.mxu0 0
      %891 = vmatprep.subr.bf16.mxu0 0
      %892 = vmatpush1.bf16.xpose.msra.mxu0 0
      %893 = vmatprep.subr.bf16.mxu0 0
      %894 = vmatpush1.bf16.xpose.msra.mxu0 0
      %895 = vmatprep.mubr.bf16.mxu0 0
      %896 = vmatmul.mubr.bf16.gmra.mrb[0].mxu0 %v858
      %v897 = vpop.f32.mrb[0].mxu0
      %v898 = vadd.f32 0.0, %v897
      %v899 = vpop.f32.mrb[0].mxu0
      %v900 = vpop.f32.mrb[0].mxu0
      %v901 = vadd.f32 0.0, %v900
      %v902 = vpop.f32.mrb[0].mxu0
      %903 = vdwg.mxu0
      %v904 = vmul.f32 %v898, 0.25
      %v905 = vmul.f32 %v901, 0.25
      %v906 = vadd.f32 %v904, %v600
      %v907 = vadd.f32 %v905, %v600
      %v908 = vsel %vm604, %v906, -inf
      %909 = vmax.xlane.f32.xlu0 %v908
      %v910 = vpop.xlane.xlu0 %909
      %v911 = vsel %vm604, %v907, -inf
      %912 = vmax.xlane.f32.xlu0 %v911
      %v913 = vpop.xlane.xlu0 %912
      %v914 = vsub.f32 %v906, %v910
      %v915 = vsub.f32 %v907, %v913
      %v916 = vmul.f32 %v914, 1.442695
      %v917 = vpow.pop %v916
      %v918 = vmul.f32 %v915, 1.442695
      %v919 = vpow.pop %v918
      %v920 = vsel %vm604, %v917, 0.0
      %921 = vadd.xlane.f32.xlu0 %v920
      %v922 = vpop.xlane.xlu0 %921
      %v923 = vsel %vm604, %v919, 0.0
      %924 = vadd.xlane.f32.xlu0 %v923
      %v925 = vpop.xlane.xlu0 %924
      %v926 = vrcp.pop %v922
      %v927 = vrcp.pop %v925
      %v928 = vmul.f32 %v917, %v926
      %v929 = vmul.f32 %v919, %v927
      %v930 = vpack.c.bf16 %v929, %v928
      %931 = vrot.lane.b32.xlu0 %v603, 32
      %v932 = vpop.permute.xlu0 %931
      %v935 = vsel %vm604, %v930, 0
      %937 = vmatprep.subr.bf16.mxu0 0
      %938 = vmatpush1.bf16.msra.mxu0 %v932
      %939 = vmatprep.subr.bf16.mxu0 0
      %940 = vmatpush1.bf16.msra.mxu0 0
      %941 = vmatprep.subr.bf16.mxu0 0
      %942 = vmatpush1.bf16.msra.mxu0 0
      %943 = vmatprep.subr.bf16.mxu0 0
      %944 = vmatpush1.bf16.msra.mxu0 0
      %945 = vmatprep.subr.bf16.mxu0 0
      %946 = vmatpush1.bf16.msra.mxu0 0
      %947 = vmatprep.subr.bf16.mxu0 0
      %948 = vmatpush1.bf16.msra.mxu0 0
      %949 = vmatprep.subr.bf16.mxu0 0
      %950 = vmatpush1.bf16.msra.mxu0 0
      %951 = vmatprep.subr.bf16.mxu0 0
      %952 = vmatpush1.bf16.msra.mxu0 0
      %953 = vmatprep.subr.bf16.mxu0 0
      %954 = vmatpush1.bf16.msra.mxu0 0
      %955 = vmatprep.subr.bf16.mxu0 0
      %956 = vmatpush1.bf16.msra.mxu0 0
      %957 = vmatprep.subr.bf16.mxu0 0
      %958 = vmatpush1.bf16.msra.mxu0 0
      %959 = vmatprep.subr.bf16.mxu0 0
      %960 = vmatpush1.bf16.msra.mxu0 0
      %961 = vmatprep.subr.bf16.mxu0 0
      %962 = vmatpush1.bf16.msra.mxu0 0
      %963 = vmatprep.subr.bf16.mxu0 0
      %964 = vmatpush1.bf16.msra.mxu0 0
      %965 = vmatprep.subr.bf16.mxu0 0
      %966 = vmatpush1.bf16.msra.mxu0 0
      %967 = vmatprep.subr.bf16.mxu0 0
      %968 = vmatpush1.bf16.msra.mxu0 0
      %969 = vmatprep.mubr.bf16.mxu0 0
      %970 = vmatmul.mubr.bf16.gmra.mrb[0].mxu0 %v935
      %v971 = vpop.f32.mrb[0].mxu0
      %v972 = vadd.f32 0.0, %v971
      %v973 = vpop.f32.mrb[0].mxu0
      %v974 = vpop.f32.mrb[0].mxu0
      %v975 = vadd.f32 0.0, %v974
      %v976 = vpop.f32.mrb[0].mxu0
      %977 = vdwg.mxu0
      %978 = vrot.lane.b32.xlu0 %v602, 80
      %v979 = vpop.permute.xlu0 %978
      %980 = vrot.lane.b32.xlu0 %v603, 80
      %v981 = vpop.permute.xlu0 %980
      %v983 = vsel %vm604, %v979, 0
      %v986 = vsel %vm604, %v981, 0
      %988 = vmatprep.subr.bf16.mxu0 0
      %989 = vmatpush1.bf16.xpose.msra.mxu0 %v986
      %990 = vmatprep.subr.bf16.mxu0 0
      %991 = vmatpush1.bf16.xpose.msra.mxu0 0
      %992 = vmatprep.subr.bf16.mxu0 0
      %993 = vmatpush1.bf16.xpose.msra.mxu0 0
      %994 = vmatprep.subr.bf16.mxu0 0
      %995 = vmatpush1.bf16.xpose.msra.mxu0 0
      %996 = vmatprep.subr.bf16.mxu0 0
      %997 = vmatpush1.bf16.xpose.msra.mxu0 0
      %998 = vmatprep.subr.bf16.mxu0 0
      %999 = vmatpush1.bf16.xpose.msra.mxu0 0
      %1000 = vmatprep.subr.bf16.mxu0 0
      %1001 = vmatpush1.bf16.xpose.msra.mxu0 0
      %1002 = vmatprep.subr.bf16.mxu0 0
      %1003 = vmatpush1.bf16.xpose.msra.mxu0 0
      %1004 = vmatprep.subr.bf16.mxu0 0
      %1005 = vmatpush1.bf16.xpose.msra.mxu0 0
      %1006 = vmatprep.subr.bf16.mxu0 0
      %1007 = vmatpush1.bf16.xpose.msra.mxu0 0
      %1008 = vmatprep.subr.bf16.mxu0 0
      %1009 = vmatpush1.bf16.xpose.msra.mxu0 0
      %1010 = vmatprep.subr.bf16.mxu0 0
      %1011 = vmatpush1.bf16.xpose.msra.mxu0 0
      %1012 = vmatprep.subr.bf16.mxu0 0
      %1013 = vmatpush1.bf16.xpose.msra.mxu0 0
      %1014 = vmatprep.subr.bf16.mxu0 0
      %1015 = vmatpush1.bf16.xpose.msra.mxu0 0
      %1016 = vmatprep.subr.bf16.mxu0 0
      %1017 = vmatpush1.bf16.xpose.msra.mxu0 0
      %1018 = vmatprep.subr.bf16.mxu0 0
      %1019 = vmatpush1.bf16.xpose.msra.mxu0 0
      %1020 = vmatprep.mubr.bf16.mxu0 0
      %1021 = vmatmul.mubr.bf16.gmra.mrb[0].mxu0 %v983
      %v1022 = vpop.f32.mrb[0].mxu0
      %v1023 = vadd.f32 0.0, %v1022
      %v1024 = vpop.f32.mrb[0].mxu0
      %v1025 = vpop.f32.mrb[0].mxu0
      %v1026 = vadd.f32 0.0, %v1025
      %v1027 = vpop.f32.mrb[0].mxu0
      %1028 = vdwg.mxu0
      %v1029 = vmul.f32 %v1023, 0.25
      %v1030 = vmul.f32 %v1026, 0.25
      %v1031 = vadd.f32 %v1029, %v600
      %v1032 = vadd.f32 %v1030, %v600
      %v1033 = vsel %vm604, %v1031, -inf
      %1034 = vmax.xlane.f32.xlu0 %v1033
      %v1035 = vpop.xlane.xlu0 %1034
      %v1036 = vsel %vm604, %v1032, -inf
      %1037 = vmax.xlane.f32.xlu0 %v1036
      %v1038 = vpop.xlane.xlu0 %1037
      %v1039 = vsub.f32 %v1031, %v1035
      %v1040 = vsub.f32 %v1032, %v1038
      %v1041 = vmul.f32 %v1039, 1.442695
      %v1042 = vpow.pop %v1041
      %v1043 = vmul.f32 %v1040, 1.442695
      %v1044 = vpow.pop %v1043
      %v1045 = vsel %vm604, %v1042, 0.0
      %1046 = vadd.xlane.f32.xlu0 %v1045
      %v1047 = vpop.xlane.xlu0 %1046
      %v1048 = vsel %vm604, %v1044, 0.0
      %1049 = vadd.xlane.f32.xlu0 %v1048
      %v1050 = vpop.xlane.xlu0 %1049
      %v1051 = vrcp.pop %v1047
      %v1052 = vrcp.pop %v1050
      %v1053 = vmul.f32 %v1042, %v1051
      %v1054 = vmul.f32 %v1044, %v1052
      %v1055 = vpack.c.bf16 %v1054, %v1053
      %1056 = vrot.lane.b32.xlu0 %v603, 16
      %v1057 = vpop.permute.xlu0 %1056
      %v1060 = vsel %vm604, %v1055, 0
      %1062 = vmatprep.subr.bf16.mxu0 0
      %1063 = vmatpush1.bf16.msra.mxu0 %v1057
      %1064 = vmatprep.subr.bf16.mxu0 0
      %1065 = vmatpush1.bf16.msra.mxu0 0
      %1066 = vmatprep.subr.bf16.mxu0 0
      %1067 = vmatpush1.bf16.msra.mxu0 0
      %1068 = vmatprep.subr.bf16.mxu0 0
      %1069 = vmatpush1.bf16.msra.mxu0 0
      %1070 = vmatprep.subr.bf16.mxu0 0
      %1071 = vmatpush1.bf16.msra.mxu0 0
      %1072 = vmatprep.subr.bf16.mxu0 0
      %1073 = vmatpush1.bf16.msra.mxu0 0
      %1074 = vmatprep.subr.bf16.mxu0 0
      %1075 = vmatpush1.bf16.msra.mxu0 0
      %1076 = vmatprep.subr.bf16.mxu0 0
      %1077 = vmatpush1.bf16.msra.mxu0 0
      %1078 = vmatprep.subr.bf16.mxu0 0
      %1079 = vmatpush1.bf16.msra.mxu0 0
      %1080 = vmatprep.subr.bf16.mxu0 0
      %1081 = vmatpush1.bf16.msra.mxu0 0
      %1082 = vmatprep.subr.bf16.mxu0 0
      %1083 = vmatpush1.bf16.msra.mxu0 0
      %1084 = vmatprep.subr.bf16.mxu0 0
      %1085 = vmatpush1.bf16.msra.mxu0 0
      %1086 = vmatprep.subr.bf16.mxu0 0
      %1087 = vmatpush1.bf16.msra.mxu0 0
      %1088 = vmatprep.subr.bf16.mxu0 0
      %1089 = vmatpush1.bf16.msra.mxu0 0
      %1090 = vmatprep.subr.bf16.mxu0 0
      %1091 = vmatpush1.bf16.msra.mxu0 0
      %1092 = vmatprep.subr.bf16.mxu0 0
      %1093 = vmatpush1.bf16.msra.mxu0 0
      %1094 = vmatprep.mubr.bf16.mxu0 0
      %1095 = vmatmul.mubr.bf16.gmra.mrb[0].mxu0 %v1060
      %v1096 = vpop.f32.mrb[0].mxu0
      %v1097 = vadd.f32 0.0, %v1096
      %v1098 = vpop.f32.mrb[0].mxu0
      %v1099 = vpop.f32.mrb[0].mxu0
      %v1100 = vadd.f32 0.0, %v1099
      %v1101 = vpop.f32.mrb[0].mxu0
      %1102 = vdwg.mxu0
      %1105 = vrot.lane.b32.xlu0 %v847, 16
      %v1106 = vpop.permute.xlu0 %1105
      %1107 = vrot.lane.b32.xlu0 %v850, 16
      %v1108 = vpop.permute.xlu0 %1107
      %1113 = vrot.lane.b32.xlu0 %v972, 32
      %v1114 = vpop.permute.xlu0 %1113
      %1115 = vrot.lane.b32.xlu0 %v975, 32
      %v1116 = vpop.permute.xlu0 %1115
      %1121 = vrot.lane.b32.xlu0 %v1097, 48
      %v1122 = vpop.permute.xlu0 %1121
      %1123 = vrot.lane.b32.xlu0 %v1100, 48
      %v1124 = vpop.permute.xlu0 %1123
      %v1127 = vsel %vm604, %v721, %v1106
      %v1128 = vsel %vm604, %v724, %v1108
      %vm1129 = vcmask 261120
      %v1130 = vsel %vm1129, %v1127, %v1114
      %v1131 = vsel %vm1129, %v1128, %v1116
      %vm1132 = vcmask 392192
      %v1133 = vsel %vm1132, %v1130, %v1122
      %v1134 = vsel %vm1132, %v1131, %v1124
      %v1135 = vpack.c.bf16 %v1134, %v1133
      %v1136 = vld [vmem:[%s7] sm:$0xf]
      %v1137 = vld [vmem:[%s7 + $0x4] sm:$0xf]
      %v1138 = vld [vmem:[%s7 + $0x8] sm:$0xf]
      %v1139 = vld [vmem:[%s7 + $0xc] sm:$0xf]
      %v1140 = vld [vmem:[%s7 + $0x10] sm:$0xf]
      %v1141 = vld [vmem:[%s7 + $0x14] sm:$0xf]
      %v1142 = vld [vmem:[%s7 + $0x18] sm:$0xf]
      %v1143 = vld [vmem:[%s7 + $0x1c] sm:$0xf]
      %v1144 = vld [vmem:[%s8] sm:$0x1]
      %v1146 = vlaneseq
      %v1147 = vshrl.u32 %v1146, 7
      %v1148 = vsub.s32 0, %v1147
      %v1149 = vrot.slane %v1144, %v1148
      %v1159 = vunpack.c.l.b16 %v1136
      %v1160 = vunpack.c.l.b16 %v1137
      %v1161 = vunpack.c.l.b16 %v1138
      %v1162 = vunpack.c.l.b16 %v1139
      %v1163 = vunpack.c.l.b16 %v1140
      %v1164 = vunpack.c.l.b16 %v1141
      %v1165 = vunpack.c.l.b16 %v1142
      %v1166 = vunpack.c.l.b16 %v1143
      %v1167 = vpack.c.b16 %v1160, %v1159
      %v1168 = vpack.c.b16 %v1162, %v1161
      %v1169 = vpack.c.b16 %v1164, %v1163
      %v1170 = vpack.c.b16 %v1166, %v1165
      %v1176 = vsel %vm466, %v1135, 0
      %1178 = vmatprep.subr.bf16.mxu0 0
      %1179 = vmatpush1.bf16.msra.mxu0 %v1167
      %1180 = vmatprep.subr.bf16.mxu0 0
      %1181 = vmatpush1.bf16.msra.mxu0 %v1168
      %1182 = vmatprep.subr.bf16.mxu0 0
      %1183 = vmatpush1.bf16.msra.mxu0 %v1169
      %1184 = vmatprep.subr.bf16.mxu0 0
      %1185 = vmatpush1.bf16.msra.mxu0 %v1170
      %1186 = vmatprep.subr.bf16.mxu0 0
      %1187 = vmatpush1.bf16.msra.mxu0 0
      %1188 = vmatprep.subr.bf16.mxu0 0
      %1189 = vmatpush1.bf16.msra.mxu0 0
      %1190 = vmatprep.subr.bf16.mxu0 0
      %1191 = vmatpush1.bf16.msra.mxu0 0
      %1192 = vmatprep.subr.bf16.mxu0 0
      %1193 = vmatpush1.bf16.msra.mxu0 0
      %1194 = vmatprep.subr.bf16.mxu0 0
      %1195 = vmatpush1.bf16.msra.mxu0 0
      %1196 = vmatprep.subr.bf16.mxu0 0
      %1197 = vmatpush1.bf16.msra.mxu0 0
      %1198 = vmatprep.subr.bf16.mxu0 0
      %1199 = vmatpush1.bf16.msra.mxu0 0
      %1200 = vmatprep.subr.bf16.mxu0 0
      %1201 = vmatpush1.bf16.msra.mxu0 0
      %1202 = vmatprep.subr.bf16.mxu0 0
      %1203 = vmatpush1.bf16.msra.mxu0 0
      %1204 = vmatprep.subr.bf16.mxu0 0
      %1205 = vmatpush1.bf16.msra.mxu0 0
      %1206 = vmatprep.subr.bf16.mxu0 0
      %1207 = vmatpush1.bf16.msra.mxu0 0
      %1208 = vmatprep.subr.bf16.mxu0 0
      %1209 = vmatpush1.bf16.msra.mxu0 0
      %1210 = vmatprep.mubr.bf16.mxu0 0
      %1211 = vmatmul.mubr.bf16.gmra.mrb[0].mxu0 %v1176
      %v1212 = vpop.f32.mrb[0].mxu0
      %v1213 = vadd.f32 %v1149, %v1212
      %v1214 = vpop.f32.mrb[0].mxu0
      %v1215 = vpop.f32.mrb[0].mxu0
      %v1216 = vadd.f32 %v1149, %v1215
      %v1217 = vpop.f32.mrb[0].mxu0
      %1218 = vdwg.mxu0
      %v1219 = vadd.f32 %v422, %v1213
      %v1220 = vadd.f32 %v423, %v1216
      %v1221 = vsel %vm466, %v1219, 0.0
      %1222 = vadd.xlane.f32.xlu0 %v1221
      %v1223 = vpop.xlane.xlu0 %1222
      %v1224 = vsel %vm466, %v1220, 0.0
      %1225 = vadd.xlane.f32.xlu0 %v1224
      %v1226 = vpop.xlane.xlu0 %1225
      %v1227 = vrcp.pop 64.0
      %v1228 = vmul.f32 %v1223, %v1227
      %v1229 = vmul.f32 %v1226, %v1227
      %v1230 = vsub.f32 %v1219, %v1228
      %v1231 = vsub.f32 %v1220, %v1229
      %v1232 = vmul.f32 %v1230, %v1230
      %v1233 = vmul.f32 %v1231, %v1231
      %v1234 = vsel %vm466, %v1232, 0.0
      %1235 = vadd.xlane.f32.xlu0 %v1234
      %v1236 = vpop.xlane.xlu0 %1235
      %v1237 = vsel %vm466, %v1233, 0.0
      %1238 = vadd.xlane.f32.xlu0 %v1237
      %v1239 = vpop.xlane.xlu0 %1238
      %v1240 = vmul.f32 %v1236, %v1227
      %v1241 = vmul.f32 %v1239, %v1227
      %v1242 = vadd.f32 %v1240, 1e-05
      %v1243 = vadd.f32 %v1241, 1e-05
      %v1244 = vrsqrt.pop %v1242
      %v1245 = vrsqrt.pop %v1243
      %v1246 = vmul.f32 %v1230, %v1244
      %v1247 = vmul.f32 %v1231, %v1245
      %v1248 = vld [vmem:[%s9] sm:$0x1]
      %v1250 = vlaneseq
      %v1251 = vshrl.u32 %v1250, 7
      %v1252 = vsub.s32 0, %v1251
      %v1253 = vrot.slane %v1248, %v1252
      %v1255 = vmul.f32 %v1246, %v1253
      %v1256 = vmul.f32 %v1247, %v1253
      %v1257 = vld [vmem:[%s10] sm:$0x1]
      %v1259 = vlaneseq
      %v1260 = vshrl.u32 %v1259, 7
      %v1261 = vsub.s32 0, %v1260
      %v1262 = vrot.slane %v1257, %v1261
      %v1264 = vadd.f32 %v1255, %v1262
      %v1265 = vadd.f32 %v1256, %v1262
      %1266 = vst.msk [vmem:[%s420] sm:$0xff] %vm466, %v1264
      %1267 = vst.msk [vmem:[%s420 + $0x8] sm:$0xff] %vm466, %v1265
      %p1268 = scmp.lt.s32.totalorder %s22, 1
      %s1269 = scalar_select %p1268, %s22, 1
      %s1270 = smul.addr %s1269, 2
      %s1271 = smul.addr %s1270, 8
      %s1272 = scalar_lea.vmem %s11, %s1271
      // Predicated region
      $region65: #{seq2seq_forward.5} parent=63 // pred_check
        %p1273 = pneg %p286
      $region66: #{seq2seq_forward.5} parent=63 // pred_check_branch
        %1275 = sbr.rel (%p1273) target = $region68
      $region67: #{seq2seq_forward.5} parent=63 // pred_region
        _
      $region68: #{seq2seq_forward.5} parent=63 // pred_fallthru
        _
    $region64: #{seq2seq_forward.5} parent=5 // pred_fallthru
      _
    %p1276 = scmp.le.s32.totalorder 2, %s17
    // Predicated region
    $region69: #{seq2seq_forward.5} parent=5 // pred_check
      %p1277 = pneg %p1276
    $region70: #{seq2seq_forward.5} parent=5 // pred_check_branch
      %1279 = sbr.rel (%p1277) target = $region72
    $region71: #{seq2seq_forward.5} parent=5 // pred_region
      %s1280 = ssub.s32 %s17, 2
      // Predicated region
      $region73: #{seq2seq_forward.5} parent=71 // pred_check
        %p1281 = pneg %p292
      $region74: #{seq2seq_forward.5} parent=71 // pred_check_branch
        %1283 = sbr.rel (%p1281) target = $region76
      $region75: #{seq2seq_forward.5} parent=71 // pred_region
        %p1284 = scmp.lt.s32.totalorder %s23, 1
        %s1285 = scalar_select %p1284, %s23, 1
        %s1286 = smul.addr %s1285, 2
        %s1287 = smul.addr %s1286, 8
        %s1288 = scalar_lea.vmem %s11, %s1287
      $region76: #{seq2seq_forward.5} parent=71 // pred_fallthru
        _
    $region72: #{seq2seq_forward.5} parent=5 // pred_fallthru
      _
  $region6: #{seq2seq_forward.5} parent=0 // loop_footer
    %s21 = sadd.s32 1, %s17
  $region7: #{seq2seq_forward.5} parent=0 // loop_footer_branch
    %16 = sbr.rel target = $region3
  $region8: #{seq2seq_forward.5} parent=0 // loop_exit
    _

// kernel: seq2seq_forward.7
$region0: #{seq2seq_forward.7}
  #allocation0 [shape = 'u32[]', space=smem, size = 0x4, offset = 0x4, fixed_abs, tag = 'smem constant byte address 0x4 - core index']
  #allocation1 [shape = 'u32[144,128]{1,0:T(1,128)}', space=vmem, size = 0x12000, scoped, tag = 'internal scratch']
  #allocation2 [shape = 'bf16[30,64]{1,0:T(8,128)(2,1)}', space=vmem, size = 0x2000, scoped, tag = 'scratch operand']
  #allocation3 [shape = 'f32[30,1]{1,0:T(8,128)}', space=vmem, size = 0x4000, scoped, tag = 'scratch operand']
  #allocation4 [shape = 'f32[30,1]{1,0:T(8,128)}', space=vmem, size = 0x4000, scoped, tag = 'scratch operand']
  #allocation5 [shape = 'f32[30,1]{1,0:T(8,128)}', space=vmem, size = 0x4000, scoped, tag = 'scratch operand']
  %s0 = inlined_call_operand.vmem [shape: f32[30,64], index: 0, kind: input, shape index: {}]
  %s1 = inlined_call_operand.vmem [shape: bf16[64,64], index: 1, kind: input, shape index: {}]
  %s2 = inlined_call_operand.vmem [shape: f32[1,64], index: 2, kind: input, shape index: {}]
  %s3 = inlined_call_operand.vmem [shape: bf16[64,256], index: 3, kind: input, shape index: {}]
  %s4 = inlined_call_operand.vmem [shape: s32[30,1], index: 4, kind: input, shape index: {}]
  %s5 = inlined_call_operand.vmem [shape: f32[30,1], index: 5, kind: input, shape index: {}]
  %s6 = inlined_call_operand.hbm [shape: f32[1,1], index: 6, kind: output, shape index: {0}]
  %s7 = inlined_call_operand.hbm [shape: f32[1,1], index: 7, kind: output, shape index: {1}]
  %s8 = inlined_call_operand.hbm [shape: f32[1,1], index: 8, kind: output, shape index: {2}]
  %9 = xla_tuple %s6, %s7, %s8
  %s10 = sld [smem:[#allocation0]]
  $region122: #{seq2seq_forward.7} parent=0
    _
  %s12 = ssub.s32 1, %s10
  %s13 = scalar_select 0, %s12, %s10
  $region1: #{seq2seq_forward.7} parent=0
    #allocation6 [shape = 'u8[32768]{0}', space=vmem, size = 0x8000, scoped, tag = 'input window, operand 3']
    #allocation7 [shape = 'u8[512]{0}', space=vmem, size = 0x400, scoped, tag = 'output window, operand 0, single buffered']
    #allocation8 [shape = 's32[2]{0}', space=sflag, size = 0x8, scoped, tag = 'scoped memory for seq2seq_forward.7']
    #allocation9 [shape = 'u8[512]{0}', space=vmem, size = 0x400, scoped, tag = 'output window, operand 1, single buffered']
    #allocation10 [shape = 's32[1]{0}', space=sflag, size = 0x4, scoped, tag = 'scoped memory for seq2seq_forward.7']
    #allocation11 [shape = 'u8[512]{0}', space=vmem, size = 0x400, scoped, tag = 'output window, operand 2, single buffered']
    %14 = vsyncpa [#allocation8], 0
    %15 = vsyncpa [#allocation10], 0
    loop: start=0, step=1, limit=4
    $region2: #{seq2seq_forward.7} parent=1 // loop_pre_header
      _
    $region3: #{seq2seq_forward.7} parent=1 // loop_header
      %s17 = sphi 0, %s21
      %p18 = scmp.ge.s32.totalorder %s17, 4
      %s25 = sphi 0, %s25
      %s27 = sphi 0, %s25
      %s28 = sphi 0, %s27
      %s42 = sphi 0, %s28
      %s46 = sphi 0, %s46
      %s48 = sphi 0, %s46
      %s49 = sphi 0, %s48
      %s63 = sphi 0, %s49
      %s67 = sphi 0, %s67
      %s69 = sphi 0, %s67
      %s70 = sphi 0, %s69
      %s84 = sphi 0, %s70
      %s90 = sphi 0, %s92
      %s93 = sphi 0, %s90
      %s94 = sphi 0, %s93
      %s110 = sphi 0, %s94
      %s114 = sphi 0, %s114
      %s116 = sphi 0, %s114
      %s117 = sphi 0, %s116
      %s131 = sphi 0, %s117
      %s135 = sphi 0, %s135
      %s137 = sphi 0, %s135
      %s138 = sphi 0, %s137
      %s152 = sphi 0, %s138
      %s156 = sphi 0, %s156
      %s158 = sphi 0, %s156
      %s159 = sphi 0, %s158
      %s173 = sphi 0, %s159
      %s177 = sphi 0, %s177
      %s179 = sphi 0, %s177
      %s180 = sphi 0, %s179
      %s194 = sphi 0, %s180
      %s198 = sphi 0, %s198
      %s200 = sphi 0, %s198
      %s201 = sphi 0, %s200
      %s215 = sphi 0, %s201
    $region4: #{seq2seq_forward.7} parent=1 // loop_header_branch
      %20 = sbr.rel (%p18) target = $region8
    $region5: #{seq2seq_forward.7} parent=1 // loop_body
      %s22 = ssub.s32 %s17, 1
      %s23 = ssub.s32 %s17, 2
      %s24 = sadd.s32 %s17, 1
      %s26 = sadd.s32 %s25, 1
      %p29 = scmp.eq.s32.totalorder %s17, 1
      %p30 = scmp.ne.s32.totalorder %s25, %s27
      %p31 = scmp.eq.s32.totalorder %s17, 0
      %p32 = por %p30, %p31
      %p33 = scmp.ne.s32.totalorder %s25, %s27
      %p34 = scmp.eq.s32.totalorder %s22, 1
      %p35 = por %p33, %p34
      %p36 = scmp.ne.s32.totalorder %s27, %s28
      %p37 = scmp.eq.s32.totalorder %s22, 0
      %p38 = por %p36, %p37
      %p39 = scmp.ne.s32.totalorder %s27, %s28
      %p40 = scmp.eq.s32.totalorder %s23, 1
      %p41 = por %p39, %p40
      %p43 = scmp.ne.s32.totalorder %s28, %s42
      %p44 = scmp.eq.s32.totalorder %s23, 0
      %p45 = por %p43, %p44
      %s47 = sadd.s32 %s46, 1
      %p50 = scmp.eq.s32.totalorder %s17, 1
      %p51 = scmp.ne.s32.totalorder %s46, %s48
      %p52 = scmp.eq.s32.totalorder %s17, 0
      %p53 = por %p51, %p52
      %p54 = scmp.ne.s32.totalorder %s46, %s48
      %p55 = scmp.eq.s32.totalorder %s22, 1
      %p56 = por %p54, %p55
      %p57 = scmp.ne.s32.totalorder %s48, %s49
      %p58 = scmp.eq.s32.totalorder %s22, 0
      %p59 = por %p57, %p58
      %p60 = scmp.ne.s32.totalorder %s48, %s49
      %p61 = scmp.eq.s32.totalorder %s23, 1
      %p62 = por %p60, %p61
      %p64 = scmp.ne.s32.totalorder %s49, %s63
      %p65 = scmp.eq.s32.totalorder %s23, 0
      %p66 = por %p64, %p65
      %s68 = sadd.s32 %s67, 1
      %p71 = scmp.eq.s32.totalorder %s17, 1
      %p72 = scmp.ne.s32.totalorder %s67, %s69
      %p73 = scmp.eq.s32.totalorder %s17, 0
      %p74 = por %p72, %p73
      %p75 = scmp.ne.s32.totalorder %s67, %s69
      %p76 = scmp.eq.s32.totalorder %s22, 1
      %p77 = por %p75, %p76
      %p78 = scmp.ne.s32.totalorder %s69, %s70
      %p79 = scmp.eq.s32.totalorder %s22, 0
      %p80 = por %p78, %p79
      %p81 = scmp.ne.s32.totalorder %s69, %s70
      %p82 = scmp.eq.s32.totalorder %s23, 1
      %p83 = por %p81, %p82
      %p85 = scmp.ne.s32.totalorder %s70, %s84
      %p86 = scmp.eq.s32.totalorder %s23, 0
      %p87 = por %p85, %p86
      %s88 = ssub.s32 %s17, %s24
      %p89 = scmp.eq.s32.totalorder %s88, 0
      %s91 = sadd.s32 %s90, 1
      %s92 = scalar_select %p89, %s90, %s91
      %p95 = pneg %p89
      %p96 = scmp.eq.s32.totalorder %s17, 1
      %p97 = por %p95, %p96
      %p98 = scmp.ne.s32.totalorder %s90, %s93
      %p99 = scmp.eq.s32.totalorder %s17, 0
      %p100 = por %p98, %p99
      %p101 = scmp.ne.s32.totalorder %s90, %s93
      %p102 = scmp.eq.s32.totalorder %s22, 1
      %p103 = por %p101, %p102
      %p104 = scmp.ne.s32.totalorder %s93, %s94
      %p105 = scmp.eq.s32.totalorder %s22, 0
      %p106 = por %p104, %p105
      %p107 = scmp.ne.s32.totalorder %s93, %s94
      %p108 = scmp.eq.s32.totalorder %s23, 1
      %p109 = por %p107, %p108
      %p111 = scmp.ne.s32.totalorder %s94, %s110
      %p112 = scmp.eq.s32.totalorder %s23, 0
      %p113 = por %p111, %p112
      %s115 = sadd.s32 %s114, 1
      %p118 = scmp.eq.s32.totalorder %s17, 1
      %p119 = scmp.ne.s32.totalorder %s114, %s116
      %p120 = scmp.eq.s32.totalorder %s17, 0
      %p121 = por %p119, %p120
      %p122 = scmp.ne.s32.totalorder %s114, %s116
      %p123 = scmp.eq.s32.totalorder %s22, 1
      %p124 = por %p122, %p123
      %p125 = scmp.ne.s32.totalorder %s116, %s117
      %p126 = scmp.eq.s32.totalorder %s22, 0
      %p127 = por %p125, %p126
      %p128 = scmp.ne.s32.totalorder %s116, %s117
      %p129 = scmp.eq.s32.totalorder %s23, 1
      %p130 = por %p128, %p129
      %p132 = scmp.ne.s32.totalorder %s117, %s131
      %p133 = scmp.eq.s32.totalorder %s23, 0
      %p134 = por %p132, %p133
      %s136 = sadd.s32 %s135, 1
      %p139 = scmp.eq.s32.totalorder %s17, 1
      %p140 = scmp.ne.s32.totalorder %s135, %s137
      %p141 = scmp.eq.s32.totalorder %s17, 0
      %p142 = por %p140, %p141
      %p143 = scmp.ne.s32.totalorder %s135, %s137
      %p144 = scmp.eq.s32.totalorder %s22, 1
      %p145 = por %p143, %p144
      %p146 = scmp.ne.s32.totalorder %s137, %s138
      %p147 = scmp.eq.s32.totalorder %s22, 0
      %p148 = por %p146, %p147
      %p149 = scmp.ne.s32.totalorder %s137, %s138
      %p150 = scmp.eq.s32.totalorder %s23, 1
      %p151 = por %p149, %p150
      %p153 = scmp.ne.s32.totalorder %s138, %s152
      %p154 = scmp.eq.s32.totalorder %s23, 0
      %p155 = por %p153, %p154
      %s157 = sadd.s32 %s156, 1
      %p160 = scmp.eq.s32.totalorder %s17, 1
      %p161 = scmp.ne.s32.totalorder %s156, %s158
      %p162 = scmp.eq.s32.totalorder %s17, 0
      %p163 = por %p161, %p162
      %p164 = scmp.ne.s32.totalorder %s156, %s158
      %p165 = scmp.eq.s32.totalorder %s22, 1
      %p166 = por %p164, %p165
      %p167 = scmp.ne.s32.totalorder %s158, %s159
      %p168 = scmp.eq.s32.totalorder %s22, 0
      %p169 = por %p167, %p168
      %p170 = scmp.ne.s32.totalorder %s158, %s159
      %p171 = scmp.eq.s32.totalorder %s23, 1
      %p172 = por %p170, %p171
      %p174 = scmp.ne.s32.totalorder %s159, %s173
      %p175 = scmp.eq.s32.totalorder %s23, 0
      %p176 = por %p174, %p175
      %s178 = sadd.s32 %s177, 1
      %p181 = scmp.eq.s32.totalorder %s17, 1
      %p182 = scmp.ne.s32.totalorder %s177, %s179
      %p183 = scmp.eq.s32.totalorder %s17, 0
      %p184 = por %p182, %p183
      %p185 = scmp.ne.s32.totalorder %s177, %s179
      %p186 = scmp.eq.s32.totalorder %s22, 1
      %p187 = por %p185, %p186
      %p188 = scmp.ne.s32.totalorder %s179, %s180
      %p189 = scmp.eq.s32.totalorder %s22, 0
      %p190 = por %p188, %p189
      %p191 = scmp.ne.s32.totalorder %s179, %s180
      %p192 = scmp.eq.s32.totalorder %s23, 1
      %p193 = por %p191, %p192
      %p195 = scmp.ne.s32.totalorder %s180, %s194
      %p196 = scmp.eq.s32.totalorder %s23, 0
      %p197 = por %p195, %p196
      %s199 = sadd.s32 %s198, 1
      %p202 = scmp.eq.s32.totalorder %s17, 1
      %p203 = scmp.ne.s32.totalorder %s198, %s200
      %p204 = scmp.eq.s32.totalorder %s17, 0
      %p205 = por %p203, %p204
      %p206 = scmp.ne.s32.totalorder %s198, %s200
      %p207 = scmp.eq.s32.totalorder %s22, 1
      %p208 = por %p206, %p207
      %p209 = scmp.ne.s32.totalorder %s200, %s201
      %p210 = scmp.eq.s32.totalorder %s22, 0
      %p211 = por %p209, %p210
      %p212 = scmp.ne.s32.totalorder %s200, %s201
      %p213 = scmp.eq.s32.totalorder %s23, 1
      %p214 = por %p212, %p213
      %p216 = scmp.ne.s32.totalorder %s201, %s215
      %p217 = scmp.eq.s32.totalorder %s23, 0
      %p218 = por %p216, %p217
      %p219 = scmp.le.s32.totalorder 1, %s17
      %p220 = scmp.lt.s32.totalorder %s17, 3
      %p221 = pnand %p219, %p220
      %p222 = pneg %p221
      // Predicated region
      $region9: #{seq2seq_forward.7} parent=5 // pred_check
        _
      $region10: #{seq2seq_forward.7} parent=5 // pred_check_branch
        %224 = sbr.rel (%p221) target = $region12
      $region11: #{seq2seq_forward.7} parent=5 // pred_region
        %s225 = ssub.s32 %s17, 1
        // Predicated region
        $region13: #{seq2seq_forward.7} parent=11 // pred_check
          %p226 = pneg %p38
        $region14: #{seq2seq_forward.7} parent=11 // pred_check_branch
          %228 = sbr.rel (%p226) target = $region16
        $region15: #{seq2seq_forward.7} parent=11 // pred_region
          _
        $region16: #{seq2seq_forward.7} parent=11 // pred_fallthru
          _
        // Predicated region
        $region17: #{seq2seq_forward.7} parent=11 // pred_check
          %p229 = pneg %p59
        $region18: #{seq2seq_forward.7} parent=11 // pred_check_branch
          %231 = sbr.rel (%p229) target = $region20
        $region19: #{seq2seq_forward.7} parent=11 // pred_region
          _
        $region20: #{seq2seq_forward.7} parent=11 // pred_fallthru
          _
        // Predicated region
        $region21: #{seq2seq_forward.7} parent=11 // pred_check
          %p232 = pneg %p80
        $region22: #{seq2seq_forward.7} parent=11 // pred_check_branch
          %234 = sbr.rel (%p232) target = $region24
        $region23: #{seq2seq_forward.7} parent=11 // pred_region
          _
        $region24: #{seq2seq_forward.7} parent=11 // pred_fallthru
          _
        // Predicated region
        $region25: #{seq2seq_forward.7} parent=11 // pred_check
          %p235 = pneg %p127
        $region26: #{seq2seq_forward.7} parent=11 // pred_check_branch
          %237 = sbr.rel (%p235) target = $region28
        $region27: #{seq2seq_forward.7} parent=11 // pred_region
          _
        $region28: #{seq2seq_forward.7} parent=11 // pred_fallthru
          _
        // Predicated region
        $region29: #{seq2seq_forward.7} parent=11 // pred_check
          %p238 = pneg %p148
        $region30: #{seq2seq_forward.7} parent=11 // pred_check_branch
          %240 = sbr.rel (%p238) target = $region32
        $region31: #{seq2seq_forward.7} parent=11 // pred_region
          _
        $region32: #{seq2seq_forward.7} parent=11 // pred_fallthru
          _
      $region12: #{seq2seq_forward.7} parent=5 // pred_fallthru
        _
      %p241 = scmp.lt.s32.totalorder %s17, 2
      // Predicated region
      $region33: #{seq2seq_forward.7} parent=5 // pred_check
        %p242 = pneg %p241
      $region34: #{seq2seq_forward.7} parent=5 // pred_check_branch
        %244 = sbr.rel (%p242) target = $region36
      $region35: #{seq2seq_forward.7} parent=5 // pred_region
        // Predicated region
        $region37: #{seq2seq_forward.7} parent=35 // pred_check
          %p245 = pneg %p100
        $region38: #{seq2seq_forward.7} parent=35 // pred_check_branch
          %247 = sbr.rel (%p245) target = $region40
        $region39: #{seq2seq_forward.7} parent=35 // pred_region
          %s248 = sand.u32 %s90, 1
          %s249 = sand.u32 %s90, 1
          %s250 = smul.addr %s249, 32
          %s251 = scalar_lea.vmem [#allocation6], %s250
          %s252 = smul.addr %s17, 4
          %s253 = scalar_lea.vmem %s3, %s252
          // Predicated region
          $region41: #{seq2seq_forward.7} parent=39 // pred_check
            _
          $region42: #{seq2seq_forward.7} parent=39 // pred_check_branch
            %255 = sbr.rel (0) target = $region44
          $region43: #{seq2seq_forward.7} parent=39 // pred_region
            // Predicated region
            $region45: #{seq2seq_forward.7} parent=43 // pred_check
              _
            $region46: #{seq2seq_forward.7} parent=43 // pred_check_branch
              %257 = sbr.rel target = $region48
            $region47: #{seq2seq_forward.7} parent=43 // pred_region
              // Predicated region
              $region60: #{seq2seq_forward.7} parent=47 // pred_check
                _
              $region61: #{seq2seq_forward.7} parent=47 // pred_check_branch
                %286 = sbr.rel (0) target = $region63
              $region62: #{seq2seq_forward.7} parent=47 // pred_region
                loop: start=0, step=1, limit=1
                $region64: #{seq2seq_forward.7} parent=62 // loop_pre_header
                  _
                $region65: #{seq2seq_forward.7} parent=62 // loop_header
                  %s288 = sphi 0, %s292
                  %p289 = scmp.ge.s32.totalorder %s288, 1
                  %s293 = sphi %s253, %s253
                  %s294 = sphi %s251, %s251
                $region66: #{seq2seq_forward.7} parent=62 // loop_header_branch
                  %291 = sbr.rel (%p289) target = $region70
                $region67: #{seq2seq_forward.7} parent=62 // loop_body
                  _
                $region68: #{seq2seq_forward.7} parent=62 // loop_footer
                  %s292 = sadd.s32 1, %s288
                $region69: #{seq2seq_forward.7} parent=62 // loop_footer_branch
                  %287 = sbr.rel target = $region65
                $region70: #{seq2seq_forward.7} parent=62 // loop_exit
                  _
                loop: start=0, step=1, limit=1
                $region71: #{seq2seq_forward.7} parent=62 // loop_pre_header
                  _
                $region72: #{seq2seq_forward.7} parent=62 // loop_header
                  %s297 = sphi 0, %s301
                  %p298 = scmp.ge.s32.totalorder %s297, 1
                  %s302 = sphi %s253, %s253
                  %s303 = sphi %s251, %s251
                $region73: #{seq2seq_forward.7} parent=62 // loop_header_branch
                  %300 = sbr.rel (%p298) target = $region77
                $region74: #{seq2seq_forward.7} parent=62 // loop_body
                  %v304 = vld [vmem:[%s302] sm:$0xf]
                  %305 = vst [vmem:[%s303] sm:$0xf] %v304
                  %v306 = vld [vmem:[%s302 + $0x8] sm:$0xf]
                  %307 = vst [vmem:[%s303 + $0x4] sm:$0xf] %v306
                  %v308 = vld [vmem:[%s302 + $0x10] sm:$0xf]
                  %309 = vst [vmem:[%s303 + $0x8] sm:$0xf] %v308
                  %v310 = vld [vmem:[%s302 + $0x18] sm:$0xf]
                  %311 = vst [vmem:[%s303 + $0xc] sm:$0xf] %v310
                  %v312 = vld [vmem:[%s302 + $0x20] sm:$0xf]
                  %313 = vst [vmem:[%s303 + $0x10] sm:$0xf] %v312
                  %v314 = vld [vmem:[%s302 + $0x28] sm:$0xf]
                  %315 = vst [vmem:[%s303 + $0x14] sm:$0xf] %v314
                  %v316 = vld [vmem:[%s302 + $0x30] sm:$0xf]
                  %317 = vst [vmem:[%s303 + $0x18] sm:$0xf] %v316
                  %v318 = vld [vmem:[%s302 + $0x38] sm:$0xf]
                  %319 = vst [vmem:[%s303 + $0x1c] sm:$0xf] %v318
                $region75: #{seq2seq_forward.7} parent=62 // loop_footer
                  %s301 = sadd.s32 1, %s297
                $region76: #{seq2seq_forward.7} parent=62 // loop_footer_branch
                  %296 = sbr.rel target = $region72
                $region77: #{seq2seq_forward.7} parent=62 // loop_exit
                  _
              $region63: #{seq2seq_forward.7} parent=47 // pred_fallthru
                _
            $region48: #{seq2seq_forward.7} parent=43 // pred_fallthru
              _
            // Predicated region
            $region49: #{seq2seq_forward.7} parent=43 // pred_check
              _
            $region50: #{seq2seq_forward.7} parent=43 // pred_check_branch
              %259 = sbr.rel (0) target = $region52
            $region51: #{seq2seq_forward.7} parent=43 // pred_region
              loop: start=0, step=1, limit=1
              $region53: #{seq2seq_forward.7} parent=51 // loop_pre_header
                _
              $region54: #{seq2seq_forward.7} parent=51 // loop_header
                %s262 = sphi 0, %s266
                %p263 = scmp.ge.s32.totalorder %s262, 1
                %s267 = sphi %s253, %s253
                %s268 = sphi %s251, %s251
              $region55: #{seq2seq_forward.7} parent=51 // loop_header_branch
                %265 = sbr.rel (%p263) target = $region59
              $region56: #{seq2seq_forward.7} parent=51 // loop_body
                %v269 = vld [vmem:[%s267] sm:$0xf]
                %270 = vst [vmem:[%s268] sm:$0xf] %v269
                %v271 = vld [vmem:[%s267 + $0x8] sm:$0xf]
                %272 = vst [vmem:[%s268 + $0x4] sm:$0xf] %v271
                %v273 = vld [vmem:[%s267 + $0x10] sm:$0xf]
                %274 = vst [vmem:[%s268 + $0x8] sm:$0xf] %v273
                %v275 = vld [vmem:[%s267 + $0x18] sm:$0xf]
                %276 = vst [vmem:[%s268 + $0xc] sm:$0xf] %v275
                %v277 = vld [vmem:[%s267 + $0x20] sm:$0xf]
                %278 = vst [vmem:[%s268 + $0x10] sm:$0xf] %v277
                %v279 = vld [vmem:[%s267 + $0x28] sm:$0xf]
                %280 = vst [vmem:[%s268 + $0x14] sm:$0xf] %v279
                %v281 = vld [vmem:[%s267 + $0x30] sm:$0xf]
                %282 = vst [vmem:[%s268 + $0x18] sm:$0xf] %v281
                %v283 = vld [vmem:[%s267 + $0x38] sm:$0xf]
                %284 = vst [vmem:[%s268 + $0x1c] sm:$0xf] %v283
              $region57: #{seq2seq_forward.7} parent=51 // loop_footer
                %s266 = sadd.s32 1, %s262
              $region58: #{seq2seq_forward.7} parent=51 // loop_footer_branch
                %261 = sbr.rel target = $region54
              $region59: #{seq2seq_forward.7} parent=51 // loop_exit
                _
            $region52: #{seq2seq_forward.7} parent=43 // pred_fallthru
              _
          $region44: #{seq2seq_forward.7} parent=39 // pred_fallthru
            _
          %320 = vnop
        $region40: #{seq2seq_forward.7} parent=35 // pred_fallthru
          _
      $region36: #{seq2seq_forward.7} parent=5 // pred_fallthru
        _
      %p321 = scmp.le.s32.totalorder 1, %s17
      %p322 = scmp.lt.s32.totalorder %s17, 3
      %p323 = pnand %p321, %p322
      %p324 = pneg %p323
      // Predicated region
      $region78: #{seq2seq_forward.7} parent=5 // pred_check
        _
      $region79: #{seq2seq_forward.7} parent=5 // pred_check_branch
        %326 = sbr.rel (%p323) target = $region81
      $region80: #{seq2seq_forward.7} parent=5 // pred_region
        %s327 = ssub.s32 %s17, 1
        %s328 = sand.u32 %s93, 1
        %s329 = sand.u32 %s93, 1
        %s330 = smul.addr %s329, 32
        %s331 = scalar_lea.vmem [#allocation6], %s330
        // Predicated region
        $region82: #{seq2seq_forward.7} parent=80 // pred_check
          %p332 = pneg %p106
        $region83: #{seq2seq_forward.7} parent=80 // pred_check_branch
          %334 = sbr.rel (%p332) target = $region85
        $region84: #{seq2seq_forward.7} parent=80 // pred_region
          _
        $region85: #{seq2seq_forward.7} parent=80 // pred_fallthru
          _
        %p335 = pneg %p38
        %p336 = pneg %p35
        %p337 = pneg %p59
        %p338 = pneg %p56
        %p339 = pneg %p80
        %p340 = pneg %p77
        %s341 = sand.u32 %s93, 1
        %s342 = sand.u32 %s93, 1
        %s343 = smul.addr %s342, 32
        %s344 = scalar_lea.vmem [#allocation6], %s343
        %p345 = pneg %p106
        %p346 = pneg %p103
        %p347 = pneg %p127
        %p348 = pneg %p124
        %p349 = pneg %p148
        %p350 = pneg %p145
        %p351 = pneg %p169
        %p352 = pneg %p166
        %p353 = pneg %p190
        %p354 = pneg %p187
        %p355 = pneg %p211
        %p356 = pneg %p208
        %p358 = scmp.eq.s32.totalorder %s22, 0
        // Predicated region
        $region86: #{seq2seq_forward.7} parent=80 // pred_check
          %p359 = pneg %p358
        $region87: #{seq2seq_forward.7} parent=80 // pred_check_branch
          %361 = sbr.rel (%p359) target = $region89
        $region88: #{seq2seq_forward.7} parent=80 // pred_region
          %v362 = vld [vmem:[%s0] sm:$0xff]
          %v363 = vld [vmem:[%s0 + $0x8] sm:$0xff]
          %v364 = vld [vmem:[%s0 + $0x10] sm:$0xff]
          %v365 = vld [vmem:[%s0 + $0x18] sm:$0x3f]
          %v366 = vpack.c.bf16 %v363, %v362
          %v367 = vpack.c.bf16 %v365, %v364
          %v368 = vld [vmem:[%s1] sm:$0xf]
          %v369 = vld [vmem:[%s1 + $0x4] sm:$0xf]
          %v370 = vld [vmem:[%s1 + $0x8] sm:$0xf]
          %v371 = vld [vmem:[%s1 + $0xc] sm:$0xf]
          %v372 = vld [vmem:[%s1 + $0x10] sm:$0xf]
          %v373 = vld [vmem:[%s1 + $0x14] sm:$0xf]
          %v374 = vld [vmem:[%s1 + $0x18] sm:$0xf]
          %v375 = vld [vmem:[%s1 + $0x1c] sm:$0xf]
          %v376 = vld [vmem:[%s2] sm:$0x1]
          %v378 = vlaneseq
          %v379 = vshrl.u32 %v378, 7
          %v380 = vsub.s32 0, %v379
          %v381 = vrot.slane %v376, %v380
          %v391 = vunpack.c.l.b16 %v368
          %v392 = vunpack.c.l.b16 %v369
          %v393 = vunpack.c.l.b16 %v370
          %v394 = vunpack.c.l.b16 %v371
          %v395 = vunpack.c.l.b16 %v372
          %v396 = vunpack.c.l.b16 %v373
          %v397 = vunpack.c.l.b16 %v374
          %v398 = vunpack.c.l.b16 %v375
          %v399 = vpack.c.b16 %v392, %v391
          %v400 = vpack.c.b16 %v394, %v393
          %v401 = vpack.c.b16 %v396, %v395
          %v402 = vpack.c.b16 %v398, %v397
          %vm407 = vcmask 523264
          %v409 = vsel %vm407, %v366, 0
          %v412 = vsel %vm407, %v367, 0
          %414 = vmatprep.subr.bf16.mxu0 0
          %415 = vmatpush1.bf16.msra.mxu0 %v399
          %416 = vmatprep.subr.bf16.mxu0 0
          %417 = vmatpush1.bf16.msra.mxu0 %v400
          %418 = vmatprep.subr.bf16.mxu0 0
          %419 = vmatpush1.bf16.msra.mxu0 %v401
          %420 = vmatprep.subr.bf16.mxu0 0
          %421 = vmatpush1.bf16.msra.mxu0 %v402
          %422 = vmatprep.subr.bf16.mxu0 0
          %423 = vmatpush1.bf16.msra.mxu0 0
          %424 = vmatprep.subr.bf16.mxu0 0
          %425 = vmatpush1.bf16.msra.mxu0 0
          %426 = vmatprep.subr.bf16.mxu0 0
          %427 = vmatpush1.bf16.msra.mxu0 0
          %428 = vmatprep.subr.bf16.mxu0 0
          %429 = vmatpush1.bf16.msra.mxu0 0
          %430 = vmatprep.subr.bf16.mxu0 0
          %431 = vmatpush1.bf16.msra.mxu0 0
          %432 = vmatprep.subr.bf16.mxu0 0
          %433 = vmatpush1.bf16.msra.mxu0 0
          %434 = vmatprep.subr.bf16.mxu0 0
          %435 = vmatpush1.bf16.msra.mxu0 0
          %436 = vmatprep.subr.bf16.mxu0 0
          %437 = vmatpush1.bf16.msra.mxu0 0
          %438 = vmatprep.subr.bf16.mxu0 0
          %439 = vmatpush1.bf16.msra.mxu0 0
          %440 = vmatprep.subr.bf16.mxu0 0
          %441 = vmatpush1.bf16.msra.mxu0 0
          %442 = vmatprep.subr.bf16.mxu0 0
          %443 = vmatpush1.bf16.msra.mxu0 0
          %444 = vmatprep.subr.bf16.mxu0 0
          %445 = vmatpush1.bf16.msra.mxu0 0
          %446 = vmatprep.mubr.bf16.mxu0 0
          %447 = vmatmul.mubr.bf16.gmra.mrb[0].mxu0 %v409
          %v448 = vpop.f32.mrb[0].mxu0
          %v449 = vadd.f32 %v381, %v448
          %v450 = vpop.f32.mrb[0].mxu0
          %v451 = vpop.f32.mrb[0].mxu0
          %v452 = vadd.f32 %v381, %v451
          %v453 = vpop.f32.mrb[0].mxu0
          %454 = vmatprep.mubr.bf16.mxu0 0
          %455 = vmatmul.mubr.bf16.gmra.mrb[0].mxu0 %v412
          %v456 = vpop.f32.mrb[0].mxu0
          %v457 = vadd.f32 %v381, %v456
          %v458 = vpop.f32.mrb[0].mxu0
          %v459 = vpop.f32.mrb[0].mxu0
          %v460 = vadd.f32 %v381, %v459
          %v461 = vpop.f32.mrb[0].mxu0
          %462 = vdwg.mxu0
          %v463 = vtanh.pop %v449
          %v464 = vtanh.pop %v452
          %v465 = vtanh.pop %v457
          %v466 = vtanh.pop %v460
          %v467 = vpack.c.bf16 %v464, %v463
          %v468 = vpack.c.bf16 %v466, %v465
          %v471 = vunpack.c.l.b16 %v467
          %v472 = vunpack.c.h.b16 %v467
          %v473 = vunpack.c.l.b16 %v468
          %v474 = vunpack.c.h.b16 %v468
          %v475 = vpack.c.b16 %v471, %v471
          %v476 = vpack.c.b16 %v472, %v472
          %v477 = vpack.c.b16 %v473, %v473
          %v478 = vpack.c.b16 %v474, %v474
          %vm483 = vcmask 519168
          %484 = vst.msk [vmem:[#allocation2] sm:$0xf] %vm483, %v475
          %485 = vst.msk [vmem:[#allocation2 + $0x4] sm:$0xf] %vm483, %v476
          %486 = vst.msk [vmem:[#allocation2 + $0x8] sm:$0xf] %vm483, %v477
          %vm487 = vcmask 518144
          %488 = vst.msk [vmem:[#allocation2 + $0xc] sm:$0x7] %vm487, %v478
          %vm489 = vcmask 7168
          %490 = vst.msk [vmem:[#allocation3] sm:$0xff] %vm489, -inf
          %491 = vst.msk [vmem:[#allocation3 + $0x8] sm:$0xff] %vm489, -inf
          %492 = vst.msk [vmem:[#allocation3 + $0x10] sm:$0xff] %vm489, -inf
          %vm493 = vcmask 5120
          %494 = vst.msk [vmem:[#allocation3 + $0x18] sm:$0x3f] %vm493, -inf
          %495 = vst.msk [vmem:[#allocation4] sm:$0xff] %vm489, 0.0
          %496 = vst.msk [vmem:[#allocation4 + $0x8] sm:$0xff] %vm489, 0.0
          %497 = vst.msk [vmem:[#allocation4 + $0x10] sm:$0xff] %vm489, 0.0
          %498 = vst.msk [vmem:[#allocation4 + $0x18] sm:$0x3f] %vm493, 0.0
          %499 = vst.msk [vmem:[#allocation5] sm:$0xff] %vm489, 0.0
          %500 = vst.msk [vmem:[#allocation5 + $0x8] sm:$0xff] %vm489, 0.0
          %501 = vst.msk [vmem:[#allocation5 + $0x10] sm:$0xff] %vm489, 0.0
          %502 = vst.msk [vmem:[#allocation5 + $0x18] sm:$0x3f] %vm493, 0.0
        $region89: #{seq2seq_forward.7} parent=80 // pred_fallthru
          _
        %v503 = vld [vmem:[#allocation2] sm:$0xf]
        %v504 = vld [vmem:[#allocation2 + $0x4] sm:$0xf]
        %v505 = vld [vmem:[#allocation2 + $0x8] sm:$0xf]
        %v506 = vld [vmem:[#allocation2 + $0xc] sm:$0x7]
        %v507 = vld [vmem:[%s331] sm:$0xf]
        %v508 = vld [vmem:[%s331 + $0x4] sm:$0xf]
        %v509 = vld [vmem:[%s331 + $0x8] sm:$0xf]
        %v510 = vld [vmem:[%s331 + $0xc] sm:$0xf]
        %v511 = vld [vmem:[%s331 + $0x10] sm:$0xf]
        %v512 = vld [vmem:[%s331 + $0x14] sm:$0xf]
        %v513 = vld [vmem:[%s331 + $0x18] sm:$0xf]
        %v514 = vld [vmem:[%s331 + $0x1c] sm:$0xf]
        %v519 = vunpack.c.l.b16 %v503
        %v520 = vunpack.c.l.b16 %v504
        %v521 = vunpack.c.l.b16 %v505
        %v522 = vunpack.c.l.b16 %v506
        %v523 = vpack.c.b16 %v520, %v519
        %v524 = vpack.c.b16 %v522, %v521
        %v533 = vunpack.c.l.b16 %v507
        %v534 = vunpack.c.l.b16 %v508
        %v535 = vunpack.c.l.b16 %v509
        %v536 = vunpack.c.l.b16 %v510
        %v537 = vunpack.c.l.b16 %v511
        %v538 = vunpack.c.l.b16 %v512
        %v539 = vunpack.c.l.b16 %v513
        %v540 = vunpack.c.l.b16 %v514
        %v541 = vpack.c.b16 %v534, %v533
        %v542 = vpack.c.b16 %v536, %v535
        %v543 = vpack.c.b16 %v538, %v537
        %v544 = vpack.c.b16 %v540, %v539
        %vm549 = vcmask 523264
        %v551 = vsel %vm549, %v523, 0
        %v554 = vsel %vm549, %v524, 0
        %556 = vmatprep.subr.bf16.mxu0 0
        %557 = vmatpush1.bf16.msra.mxu0 %v541
        %558 = vmatprep.subr.bf16.mxu0 0
        %559 = vmatpush1.bf16.msra.mxu0 %v542
        %560 = vmatprep.subr.bf16.mxu0 0
        %561 = vmatpush1.bf16.msra.mxu0 %v543
        %562 = vmatprep.subr.bf16.mxu0 0
        %563 = vmatpush1.bf16.msra.mxu0 %v544
        %564 = vmatprep.subr.bf16.mxu0 0
        %565 = vmatpush1.bf16.msra.mxu0 0
        %566 = vmatprep.subr.bf16.mxu0 0
        %567 = vmatpush1.bf16.msra.mxu0 0
        %568 = vmatprep.subr.bf16.mxu0 0
        %569 = vmatpush1.bf16.msra.mxu0 0
        %570 = vmatprep.subr.bf16.mxu0 0
        %571 = vmatpush1.bf16.msra.mxu0 0
        %572 = vmatprep.subr.bf16.mxu0 0
        %573 = vmatpush1.bf16.msra.mxu0 0
        %574 = vmatprep.subr.bf16.mxu0 0
        %575 = vmatpush1.bf16.msra.mxu0 0
        %576 = vmatprep.subr.bf16.mxu0 0
        %577 = vmatpush1.bf16.msra.mxu0 0
        %578 = vmatprep.subr.bf16.mxu0 0
        %579 = vmatpush1.bf16.msra.mxu0 0
        %580 = vmatprep.subr.bf16.mxu0 0
        %581 = vmatpush1.bf16.msra.mxu0 0
        %582 = vmatprep.subr.bf16.mxu0 0
        %583 = vmatpush1.bf16.msra.mxu0 0
        %584 = vmatprep.subr.bf16.mxu0 0
        %585 = vmatpush1.bf16.msra.mxu0 0
        %586 = vmatprep.subr.bf16.mxu0 0
        %587 = vmatpush1.bf16.msra.mxu0 0
        %588 = vmatprep.mubr.bf16.mxu0 0
        %589 = vmatmul.mubr.bf16.gmra.mrb[0].mxu0 %v551
        %v590 = vpop.f32.mrb[0].mxu0
        %v591 = vadd.f32 0.0, %v590
        %v592 = vpop.f32.mrb[0].mxu0
        %v593 = vpop.f32.mrb[0].mxu0
        %v594 = vadd.f32 0.0, %v593
        %v595 = vpop.f32.mrb[0].mxu0
        %596 = vmatprep.mubr.bf16.mxu0 0
        %597 = vmatmul.mubr.bf16.gmra.mrb[0].mxu0 %v554
        %v598 = vpop.f32.mrb[0].mxu0
        %v599 = vadd.f32 0.0, %v598
        %v600 = vpop.f32.mrb[0].mxu0
        %v601 = vpop.f32.mrb[0].mxu0
        %v602 = vadd.f32 0.0, %v601
        %v603 = vpop.f32.mrb[0].mxu0
        %604 = vdwg.mxu0
        %v605 = vld [vmem:[#allocation3] sm:$0xff]
        %v606 = vld [vmem:[#allocation3 + $0x8] sm:$0xff]
        %v607 = vld [vmem:[#allocation3 + $0x10] sm:$0xff]
        %v608 = vld [vmem:[#allocation3 + $0x18] sm:$0x3f]
        %609 = vmax.xlane.f32.xlu0 %v591
        %v610 = vpop.xlane.xlu0 %609
        %611 = vmax.xlane.f32.xlu0 %v594
        %v612 = vpop.xlane.xlu0 %611
        %613 = vmax.xlane.f32.xlu0 %v599
        %v614 = vpop.xlane.xlu0 %613
        %vm615 = vcmask 1045504
        %v616 = vsel %vm615, %v602, -inf
        %617 = vmax.xlane.f32.xlu0 %v616
        %v618 = vpop.xlane.xlu0 %617
        %v619 = vmax.f32 %v605, %v610
        %v620 = vmax.f32 %v606, %v612
        %v621 = vmax.f32 %v607, %v614
        %v622 = vmax.f32 %v608, %v618
        %v623 = vld [vmem:[#allocation4] sm:$0xff]
        %v624 = vld [vmem:[#allocation4 + $0x8] sm:$0xff]
        %v625 = vld [vmem:[#allocation4 + $0x10] sm:$0xff]
        %v626 = vld [vmem:[#allocation4 + $0x18] sm:$0x3f]
        %v627 = vsub.f32 %v605, %v619
        %v628 = vsub.f32 %v606, %v620
        %v629 = vsub.f32 %v607, %v621
        %v630 = vsub.f32 %v608, %v622
        %v631 = vmul.f32 %v627, 1.442695
        %v632 = vpow.pop %v631
        %v633 = vmul.f32 %v628, 1.442695
        %v634 = vpow.pop %v633
        %v635 = vmul.f32 %v629, 1.442695
        %v636 = vpow.pop %v635
        %v637 = vmul.f32 %v630, 1.442695
        %v638 = vpow.pop %v637
        %v639 = vmul.f32 %v623, %v632
        %v640 = vmul.f32 %v624, %v634
        %v641 = vmul.f32 %v625, %v636
        %v642 = vmul.f32 %v626, %v638
        %644 = vset.pattern.permute.xlu0 0
        %645 = vperm.xlu0 %644, %v619
        %v646 = vpop.permute.xlu0 %645
        %649 = vset.pattern.permute.xlu0 0
        %650 = vperm.xlu0 %649, %v620
        %v651 = vpop.permute.xlu0 %650
        %654 = vset.pattern.permute.xlu0 0
        %655 = vperm.xlu0 %654, %v621
        %v656 = vpop.permute.xlu0 %655
        %659 = vset.pattern.permute.xlu0 0
        %660 = vperm.xlu0 %659, %v622
        %v661 = vpop.permute.xlu0 %660
        %v663 = vsub.f32 %v591, %v646
        %v664 = vsub.f32 %v594, %v651
        %v665 = vsub.f32 %v599, %v656
        %v666 = vsub.f32 %v602, %v661
        %v667 = vmul.f32 %v663, 1.442695
        %v668 = vpow.pop %v667
        %v669 = vmul.f32 %v664, 1.442695
        %v670 = vpow.pop %v669
        %v671 = vmul.f32 %v665, 1.442695
        %v672 = vpow.pop %v671
        %v673 = vmul.f32 %v666, 1.442695
        %v674 = vpow.pop %v673
        %675 = vadd.xlane.f32.xlu0 %v668
        %v676 = vpop.xlane.xlu0 %675
        %677 = vadd.xlane.f32.xlu0 %v670
        %v678 = vpop.xlane.xlu0 %677
        %679 = vadd.xlane.f32.xlu0 %v672
        %v680 = vpop.xlane.xlu0 %679
        %v681 = vsel %vm615, %v674, 0.0
        %682 = vadd.xlane.f32.xlu0 %v681
        %v683 = vpop.xlane.xlu0 %682
        %v684 = vadd.f32 %v639, %v676
        %v685 = vadd.f32 %v640, %v678
        %v686 = vadd.f32 %v641, %v680
        %v687 = vadd.f32 %v642, %v683
        %vm688 = vcmask 7168
        %689 = vst.msk [vmem:[#allocation4] sm:$0xff] %vm688, %v684
        %690 = vst.msk [vmem:[#allocation4 + $0x8] sm:$0xff] %vm688, %v685
        %691 = vst.msk [vmem:[#allocation4 + $0x10] sm:$0xff] %vm688, %v686
        %vm692 = vcmask 5120
        %693 = vst.msk [vmem:[#allocation4 + $0x18] sm:$0x3f] %vm692, %v687
        %694 = vst.msk [vmem:[#allocation3] sm:$0xff] %vm688, %v619
        %695 = vst.msk [vmem:[#allocation3 + $0x8] sm:$0xff] %vm688, %v620
        %696 = vst.msk [vmem:[#allocation3 + $0x10] sm:$0xff] %vm688, %v621
        %697 = vst.msk [vmem:[#allocation3 + $0x18] sm:$0x3f] %vm692, %v622
        %v698 = vld [vmem:[%s4] sm:$0xff]
        %v699 = vld [vmem:[%s4 + $0x8] sm:$0xff]
        %v700 = vld [vmem:[%s4 + $0x10] sm:$0xff]
        %v701 = vld [vmem:[%s4 + $0x18] sm:$0x3f]
        %v702 = vlaneseq
        %v703 = vand.u32 %v702, 127
        %s704 = smul.u32 %s22, 128
        %v705 = vstv %s704
        %v706 = vadd.s32 %v703, %v705
        %v707 = vld [vmem:[#allocation5] sm:$0xff]
        %v708 = vld [vmem:[#allocation5 + $0x8] sm:$0xff]
        %v709 = vld [vmem:[#allocation5 + $0x10] sm:$0xff]
        %v710 = vld [vmem:[#allocation5 + $0x18] sm:$0x3f]
        %711 = vset.pattern.permute.xlu0 0
        %712 = vperm.xlu0 %711, %v698
        %v713 = vpop.permute.xlu0 %712
        %714 = vset.pattern.permute.xlu0 0
        %715 = vperm.xlu0 %714, %v699
        %v716 = vpop.permute.xlu0 %715
        %717 = vset.pattern.permute.xlu0 0
        %718 = vperm.xlu0 %717, %v700
        %v719 = vpop.permute.xlu0 %718
        %720 = vset.pattern.permute.xlu0 0
        %721 = vperm.xlu0 %720, %v701
        %v722 = vpop.permute.xlu0 %721
        %vm723 = vcmp.eq.s32.totalorder %v706, %v713
        %vm724 = vcmp.eq.s32.totalorder %v706, %v716
        %vm725 = vcmp.eq.s32.totalorder %v706, %v719
        %vm726 = vcmp.eq.s32.totalorder %v706, %v722
        %v727 = vsel %vm723, %v591, 0.0
        %v728 = vsel %vm724, %v594, 0.0
        %v729 = vsel %vm725, %v599, 0.0
        %v730 = vsel %vm726, %v602, 0.0
        %731 = vadd.xlane.f32.xlu0 %v727
        %v732 = vpop.xlane.xlu0 %731
        %733 = vadd.xlane.f32.xlu0 %v728
        %v734 = vpop.xlane.xlu0 %733
        %735 = vadd.xlane.f32.xlu0 %v729
        %v736 = vpop.xlane.xlu0 %735
        %v737 = vsel %vm615, %v730, 0.0
        %738 = vadd.xlane.f32.xlu0 %v737
        %v739 = vpop.xlane.xlu0 %738
        %v740 = vadd.f32 %v707, %v732
        %v741 = vadd.f32 %v708, %v734
        %v742 = vadd.f32 %v709, %v736
        %v743 = vadd.f32 %v710, %v739
        %744 = vst.msk [vmem:[#allocation5] sm:$0xff] %vm688, %v740
        %745 = vst.msk [vmem:[#allocation5 + $0x8] sm:$0xff] %vm688, %v741
        %746 = vst.msk [vmem:[#allocation5 + $0x10] sm:$0xff] %vm688, %v742
        %747 = vst.msk [vmem:[#allocation5 + $0x18] sm:$0x3f] %vm692, %v743
        %p748 = scmp.eq.s32.totalorder %s22, 1
        // Predicated region
        $region90: #{seq2seq_forward.7} parent=80 // pred_check
          %p749 = pneg %p748
        $region91: #{seq2seq_forward.7} parent=80 // pred_check_branch
          %751 = sbr.rel (%p749) target = $region93
        $region92: #{seq2seq_forward.7} parent=80 // pred_region
          %v752 = vld [vmem:[#allocation3] sm:$0xff]
          %v753 = vld [vmem:[#allocation3 + $0x8] sm:$0xff]
          %v754 = vld [vmem:[#allocation3 + $0x10] sm:$0xff]
          %v755 = vld [vmem:[#allocation3 + $0x18] sm:$0x3f]
          %v756 = vld [vmem:[#allocation4] sm:$0xff]
          %v757 = vld [vmem:[#allocation4 + $0x8] sm:$0xff]
          %v758 = vld [vmem:[#allocation4 + $0x10] sm:$0xff]
          %v759 = vld [vmem:[#allocation4 + $0x18] sm:$0x3f]
          %v760 = vlog2.pop %v756
          %v761 = vmul.f32 %v760, 0.6931472
          %v762 = vlog2.pop %v757
          %v763 = vmul.f32 %v762, 0.6931472
          %v764 = vlog2.pop %v758
          %v765 = vmul.f32 %v764, 0.6931472
          %v766 = vlog2.pop %v759
          %v767 = vmul.f32 %v766, 0.6931472
          %v768 = vadd.f32 %v752, %v761
          %v769 = vadd.f32 %v753, %v763
          %v770 = vadd.f32 %v754, %v765
          %v771 = vadd.f32 %v755, %v767
          %v772 = vld [vmem:[#allocation5] sm:$0xff]
          %v773 = vld [vmem:[#allocation5 + $0x8] sm:$0xff]
          %v774 = vld [vmem:[#allocation5 + $0x10] sm:$0xff]
          %v775 = vld [vmem:[#allocation5 + $0x18] sm:$0x3f]
          %v776 = vsub.f32 %v768, %v772
          %v777 = vsub.f32 %v769, %v773
          %v778 = vsub.f32 %v770, %v774
          %v779 = vsub.f32 %v771, %v775
          %v780 = vld [vmem:[%s5] sm:$0xff]
          %v781 = vld [vmem:[%s5 + $0x8] sm:$0xff]
          %v782 = vld [vmem:[%s5 + $0x10] sm:$0xff]
          %v783 = vld [vmem:[%s5 + $0x18] sm:$0x3f]
          %vm784 = vcmp.eq.s32.totalorder %v698, 4294967295
          %vm785 = vcmp.eq.s32.totalorder %v699, 4294967295
          %vm786 = vcmp.eq.s32.totalorder %v700, 4294967295
          %vm787 = vcmp.eq.s32.totalorder %v701, 4294967295
          %v788 = vsel %vm784, 0.0, 1.0
          %v789 = vsel %vm785, 0.0, 1.0
          %v790 = vsel %vm786, 0.0, 1.0
          %v791 = vsel %vm787, 0.0, 1.0
          %v792 = vmul.f32 %v780, %v788
          %v793 = vmul.f32 %v781, %v789
          %v794 = vmul.f32 %v782, %v790
          %v795 = vmul.f32 %v783, %v791
          %v796 = vmul.f32 %v776, %v792
          %v797 = vmul.f32 %v777, %v793
          %v798 = vmul.f32 %v778, %v794
          %v799 = vmul.f32 %v779, %v795
          %v800 = vsel %vm688, %v796, 0.0
          %v801 = vsel %vm688, %v797, 0.0
          %v802 = vadd.f32 %v800, %v801
          %v803 = vsel %vm688, %v798, 0.0
          %v804 = vadd.f32 %v802, %v803
          %v805 = vsel %vm692, %v799, 0.0
          %v806 = vadd.f32 %v804, %v805
          %807 = vadd.xlane.f32.xlu0 %v806
          %v808 = vpop.xlane.xlu0 %807
          %v809 = vrot.slane %v808, 4
          %v810 = vadd.f32 %v808, %v809
          %v811 = vrot.slane %v810, 2
          %v812 = vadd.f32 %v810, %v811
          %v813 = vrot.slane %v812, 1
          %v814 = vadd.f32 %v812, %v813
          %s815 = vtos %v814
          %v816 = vstv %s815
          %vm817 = vcmask 0
          %818 = vst.msk [vmem:[#allocation7] sm:$0x1] %vm817, %v816
          %v819 = vsel %vm688, %v792, 0.0
          %v820 = vsel %vm688, %v793, 0.0
          %v821 = vadd.f32 %v819, %v820
          %v822 = vsel %vm688, %v794, 0.0
          %v823 = vadd.f32 %v821, %v822
          %v824 = vsel %vm692, %v795, 0.0
          %v825 = vadd.f32 %v823, %v824
          %826 = vadd.xlane.f32.xlu0 %v825
          %v827 = vpop.xlane.xlu0 %826
          %v828 = vrot.slane %v827, 4
          %v829 = vadd.f32 %v827, %v828
          %v830 = vrot.slane %v829, 2
          %v831 = vadd.f32 %v829, %v830
          %v832 = vrot.slane %v831, 1
          %v833 = vadd.f32 %v831, %v832
          %s834 = vtos %v833
          %v835 = vstv %s834
          %836 = vst.msk [vmem:[#allocation9] sm:$0x1] %vm817, %v835
          %v837 = vsel %vm688, %v780, 0.0
          %v838 = vsel %vm688, %v781, 0.0
          %v839 = vadd.f32 %v837, %v838
          %v840 = vsel %vm688, %v782, 0.0
          %v841 = vadd.f32 %v839, %v840
          %v842 = vsel %vm692, %v783, 0.0
          %v843 = vadd.f32 %v841, %v842
          %844 = vadd.xlane.f32.xlu0 %v843
          %v845 = vpop.xlane.xlu0 %844
          %v846 = vrot.slane %v845, 4
          %v847 = vadd.f32 %v845, %v846
          %v848 = vrot.slane %v847, 2
          %v849 = vadd.f32 %v847, %v848
          %v850 = vrot.slane %v849, 1
          %v851 = vadd.f32 %v849, %v850
          %s852 = vtos %v851
          %v853 = vstv %s852
          %854 = vst.msk [vmem:[#allocation11] sm:$0x1] %vm817, %v853
        $region93: #{seq2seq_forward.7} parent=80 // pred_fallthru
          _
        // Predicated region
        $region94: #{seq2seq_forward.7} parent=80 // pred_check
          %p855 = pneg %p166
        $region95: #{seq2seq_forward.7} parent=80 // pred_check_branch
          %857 = sbr.rel (%p855) target = $region97
        $region96: #{seq2seq_forward.7} parent=80 // pred_region
          %s859 = ssub.s32 16, 16
          %860 = vsyncadd [#allocation8], %s859
          %s862 = sshll.u32 [#allocation7], 4
          %s863 = int_to_ptr.vmem [resolvable:$true] %s862
          %865 = dma.vmem_to_hbm [thread:$0]  %s863, 16, %s6, [#allocation8]
        $region97: #{seq2seq_forward.7} parent=80 // pred_fallthru
          _
        // Predicated region
        $region98: #{seq2seq_forward.7} parent=80 // pred_check
          %p866 = pneg %p187
        $region99: #{seq2seq_forward.7} parent=80 // pred_check_branch
          %868 = sbr.rel (%p866) target = $region101
        $region100: #{seq2seq_forward.7} parent=80 // pred_region
          %s870 = ssub.s32 16, 16
          %871 = vsyncadd [#allocation10], %s870
          %s873 = sshll.u32 [#allocation9], 4
          %s874 = int_to_ptr.vmem [resolvable:$true] %s873
          %876 = dma.vmem_to_hbm [thread:$0]  %s874, 16, %s7, [#allocation10]
        $region101: #{seq2seq_forward.7} parent=80 // pred_fallthru
          _
        // Predicated region
        $region102: #{seq2seq_forward.7} parent=80 // pred_check
          %p877 = pneg %p208
        $region103: #{seq2seq_forward.7} parent=80 // pred_check_branch
          %879 = sbr.rel (%p877) target = $region105
        $region104: #{seq2seq_forward.7} parent=80 // pred_region
          %s881 = ssub.s32 16, 16
          %882 = vsyncadd [#allocation10], %s881
          %s884 = sshll.u32 [#allocation11], 4
          %s885 = int_to_ptr.vmem [resolvable:$true] %s884
          %887 = dma.vmem_to_hbm [thread:$0]  %s885, 16, %s8, [#allocation10]
        $region105: #{seq2seq_forward.7} parent=80 // pred_fallthru
          _
        // Predicated region
        $region106: #{seq2seq_forward.7} parent=80 // pred_check
          %p888 = pneg %p166
        $region107: #{seq2seq_forward.7} parent=80 // pred_check_branch
          %890 = sbr.rel (%p888) target = $region109
        $region108: #{seq2seq_forward.7} parent=80 // pred_region
          %891 = dma.done [#allocation8], 16
        $region109: #{seq2seq_forward.7} parent=80 // pred_fallthru
          _
        // Predicated region
        $region110: #{seq2seq_forward.7} parent=80 // pred_check
          %p892 = pneg %p187
        $region111: #{seq2seq_forward.7} parent=80 // pred_check_branch
          %894 = sbr.rel (%p892) target = $region113
        $region112: #{seq2seq_forward.7} parent=80 // pred_region
          %895 = dma.done [#allocation10], 16
        $region113: #{seq2seq_forward.7} parent=80 // pred_fallthru
          _
        // Predicated region
        $region114: #{seq2seq_forward.7} parent=80 // pred_check
          %p896 = pneg %p208
        $region115: #{seq2seq_forward.7} parent=80 // pred_check_branch
          %898 = sbr.rel (%p896) target = $region117
        $region116: #{seq2seq_forward.7} parent=80 // pred_region
          %899 = dma.done [#allocation10], 16
        $region117: #{seq2seq_forward.7} parent=80 // pred_fallthru
          _
      $region81: #{seq2seq_forward.7} parent=5 // pred_fallthru
        _
      %p900 = scmp.le.s32.totalorder 2, %s17
      // Predicated region
      $region118: #{seq2seq_forward.7} parent=5 // pred_check
        %p901 = pneg %p900
      $region119: #{seq2seq_forward.7} parent=5 // pred_check_branch
        %903 = sbr.rel (%p901) target = $region121
      $region120: #{seq2seq_forward.7} parent=5 // pred_region
        %s904 = ssub.s32 %s17, 2
      $region121: #{seq2seq_forward.7} parent=5 // pred_fallthru
        _
    $region6: #{seq2seq_forward.7} parent=1 // loop_footer
      %s21 = sadd.s32 1, %s17
    $region7: #{seq2seq_forward.7} parent=1 // loop_footer_branch
      %16 = sbr.rel target = $region3
    $region8: #{seq2seq_forward.7} parent=1 // loop_exit
      _
    %905 = vsyncpa [#allocation8], 1
    %s906 = scalar_lea.sflag [#allocation8], 1
    %907 = vsyncpa %s906, 1
    %908 = vsyncpa [#allocation10], 1

</llo_original>
